<compile_context>
chip_gen: v5e
topology: v5e:2x2
jax: 0.10.0
libtpu: 0.0.40
codegen_flags: <defaults>
</compile_context>

<pallas_src>
import functools

import jax
import jax.numpy as jnp
from jax.experimental import pallas as pl
from jax.experimental.pallas import tpu as pltpu


def _round_up(x, m):
    return ((x + m - 1) // m) * m


# --------------------------------------------------------------------------------------
# Kernels
# --------------------------------------------------------------------------------------
def markers_encoder_kernel_single(x_ref, w1_ref, b1_ref, w2_ref, b2_ref, w3_ref, b3_ref,
                                  out_ref):
    """Grid = (batch_blocks,). Whole x_dim fits in one tile -> no reduction axis/scratch."""
    f32 = jnp.float32
    h = jnp.dot(x_ref[...].astype(jnp.bfloat16), w1_ref[...],
                preferred_element_type=f32) + b1_ref[...]
    h = h * jax.nn.sigmoid(h)                                   # SiLU (f32, EUP sigmoid)
    h = jnp.dot(h.astype(jnp.bfloat16), w2_ref[...],
                preferred_element_type=f32) + b2_ref[...]
    h = h * jax.nn.sigmoid(h)                                   # SiLU
    out_ref[...] = (jnp.dot(h.astype(jnp.bfloat16), w3_ref[...],
                            preferred_element_type=f32) + b3_ref[...]).astype(out_ref.dtype)


def markers_encoder_kernel_reduce(x_ref, w1_ref, b1_ref, w2_ref, b2_ref, w3_ref, b3_ref,
                                  out_ref, acc_ref):
    """Grid = (batch_blocks, xdim_blocks). acc_ref accumulates the fc1 partial matmul."""
    f32 = jnp.float32
    k = pl.program_id(1)

    @pl.when(k == 0)
    def _init():
        acc_ref[...] = jnp.zeros_like(acc_ref)

    # fc1 partial product over this x_dim chunk (bf16 MXU, f32 accumulate).
    acc_ref[...] += jnp.dot(x_ref[...].astype(jnp.bfloat16), w1_ref[...],
                            preferred_element_type=f32)

    @pl.when(k == pl.num_programs(1) - 1)
    def _finish():
        h = acc_ref[...] + b1_ref[...]
        h = h * jax.nn.sigmoid(h)                               # SiLU
        h = jnp.dot(h.astype(jnp.bfloat16), w2_ref[...],
                    preferred_element_type=f32) + b2_ref[...]
        h = h * jax.nn.sigmoid(h)                               # SiLU
        # fused fc31|fc32 head, padded to a 128-lane multiple -> lane-dense store.
        out_ref[...] = (jnp.dot(h.astype(jnp.bfloat16), w3_ref[...],
                                preferred_element_type=f32) + b3_ref[...]).astype(out_ref.dtype)


# --------------------------------------------------------------------------------------
# Parameters
# --------------------------------------------------------------------------------------
def init_linear(key, fan_in, fan_out):
    """PyTorch nn.Linear default init: U(-1/sqrt(fan_in), 1/sqrt(fan_in))."""
    kw, kb = jax.random.split(key)
    bound = 1.0 / (fan_in ** 0.5)
    w = jax.random.uniform(kw, (fan_in, fan_out), jnp.float32, -bound, bound)
    b = jax.random.uniform(kb, (1, fan_out), jnp.float32, -bound, bound)
    return w, b


def make_params(key, x_dim, z_dim):
    """Returns (bf16 kernel params, f32 master params). fc31|fc32 are fused + lane-padded."""
    k1, k2, k31, k32 = jax.random.split(key, 4)
    w1, b1 = init_linear(k1, x_dim, 1024)
    w2, b2 = init_linear(k2, 1024, 1024)
    w31, b31 = init_linear(k31, 1024, z_dim)
    w32, b32 = init_linear(k32, 1024, z_dim)

    zp = _round_up(2 * z_dim, 128)
    w3 = (jnp.zeros((1024, zp), jnp.float32)
          .at[:, :z_dim].set(w31)
          .at[:, z_dim:2 * z_dim].set(w32))
    b3 = (jnp.zeros((1, zp), jnp.float32)
          .at[:, :z_dim].set(b31)
          .at[:, z_dim:2 * z_dim].set(b32))

    params_f32 = dict(w1=w1, b1=b1, w2=w2, b2=b2, w3=w3, b3=b3)
    params = dict(w1=w1.astype(jnp.bfloat16), b1=b1,
                  w2=w2.astype(jnp.bfloat16), b2=b2,
                  w3=w3.astype(jnp.bfloat16), b3=b3)
    return params, params_f32


# --------------------------------------------------------------------------------------
# Tiling heuristics
# --------------------------------------------------------------------------------------
def _choose_tk(x_dim, block_k):
    """Reduction tile over x_dim. Prefer a divisor of x_dim (no padding copy)."""
    if x_dim <= block_k:
        return x_dim                           # single reduction step, full dim
    if x_dim % 128 == 0:
        # Look for a 128-multiple divisor in [block_k/2, block_k]: avoids any x/w1 padding.
        for cand in range(block_k, block_k // 2 - 1, -128):
            if cand > 0 and x_dim % cand == 0:
                return cand
    return block_k                             # fall back to padding up to block_k


def _choose_tb(batch, block_b):
    """Batch tile. >=2 blocks whenever possible so both v7x TensorCores get work."""
    if batch >= 2 * block_b:
        return block_b
    if batch > 8:
        return _round_up((batch + 1) // 2, 8)  # exactly two batch blocks
    return _round_up(max(batch, 1), 8)


# --------------------------------------------------------------------------------------
# Forward wrapper
# --------------------------------------------------------------------------------------
@functools.partial(jax.jit,
                   static_argnames=("z_dim", "block_b", "block_k", "out_dtype"))
def markers_encoder_forward(x, params, z_dim, *, block_b=256, block_k=2048,
                            out_dtype=jnp.float32):
    w1, b1 = params["w1"], params["b1"]
    w2, b2 = params["w2"], params["b2"]
    w3, b3 = params["w3"], params["b3"]

    B, X = x.shape
    H = w1.shape[1]                 # 1024
    ZP = w3.shape[1]                # padded 2*z_dim (multiple of 128)

    tb = _choose_tb(B, block_b)
    tk = _choose_tk(X, block_k)
    nb = pl.cdiv(B, tb)
    nk = pl.cdiv(X, tk)
    Bp, Xp = nb * tb, nk * tk

    # Pad only what is actually needed (typically nothing for 128-aligned x_dim).
    xp = x
    if (Bp, Xp) != (B, X):
        xp = jnp.pad(x, ((0, Bp - B), (0, Xp - X)))
    w1p = w1 if Xp == X else jnp.pad(w1, ((0, Xp - X), (0, 0)))

    if nk == 1:
        # Specialized path: no reduction grid axis, no accumulator scratch.
        grid = (nb,)
        in_specs = [
            pl.BlockSpec((tb, Xp), lambda i: (i, 0)),    # x tile
            pl.BlockSpec((Xp, H), lambda i: (0, 0)),     # w1 (resident)
            pl.BlockSpec((1, H), lambda i: (0, 0)),      # b1
            pl.BlockSpec((H, H), lambda i: (0, 0)),      # w2 (resident)
            pl.BlockSpec((1, H), lambda i: (0, 0)),      # b2
            pl.BlockSpec((H, ZP), lambda i: (0, 0)),     # fused w31|w32
            pl.BlockSpec((1, ZP), lambda i: (0, 0)),     # fused b31|b32
        ]
        out_specs = pl.BlockSpec((tb, ZP), lambda i: (i, 0))
        scratch_shapes = []
        kernel = markers_encoder_kernel_single
        dims = ("parallel",)
    else:
        grid = (nb, nk)                                   # reduction axis last
        in_specs = [
            pl.BlockSpec((tb, tk), lambda i, k: (i, k)),  # x tile
            pl.BlockSpec((tk, H), lambda i, k: (k, 0)),   # w1 chunk
            pl.BlockSpec((1, H), lambda i, k: (0, 0)),    # b1
            pl.BlockSpec((H, H), lambda i, k: (0, 0)),    # w2 (resident)
            pl.BlockSpec((1, H), lambda i, k: (0, 0)),    # b2
            pl.BlockSpec((H, ZP), lambda i, k: (0, 0)),   # fused w31|w32
            pl.BlockSpec((1, ZP), lambda i, k: (0, 0)),   # fused b31|b32
        ]
        out_specs = pl.BlockSpec((tb, ZP), lambda i, k: (i, 0))
        scratch_shapes = [pltpu.VMEM((tb, H), jnp.float32)]   # fc1 accumulator
        kernel = markers_encoder_kernel_reduce
        dims = ("parallel", "arbitrary")

    out = pl.pallas_call(
        kernel,
        out_shape=jax.ShapeDtypeStruct((Bp, ZP), out_dtype),
        grid_spec=pltpu.PrefetchScalarGridSpec(
            num_scalar_prefetch=0,
            grid=grid,
            in_specs=in_specs,
            out_specs=out_specs,
            scratch_shapes=scratch_shapes,
        ),
        compiler_params=pltpu.CompilerParams(
            dimension_semantics=dims,
            vmem_limit_bytes=48 << 20,        # safe on v7x's 64 MiB physical VMEM
        ),
    )(xp, w1p, b1, w2, b2, w3, b3)

    mu = out[:B, :z_dim]
    logvar = out[:B, z_dim:2 * z_dim]
    return mu, logvar


# --------------------------------------------------------------------------------------
# Pure-JAX references (works for bf16 or f32 parameter dicts)
# --------------------------------------------------------------------------------------
def markers_encoder_reference(x, params, z_dim):
    f32 = jnp.float32
    w1, w2, w3 = params["w1"], params["w2"], params["w3"]
    h = jnp.dot(x.astype(w1.dtype), w1, preferred_element_type=f32) + params["b1"]
    h = h * jax.nn.sigmoid(h)
    h = jnp.dot(h.astype(w2.dtype), w2, preferred_element_type=f32) + params["b2"]
    h = h * jax.nn.sigmoid(h)
    o = jnp.dot(h.astype(w3.dtype), w3, preferred_element_type=f32) + params["b3"]
    return o[:, :z_dim], o[:, z_dim:2 * z_dim]


# --------------------------------------------------------------------------------------
# Test
# --------------------------------------------------------------------------------------
if __name__ == "__main__":
    key = jax.random.PRNGKey(0)
    k_p1, k_x1, k_p2, k_x2 = jax.random.split(key, 4)

    # ---- Config 1: small marker dim -> single-reduction-step specialized kernel. ----
    B, X, Z = 8, 64, 16
    params, params_f32 = make_params(k_p1, X, Z)
    # Binary marker features stored directly in bf16 (exact for 0/1).
    x = (jax.random.uniform(k_x1, (B, X), jnp.float32) > 0.5).astype(jnp.bfloat16)

    mu, logvar = markers_encoder_forward(x, params, Z)
    mu, logvar = jax.block_until_ready((mu, logvar))
    assert mu.shape == (B, Z) and logvar.shape == (B, Z)
    assert bool(jnp.all(jnp.isfinite(mu))) and bool(jnp.all(jnp.isfinite(logvar)))

    mu_r, lv_r = markers_encoder_reference(x, params, Z)          # same bf16 weights
    assert jnp.allclose(mu, mu_r, rtol=1e-2, atol=1e-2)
    assert jnp.allclose(logvar, lv_r, rtol=1e-2, atol=1e-2)
    mu_f, lv_f = markers_encoder_reference(x, params_f32, Z)      # f32 master weights
    assert jnp.allclose(mu, mu_f, rtol=5e-2, atol=2.5e-1)
    assert jnp.allclose(logvar, lv_f, rtol=5e-2, atol=2.5e-1)

    # ---- Config 2: forces the reduction grid axis + two batch blocks. ----
    B2, X2, Z2 = 16, 256, 16
    params2, params2_f32 = make_params(k_p2, X2, Z2)
    x2 = (jax.random.uniform(k_x2, (B2, X2), jnp.float32) > 0.5).astype(jnp.bfloat16)

    mu2, lv2 = markers_encoder_forward(x2, params2, Z2, block_b=8, block_k=128)
    mu2, lv2 = jax.block_until_ready((mu2, lv2))
    assert mu2.shape == (B2, Z2) and lv2.shape == (B2, Z2)
    assert bool(jnp.all(jnp.isfinite(mu2))) and bool(jnp.all(jnp.isfinite(lv2)))

    mu2_r, lv2_r = markers_encoder_reference(x2, params2, Z2)
    assert jnp.allclose(mu2, mu2_r, rtol=1e-2, atol=1e-2)
    assert jnp.allclose(lv2, lv2_r, rtol=1e-2, atol=1e-2)
    mu2_f, lv2_f = markers_encoder_reference(x2, params2_f32, Z2)
    assert jnp.allclose(mu2, mu2_f, rtol=5e-2, atol=2.5e-1)
    assert jnp.allclose(lv2, lv2_f, rtol=5e-2, atol=2.5e-1)

    print("KERNEL_OK")
</pallas_src>

<mosaic_0001>
module attributes {stable_mosaic.version = 11 : i64} {
  func.func @markers_encoder_kernel_single(%arg0: i32, %arg1: memref<8x64xbf16, #tpu.memory_space<vmem>>, %arg2: memref<64x1024xbf16, #tpu.memory_space<vmem>>, %arg3: memref<1x1024xf32, #tpu.memory_space<vmem>>, %arg4: memref<1024x1024xbf16, #tpu.memory_space<vmem>>, %arg5: memref<1x1024xf32, #tpu.memory_space<vmem>>, %arg6: memref<1024x128xbf16, #tpu.memory_space<vmem>>, %arg7: memref<1x128xf32, #tpu.memory_space<vmem>>, %arg8: memref<8x128xf32, #tpu.memory_space<vmem>>) attributes {dimension_semantics = [#tpu.dimension_semantics<parallel>], iteration_bounds = array<i64: 1>, scalar_prefetch = 0 : i64, scratch_operands = 0 : i64, tpu.core_type = #tpu.core_type<tc>, window_params = [{transform_indices = @transform_0, window_bounds = array<i64: 8, 64>}, {pipeline_mode = #tpu.pipeline_mode<synchronous>, transform_indices = @transform_1, window_bounds = array<i64: 64, 1024>}, {pipeline_mode = #tpu.pipeline_mode<synchronous>, transform_indices = @transform_2, window_bounds = array<i64: 1, 1024>}, {pipeline_mode = #tpu.pipeline_mode<synchronous>, transform_indices = @transform_3, window_bounds = array<i64: 1024, 1024>}, {pipeline_mode = #tpu.pipeline_mode<synchronous>, transform_indices = @transform_4, window_bounds = array<i64: 1, 1024>}, {pipeline_mode = #tpu.pipeline_mode<synchronous>, transform_indices = @transform_5, window_bounds = array<i64: 1024, 128>}, {pipeline_mode = #tpu.pipeline_mode<synchronous>, transform_indices = @transform_6, window_bounds = array<i64: 1, 128>}, {transform_indices = @transform_7, window_bounds = array<i64: 8, 128>}]} {
    %c0 = arith.constant 0 : index
    %c0_0 = arith.constant 0 : index
    %0 = vector.load %arg1[%c0, %c0_0] : memref<8x64xbf16, #tpu.memory_space<vmem>>, vector<8x64xbf16>
    %c0_1 = arith.constant 0 : index
    %c0_2 = arith.constant 0 : index
    %1 = vector.load %arg2[%c0_1, %c0_2] : memref<64x1024xbf16, #tpu.memory_space<vmem>>, vector<64x1024xbf16>
    %cst = arith.constant dense<0.000000e+00> : vector<8x1024xf32>
    %2 = tpu.matmul %0, %1, %cst {dimension_numbers = #tpu.dot_dimension_numbers<[1], [0], [0], [1], [0, 0, 1, 1], [], []>} : vector<8x64xbf16>, vector<64x1024xbf16>, vector<8x1024xf32> -> vector<8x1024xf32>
    %c0_3 = arith.constant 0 : index
    %c0_4 = arith.constant 0 : index
    %3 = vector.load %arg3[%c0_3, %c0_4] : memref<1x1024xf32, #tpu.memory_space<vmem>>, vector<1x1024xf32>
    %4 = vector.broadcast %3 : vector<1x1024xf32> to vector<8x1024xf32>
    %5 = arith.addf %2, %4 : vector<8x1024xf32>
    %6 = arith.negf %5 : vector<8x1024xf32>
    %7 = math.exp %6 : vector<8x1024xf32>
    %cst_5 = arith.constant 1.000000e+00 : f32
    %8 = vector.broadcast %cst_5 : f32 to vector<8x1024xf32>
    %9 = arith.addf %8, %7 : vector<8x1024xf32>
    %10 = arith.divf %8, %9 : vector<8x1024xf32>
    %11 = arith.mulf %5, %10 : vector<8x1024xf32>
    %12 = arith.truncf %11 : vector<8x1024xf32> to vector<8x1024xbf16>
    %c0_6 = arith.constant 0 : index
    %c0_7 = arith.constant 0 : index
    %13 = vector.load %arg4[%c0_6, %c0_7] : memref<1024x1024xbf16, #tpu.memory_space<vmem>>, vector<1024x1024xbf16>
    %cst_8 = arith.constant dense<0.000000e+00> : vector<8x1024xf32>
    %14 = tpu.matmul %12, %13, %cst_8 {dimension_numbers = #tpu.dot_dimension_numbers<[1], [0], [0], [1], [0, 0, 1, 1], [], []>} : vector<8x1024xbf16>, vector<1024x1024xbf16>, vector<8x1024xf32> -> vector<8x1024xf32>
    %c0_9 = arith.constant 0 : index
    %c0_10 = arith.constant 0 : index
    %15 = vector.load %arg5[%c0_9, %c0_10] : memref<1x1024xf32, #tpu.memory_space<vmem>>, vector<1x1024xf32>
    %16 = vector.broadcast %15 : vector<1x1024xf32> to vector<8x1024xf32>
    %17 = arith.addf %14, %16 : vector<8x1024xf32>
    %18 = arith.negf %17 : vector<8x1024xf32>
    %19 = math.exp %18 : vector<8x1024xf32>
    %cst_11 = arith.constant 1.000000e+00 : f32
    %20 = vector.broadcast %cst_11 : f32 to vector<8x1024xf32>
    %21 = arith.addf %20, %19 : vector<8x1024xf32>
    %22 = arith.divf %20, %21 : vector<8x1024xf32>
    %23 = arith.mulf %17, %22 : vector<8x1024xf32>
    %24 = arith.truncf %23 : vector<8x1024xf32> to vector<8x1024xbf16>
    %c0_12 = arith.constant 0 : index
    %c0_13 = arith.constant 0 : index
    %25 = vector.load %arg6[%c0_12, %c0_13] : memref<1024x128xbf16, #tpu.memory_space<vmem>>, vector<1024x128xbf16>
    %cst_14 = arith.constant dense<0.000000e+00> : vector<8x128xf32>
    %26 = tpu.matmul %24, %25, %cst_14 {dimension_numbers = #tpu.dot_dimension_numbers<[1], [0], [0], [1], [0, 0, 1, 1], [], []>} : vector<8x1024xbf16>, vector<1024x128xbf16>, vector<8x128xf32> -> vector<8x128xf32>
    %c0_15 = arith.constant 0 : index
    %c0_16 = arith.constant 0 : index
    %27 = vector.load %arg7[%c0_15, %c0_16] : memref<1x128xf32, #tpu.memory_space<vmem>>, vector<1x128xf32>
    %28 = vector.broadcast %27 : vector<1x128xf32> to vector<8x128xf32>
    %29 = arith.addf %26, %28 : vector<8x128xf32>
    %c0_17 = arith.constant 0 : index
    %c0_18 = arith.constant 0 : index
    %30 = vector.load %arg8[%c0_17, %c0_18] : memref<8x128xf32, #tpu.memory_space<vmem>>, vector<8x128xf32>
    tpu.vector_store %arg8[%c0_17, %c0_18], %29 {strides = array<i32>} : memref<8x128xf32, #tpu.memory_space<vmem>>, vector<8x128xf32>,
    return
  }
  func.func @transform_0(%arg0: i32) -> (i32, i32) {
    %c0_i32 = arith.constant 0 : i32
    %c0_i32_0 = arith.constant 0 : i32
    return %arg0, %c0_i32 : i32, i32
  }
  func.func @transform_1(%arg0: i32) -> (i32, i32) {
    %c0_i32 = arith.constant 0 : i32
    %c0_i32_0 = arith.constant 0 : i32
    %c0_i32_1 = arith.constant 0 : i32
    return %c0_i32, %c0_i32_0 : i32, i32
  }
  func.func @transform_2(%arg0: i32) -> (i32, i32) {
    %c0_i32 = arith.constant 0 : i32
    %c0_i32_0 = arith.constant 0 : i32
    %c0_i32_1 = arith.constant 0 : i32
    return %c0_i32, %c0_i32_0 : i32, i32
  }
  func.func @transform_3(%arg0: i32) -> (i32, i32) {
    %c0_i32 = arith.constant 0 : i32
    %c0_i32_0 = arith.constant 0 : i32
    %c0_i32_1 = arith.constant 0 : i32
    return %c0_i32, %c0_i32_0 : i32, i32
  }
  func.func @transform_4(%arg0: i32) -> (i32, i32) {
    %c0_i32 = arith.constant 0 : i32
    %c0_i32_0 = arith.constant 0 : i32
    %c0_i32_1 = arith.constant 0 : i32
    return %c0_i32, %c0_i32_0 : i32, i32
  }
  func.func @transform_5(%arg0: i32) -> (i32, i32) {
    %c0_i32 = arith.constant 0 : i32
    %c0_i32_0 = arith.constant 0 : i32
    %c0_i32_1 = arith.constant 0 : i32
    return %c0_i32, %c0_i32_0 : i32, i32
  }
  func.func @transform_6(%arg0: i32) -> (i32, i32) {
    %c0_i32 = arith.constant 0 : i32
    %c0_i32_0 = arith.constant 0 : i32
    %c0_i32_1 = arith.constant 0 : i32
    return %c0_i32, %c0_i32_0 : i32, i32
  }
  func.func @transform_7(%arg0: i32) -> (i32, i32) {
    %c0_i32 = arith.constant 0 : i32
    %c0_i32_0 = arith.constant 0 : i32
    return %arg0, %c0_i32 : i32, i32
  }
}

</mosaic_0001>

<llo_original>
// kernel: markers_encoder_forward.1
$region0: #{markers_encoder_forward.1}
  #allocation0 [shape = 'u32[]', space=smem, size = 0x4, offset = 0x4, fixed_abs, tag = 'smem constant byte address 0x4 - core index']
  #allocation1 [shape = 'u32[72,128]{1,0:T(1,128)}', space=vmem, size = 0x9000, scoped, tag = 'internal scratch']
  %s0 = inlined_call_operand.hbm [shape: bf16[8,64], index: 0, kind: input, shape index: {}]
  %s1 = inlined_call_operand.hbm [shape: bf16[64,1024], index: 1, kind: input, shape index: {}]
  %s2 = inlined_call_operand.hbm [shape: f32[1,1024], index: 2, kind: input, shape index: {}]
  %s3 = inlined_call_operand.hbm [shape: bf16[1024,1024], index: 3, kind: input, shape index: {}]
  %s4 = inlined_call_operand.hbm [shape: f32[1,1024], index: 4, kind: input, shape index: {}]
  %s5 = inlined_call_operand.hbm [shape: bf16[1024,128], index: 5, kind: input, shape index: {}]
  %s6 = inlined_call_operand.hbm [shape: f32[1,128], index: 6, kind: input, shape index: {}]
  %s7 = inlined_call_operand.vmem [shape: f32[8,128], index: 7, kind: output, shape index: {}]
  %s8 = sld [smem:[#allocation0]]
  $region66: #{markers_encoder_forward.1} parent=0
    _
  %s10 = ssub.s32 1, %s8
  %s11 = scalar_select 0, %s10, %s8
  $region1: #{markers_encoder_forward.1} parent=0
    #allocation2 [shape = 'u8[2048]{0}', space=vmem, size = 0x800, scoped, tag = 'input window, operand 0, single buffered']
    #allocation3 [shape = 's32[1]{0}', space=sflag, size = 0x4, scoped, tag = 'scoped memory for markers_encoder_forward.1']
    #allocation4 [shape = 'u8[131072]{0}', space=vmem, size = 0x20000, scoped, tag = 'input window, operand 1, single buffered']
    #allocation5 [shape = 's32[1]{0}', space=sflag, size = 0x4, scoped, tag = 'scoped memory for markers_encoder_forward.1']
    #allocation6 [shape = 'u8[4096]{0}', space=vmem, size = 0x1000, scoped, tag = 'input window, operand 2, single buffered']
    #allocation7 [shape = 'u8[2097152]{0}', space=vmem, size = 0x200000, scoped, tag = 'input window, operand 3, single buffered']
    #allocation8 [shape = 's32[1]{0}', space=sflag, size = 0x4, scoped, tag = 'scoped memory for markers_encoder_forward.1']
    #allocation9 [shape = 'u8[4096]{0}', space=vmem, size = 0x1000, scoped, tag = 'input window, operand 4, single buffered']
    #allocation10 [shape = 'u8[262144]{0}', space=vmem, size = 0x40000, scoped, tag = 'input window, operand 5, single buffered']
    #allocation11 [shape = 's32[1]{0}', space=sflag, size = 0x4, scoped, tag = 'scoped memory for markers_encoder_forward.1']
    #allocation12 [shape = 'u8[512]{0}', space=vmem, size = 0x400, scoped, tag = 'input window, operand 6, single buffered']
    %12 = vsyncpa [#allocation3], 0
    %13 = vsyncpa [#allocation5], 0
    %14 = vsyncpa [#allocation8], 0
    %15 = vsyncpa [#allocation11], 0
    // Predicated region
    $region2: #{markers_encoder_forward.1} parent=1 // pred_check
      _
    $region3: #{markers_encoder_forward.1} parent=1 // pred_check_branch
      %17 = sbr.rel (0) target = $region5
    $region4: #{markers_encoder_forward.1} parent=1 // pred_region
      %19 = vsyncadd [#allocation3], 0
      %s21 = sshll.u32 %s0, 4
      %s22 = int_to_ptr.hbm [resolvable:$true] %s21
      %s23 = sshll.u32 [#allocation2], 4
      %s24 = int_to_ptr.vmem [resolvable:$true] %s23
      %26 = dma.hbm_to_vmem [thread:$0]  %s22, 64, %s24, [#allocation3]
    $region5: #{markers_encoder_forward.1} parent=1 // pred_fallthru
      _
    // Predicated region
    $region6: #{markers_encoder_forward.1} parent=1 // pred_check
      _
    $region7: #{markers_encoder_forward.1} parent=1 // pred_check_branch
      %28 = sbr.rel (0) target = $region9
    $region8: #{markers_encoder_forward.1} parent=1 // pred_region
      %30 = vsyncadd [#allocation5], 0
      %s31 = sshll.u32 %s1, 4
      %s32 = int_to_ptr.hbm [resolvable:$true] %s31
      %s33 = sshll.u32 [#allocation4], 4
      %s34 = int_to_ptr.vmem [resolvable:$true] %s33
      %39 = dma.hbm_to_vmem [thread:$0]  %s32, 4096, %s34, [#allocation5], 512, 512, 32
    $region9: #{markers_encoder_forward.1} parent=1 // pred_fallthru
      _
    // Predicated region
    $region10: #{markers_encoder_forward.1} parent=1 // pred_check
      _
    $region11: #{markers_encoder_forward.1} parent=1 // pred_check_branch
      %41 = sbr.rel (0) target = $region13
    $region12: #{markers_encoder_forward.1} parent=1 // pred_region
      %43 = vsyncadd [#allocation5], 0
      %s45 = sshll.u32 %s2, 4
      %s46 = int_to_ptr.hbm [resolvable:$true] %s45
      %s47 = sshll.u32 [#allocation6], 4
      %s48 = int_to_ptr.vmem [resolvable:$true] %s47
      %50 = dma.hbm_to_vmem [thread:$0]  %s46, 128, %s48, [#allocation5]
    $region13: #{markers_encoder_forward.1} parent=1 // pred_fallthru
      _
    // Predicated region
    $region14: #{markers_encoder_forward.1} parent=1 // pred_check
      _
    $region15: #{markers_encoder_forward.1} parent=1 // pred_check_branch
      %52 = sbr.rel (0) target = $region17
    $region16: #{markers_encoder_forward.1} parent=1 // pred_region
      %54 = vsyncadd [#allocation8], 0
      %s55 = sshll.u32 %s3, 4
      %s56 = int_to_ptr.hbm [resolvable:$true] %s55
      %s57 = sshll.u32 [#allocation7], 4
      %s58 = int_to_ptr.vmem [resolvable:$true] %s57
      %63 = dma.hbm_to_vmem [thread:$0]  %s56, 65536, %s58, [#allocation8], 512, 512, 32
    $region17: #{markers_encoder_forward.1} parent=1 // pred_fallthru
      _
    // Predicated region
    $region18: #{markers_encoder_forward.1} parent=1 // pred_check
      _
    $region19: #{markers_encoder_forward.1} parent=1 // pred_check_branch
      %65 = sbr.rel (0) target = $region21
    $region20: #{markers_encoder_forward.1} parent=1 // pred_region
      %67 = vsyncadd [#allocation8], 0
      %s69 = sshll.u32 %s4, 4
      %s70 = int_to_ptr.hbm [resolvable:$true] %s69
      %s71 = sshll.u32 [#allocation9], 4
      %s72 = int_to_ptr.vmem [resolvable:$true] %s71
      %74 = dma.hbm_to_vmem [thread:$0]  %s70, 128, %s72, [#allocation8]
    $region21: #{markers_encoder_forward.1} parent=1 // pred_fallthru
      _
    // Predicated region
    $region22: #{markers_encoder_forward.1} parent=1 // pred_check
      _
    $region23: #{markers_encoder_forward.1} parent=1 // pred_check_branch
      %76 = sbr.rel (0) target = $region25
    $region24: #{markers_encoder_forward.1} parent=1 // pred_region
      %78 = vsyncadd [#allocation11], 0
      %s79 = sshll.u32 %s5, 4
      %s80 = int_to_ptr.hbm [resolvable:$true] %s79
      %s81 = sshll.u32 [#allocation10], 4
      %s82 = int_to_ptr.vmem [resolvable:$true] %s81
      %87 = dma.hbm_to_vmem [thread:$0]  %s80, 8192, %s82, [#allocation11], 64, 64, 4
    $region25: #{markers_encoder_forward.1} parent=1 // pred_fallthru
      _
    // Predicated region
    $region26: #{markers_encoder_forward.1} parent=1 // pred_check
      _
    $region27: #{markers_encoder_forward.1} parent=1 // pred_check_branch
      %89 = sbr.rel (0) target = $region29
    $region28: #{markers_encoder_forward.1} parent=1 // pred_region
      %91 = vsyncadd [#allocation11], 0
      %s93 = sshll.u32 %s6, 4
      %s94 = int_to_ptr.hbm [resolvable:$true] %s93
      %s95 = sshll.u32 [#allocation12], 4
      %s96 = int_to_ptr.vmem [resolvable:$true] %s95
      %98 = dma.hbm_to_vmem [thread:$0]  %s94, 16, %s96, [#allocation11]
    $region29: #{markers_encoder_forward.1} parent=1 // pred_fallthru
      _
    // Predicated region
    $region30: #{markers_encoder_forward.1} parent=1 // pred_check
      _
    $region31: #{markers_encoder_forward.1} parent=1 // pred_check_branch
      %100 = sbr.rel (0) target = $region33
    $region32: #{markers_encoder_forward.1} parent=1 // pred_region
      %102 = dma.done [#allocation3], 64
    $region33: #{markers_encoder_forward.1} parent=1 // pred_fallthru
      _
    // Predicated region
    $region34: #{markers_encoder_forward.1} parent=1 // pred_check
      _
    $region35: #{markers_encoder_forward.1} parent=1 // pred_check_branch
      %104 = sbr.rel (0) target = $region37
    $region36: #{markers_encoder_forward.1} parent=1 // pred_region
      %106 = dma.done [#allocation5], 4096
    $region37: #{markers_encoder_forward.1} parent=1 // pred_fallthru
      _
    // Predicated region
    $region38: #{markers_encoder_forward.1} parent=1 // pred_check
      _
    $region39: #{markers_encoder_forward.1} parent=1 // pred_check_branch
      %108 = sbr.rel (0) target = $region41
    $region40: #{markers_encoder_forward.1} parent=1 // pred_region
      %110 = dma.done [#allocation5], 128
    $region41: #{markers_encoder_forward.1} parent=1 // pred_fallthru
      _
    // Predicated region
    $region42: #{markers_encoder_forward.1} parent=1 // pred_check
      _
    $region43: #{markers_encoder_forward.1} parent=1 // pred_check_branch
      %112 = sbr.rel (0) target = $region45
    $region44: #{markers_encoder_forward.1} parent=1 // pred_region
      %114 = dma.done [#allocation8], 65536
    $region45: #{markers_encoder_forward.1} parent=1 // pred_fallthru
      _
    // Predicated region
    $region46: #{markers_encoder_forward.1} parent=1 // pred_check
      _
    $region47: #{markers_encoder_forward.1} parent=1 // pred_check_branch
      %116 = sbr.rel (0) target = $region49
    $region48: #{markers_encoder_forward.1} parent=1 // pred_region
      %118 = dma.done [#allocation8], 128
    $region49: #{markers_encoder_forward.1} parent=1 // pred_fallthru
      _
    // Predicated region
    $region50: #{markers_encoder_forward.1} parent=1 // pred_check
      _
    $region51: #{markers_encoder_forward.1} parent=1 // pred_check_branch
      %120 = sbr.rel (0) target = $region53
    $region52: #{markers_encoder_forward.1} parent=1 // pred_region
      %122 = dma.done [#allocation11], 8192
    $region53: #{markers_encoder_forward.1} parent=1 // pred_fallthru
      _
    // Predicated region
    $region54: #{markers_encoder_forward.1} parent=1 // pred_check
      _
    $region55: #{markers_encoder_forward.1} parent=1 // pred_check_branch
      %124 = sbr.rel (0) target = $region57
    $region56: #{markers_encoder_forward.1} parent=1 // pred_region
      %126 = dma.done [#allocation11], 16
    $region57: #{markers_encoder_forward.1} parent=1 // pred_fallthru
      _
    %v128 = vld [vmem:[#allocation2] sm:$0xf]
    %v129 = vld [vmem:[#allocation4] sm:$0xff]
    %v130 = vld [vmem:[#allocation4 + $0x8] sm:$0xff]
    %v131 = vld [vmem:[#allocation4 + $0x10] sm:$0xff]
    %v132 = vld [vmem:[#allocation4 + $0x18] sm:$0xff]
    %v133 = vld [vmem:[#allocation4 + $0x20] sm:$0xff]
    %v134 = vld [vmem:[#allocation4 + $0x28] sm:$0xff]
    %v135 = vld [vmem:[#allocation4 + $0x30] sm:$0xff]
    %v136 = vld [vmem:[#allocation4 + $0x38] sm:$0xff]
    %v137 = vld [vmem:[#allocation4 + $0x40] sm:$0xff]
    %v138 = vld [vmem:[#allocation4 + $0x48] sm:$0xff]
    %v139 = vld [vmem:[#allocation4 + $0x50] sm:$0xff]
    %v140 = vld [vmem:[#allocation4 + $0x58] sm:$0xff]
    %v141 = vld [vmem:[#allocation4 + $0x60] sm:$0xff]
    %v142 = vld [vmem:[#allocation4 + $0x68] sm:$0xff]
    %v143 = vld [vmem:[#allocation4 + $0x70] sm:$0xff]
    %v144 = vld [vmem:[#allocation4 + $0x78] sm:$0xff]
    %v145 = vld [vmem:[#allocation4 + $0x80] sm:$0xff]
    %v146 = vld [vmem:[#allocation4 + $0x88] sm:$0xff]
    %v147 = vld [vmem:[#allocation4 + $0x90] sm:$0xff]
    %v148 = vld [vmem:[#allocation4 + $0x98] sm:$0xff]
    %v149 = vld [vmem:[#allocation4 + $0xa0] sm:$0xff]
    %v150 = vld [vmem:[#allocation4 + $0xa8] sm:$0xff]
    %v151 = vld [vmem:[#allocation4 + $0xb0] sm:$0xff]
    %v152 = vld [vmem:[#allocation4 + $0xb8] sm:$0xff]
    %v153 = vld [vmem:[#allocation4 + $0xc0] sm:$0xff]
    %v154 = vld [vmem:[#allocation4 + $0xc8] sm:$0xff]
    %v155 = vld [vmem:[#allocation4 + $0xd0] sm:$0xff]
    %v156 = vld [vmem:[#allocation4 + $0xd8] sm:$0xff]
    %v157 = vld [vmem:[#allocation4 + $0xe0] sm:$0xff]
    %v158 = vld [vmem:[#allocation4 + $0xe8] sm:$0xff]
    %v159 = vld [vmem:[#allocation4 + $0xf0] sm:$0xff]
    %v160 = vld [vmem:[#allocation4 + $0xf8] sm:$0xff]
    %v161 = vld [vmem:[#allocation6] sm:$0xff]
    %v163 = vperm.slane %v161, 0
    %v164 = vperm.slane %v161, 1
    %v165 = vperm.slane %v161, 2
    %v166 = vperm.slane %v161, 3
    %v167 = vperm.slane %v161, 4
    %v168 = vperm.slane %v161, 5
    %v169 = vperm.slane %v161, 6
    %v170 = vperm.slane %v161, 7
    %v211 = vunpack.c.l.b16 %v129
    %v212 = vunpack.c.h.b16 %v129
    %v213 = vunpack.c.l.b16 %v130
    %v214 = vunpack.c.h.b16 %v130
    %v215 = vunpack.c.l.b16 %v131
    %v216 = vunpack.c.h.b16 %v131
    %v217 = vunpack.c.l.b16 %v132
    %v218 = vunpack.c.h.b16 %v132
    %v219 = vunpack.c.l.b16 %v133
    %v220 = vunpack.c.h.b16 %v133
    %v221 = vunpack.c.l.b16 %v134
    %v222 = vunpack.c.h.b16 %v134
    %v223 = vunpack.c.l.b16 %v135
    %v224 = vunpack.c.h.b16 %v135
    %v225 = vunpack.c.l.b16 %v136
    %v226 = vunpack.c.h.b16 %v136
    %v227 = vunpack.c.l.b16 %v137
    %v228 = vunpack.c.h.b16 %v137
    %v229 = vunpack.c.l.b16 %v138
    %v230 = vunpack.c.h.b16 %v138
    %v231 = vunpack.c.l.b16 %v139
    %v232 = vunpack.c.h.b16 %v139
    %v233 = vunpack.c.l.b16 %v140
    %v234 = vunpack.c.h.b16 %v140
    %v235 = vunpack.c.l.b16 %v141
    %v236 = vunpack.c.h.b16 %v141
    %v237 = vunpack.c.l.b16 %v142
    %v238 = vunpack.c.h.b16 %v142
    %v239 = vunpack.c.l.b16 %v143
    %v240 = vunpack.c.h.b16 %v143
    %v241 = vunpack.c.l.b16 %v144
    %v242 = vunpack.c.h.b16 %v144
    %v243 = vunpack.c.l.b16 %v145
    %v244 = vunpack.c.h.b16 %v145
    %v245 = vunpack.c.l.b16 %v146
    %v246 = vunpack.c.h.b16 %v146
    %v247 = vunpack.c.l.b16 %v147
    %v248 = vunpack.c.h.b16 %v147
    %v249 = vunpack.c.l.b16 %v148
    %v250 = vunpack.c.h.b16 %v148
    %v251 = vunpack.c.l.b16 %v149
    %v252 = vunpack.c.h.b16 %v149
    %v253 = vunpack.c.l.b16 %v150
    %v254 = vunpack.c.h.b16 %v150
    %v255 = vunpack.c.l.b16 %v151
    %v256 = vunpack.c.h.b16 %v151
    %v257 = vunpack.c.l.b16 %v152
    %v258 = vunpack.c.h.b16 %v152
    %v259 = vunpack.c.l.b16 %v153
    %v260 = vunpack.c.h.b16 %v153
    %v261 = vunpack.c.l.b16 %v154
    %v262 = vunpack.c.h.b16 %v154
    %v263 = vunpack.c.l.b16 %v155
    %v264 = vunpack.c.h.b16 %v155
    %v265 = vunpack.c.l.b16 %v156
    %v266 = vunpack.c.h.b16 %v156
    %v267 = vunpack.c.l.b16 %v157
    %v268 = vunpack.c.h.b16 %v157
    %v269 = vunpack.c.l.b16 %v158
    %v270 = vunpack.c.h.b16 %v158
    %v271 = vunpack.c.l.b16 %v159
    %v272 = vunpack.c.h.b16 %v159
    %v273 = vunpack.c.l.b16 %v160
    %v274 = vunpack.c.h.b16 %v160
    %v275 = vpack.c.b16 %v219, %v211
    %v276 = vpack.c.b16 %v220, %v212
    %v277 = vpack.c.b16 %v221, %v213
    %v278 = vpack.c.b16 %v222, %v214
    %v279 = vpack.c.b16 %v223, %v215
    %v280 = vpack.c.b16 %v224, %v216
    %v281 = vpack.c.b16 %v225, %v217
    %v282 = vpack.c.b16 %v226, %v218
    %v283 = vpack.c.b16 %v235, %v227
    %v284 = vpack.c.b16 %v236, %v228
    %v285 = vpack.c.b16 %v237, %v229
    %v286 = vpack.c.b16 %v238, %v230
    %v287 = vpack.c.b16 %v239, %v231
    %v288 = vpack.c.b16 %v240, %v232
    %v289 = vpack.c.b16 %v241, %v233
    %v290 = vpack.c.b16 %v242, %v234
    %v291 = vpack.c.b16 %v251, %v243
    %v292 = vpack.c.b16 %v252, %v244
    %v293 = vpack.c.b16 %v253, %v245
    %v294 = vpack.c.b16 %v254, %v246
    %v295 = vpack.c.b16 %v255, %v247
    %v296 = vpack.c.b16 %v256, %v248
    %v297 = vpack.c.b16 %v257, %v249
    %v298 = vpack.c.b16 %v258, %v250
    %v299 = vpack.c.b16 %v267, %v259
    %v300 = vpack.c.b16 %v268, %v260
    %v301 = vpack.c.b16 %v269, %v261
    %v302 = vpack.c.b16 %v270, %v262
    %v303 = vpack.c.b16 %v271, %v263
    %v304 = vpack.c.b16 %v272, %v264
    %v305 = vpack.c.b16 %v273, %v265
    %v306 = vpack.c.b16 %v274, %v266
    %vm339 = vcmask 523264
    %v341 = vsel %vm339, %v128, 0
    %343 = vmatpush.bf16.msra.mxu0 0
    %344 = vmatpush.bf16.msra.mxu0 0
    %345 = vmatpush.bf16.msra.mxu0 0
    %346 = vmatpush.bf16.msra.mxu0 0
    %347 = vmatpush.bf16.msra.mxu0 %v299
    %348 = vmatpush.bf16.msra.mxu0 %v291
    %349 = vmatpush.bf16.msra.mxu0 %v283
    %350 = vmatpush.bf16.msra.mxu0 %v275
    %351 = vmatmul.bf16.gmra.mxu0 %v341
    %v352 = vpop.f32.mrf.mxu0
    %v353 = vadd.f32 %v163, %v352
    %v354 = vpop.f32.mrf.mxu0
    %355 = vdwg.mxu0
    %356 = vmatpush.bf16.msra.mxu0 0
    %357 = vmatpush.bf16.msra.mxu0 0
    %358 = vmatpush.bf16.msra.mxu0 0
    %359 = vmatpush.bf16.msra.mxu0 0
    %360 = vmatpush.bf16.msra.mxu0 %v300
    %361 = vmatpush.bf16.msra.mxu0 %v292
    %362 = vmatpush.bf16.msra.mxu0 %v284
    %363 = vmatpush.bf16.msra.mxu0 %v276
    %364 = vmatmul.bf16.gmra.mxu0 %v341
    %v365 = vpop.f32.mrf.mxu0
    %v366 = vadd.f32 %v164, %v365
    %v367 = vpop.f32.mrf.mxu0
    %368 = vdwg.mxu0
    %369 = vmatpush.bf16.msra.mxu0 0
    %370 = vmatpush.bf16.msra.mxu0 0
    %371 = vmatpush.bf16.msra.mxu0 0
    %372 = vmatpush.bf16.msra.mxu0 0
    %373 = vmatpush.bf16.msra.mxu0 %v301
    %374 = vmatpush.bf16.msra.mxu0 %v293
    %375 = vmatpush.bf16.msra.mxu0 %v285
    %376 = vmatpush.bf16.msra.mxu0 %v277
    %377 = vmatmul.bf16.gmra.mxu0 %v341
    %v378 = vpop.f32.mrf.mxu0
    %v379 = vadd.f32 %v165, %v378
    %v380 = vpop.f32.mrf.mxu0
    %381 = vdwg.mxu0
    %382 = vmatpush.bf16.msra.mxu0 0
    %383 = vmatpush.bf16.msra.mxu0 0
    %384 = vmatpush.bf16.msra.mxu0 0
    %385 = vmatpush.bf16.msra.mxu0 0
    %386 = vmatpush.bf16.msra.mxu0 %v302
    %387 = vmatpush.bf16.msra.mxu0 %v294
    %388 = vmatpush.bf16.msra.mxu0 %v286
    %389 = vmatpush.bf16.msra.mxu0 %v278
    %390 = vmatmul.bf16.gmra.mxu0 %v341
    %v391 = vpop.f32.mrf.mxu0
    %v392 = vadd.f32 %v166, %v391
    %v393 = vpop.f32.mrf.mxu0
    %394 = vdwg.mxu0
    %395 = vmatpush.bf16.msra.mxu0 0
    %396 = vmatpush.bf16.msra.mxu0 0
    %397 = vmatpush.bf16.msra.mxu0 0
    %398 = vmatpush.bf16.msra.mxu0 0
    %399 = vmatpush.bf16.msra.mxu0 %v303
    %400 = vmatpush.bf16.msra.mxu0 %v295
    %401 = vmatpush.bf16.msra.mxu0 %v287
    %402 = vmatpush.bf16.msra.mxu0 %v279
    %403 = vmatmul.bf16.gmra.mxu0 %v341
    %v404 = vpop.f32.mrf.mxu0
    %v405 = vadd.f32 %v167, %v404
    %v406 = vpop.f32.mrf.mxu0
    %407 = vdwg.mxu0
    %408 = vmatpush.bf16.msra.mxu0 0
    %409 = vmatpush.bf16.msra.mxu0 0
    %410 = vmatpush.bf16.msra.mxu0 0
    %411 = vmatpush.bf16.msra.mxu0 0
    %412 = vmatpush.bf16.msra.mxu0 %v304
    %413 = vmatpush.bf16.msra.mxu0 %v296
    %414 = vmatpush.bf16.msra.mxu0 %v288
    %415 = vmatpush.bf16.msra.mxu0 %v280
    %416 = vmatmul.bf16.gmra.mxu0 %v341
    %v417 = vpop.f32.mrf.mxu0
    %v418 = vadd.f32 %v168, %v417
    %v419 = vpop.f32.mrf.mxu0
    %420 = vdwg.mxu0
    %421 = vmatpush.bf16.msra.mxu0 0
    %422 = vmatpush.bf16.msra.mxu0 0
    %423 = vmatpush.bf16.msra.mxu0 0
    %424 = vmatpush.bf16.msra.mxu0 0
    %425 = vmatpush.bf16.msra.mxu0 %v305
    %426 = vmatpush.bf16.msra.mxu0 %v297
    %427 = vmatpush.bf16.msra.mxu0 %v289
    %428 = vmatpush.bf16.msra.mxu0 %v281
    %429 = vmatmul.bf16.gmra.mxu0 %v341
    %v430 = vpop.f32.mrf.mxu0
    %v431 = vadd.f32 %v169, %v430
    %v432 = vpop.f32.mrf.mxu0
    %433 = vdwg.mxu0
    %434 = vmatpush.bf16.msra.mxu0 0
    %435 = vmatpush.bf16.msra.mxu0 0
    %436 = vmatpush.bf16.msra.mxu0 0
    %437 = vmatpush.bf16.msra.mxu0 0
    %438 = vmatpush.bf16.msra.mxu0 %v306
    %439 = vmatpush.bf16.msra.mxu0 %v298
    %440 = vmatpush.bf16.msra.mxu0 %v290
    %441 = vmatpush.bf16.msra.mxu0 %v282
    %442 = vmatmul.bf16.gmra.mxu0 %v341
    %v443 = vpop.f32.mrf.mxu0
    %v444 = vadd.f32 %v170, %v443
    %v445 = vpop.f32.mrf.mxu0
    %446 = vdwg.mxu0
    %v447 = vxor.u32 %v353, 2147483648
    %v448 = vxor.u32 %v366, 2147483648
    %v449 = vxor.u32 %v379, 2147483648
    %v450 = vxor.u32 %v392, 2147483648
    %v451 = vxor.u32 %v405, 2147483648
    %v452 = vxor.u32 %v418, 2147483648
    %v453 = vxor.u32 %v431, 2147483648
    %v454 = vxor.u32 %v444, 2147483648
    %v455 = vmul.f32 %v447, 1.442695
    %v456 = vpow.pop %v455
    %v457 = vmul.f32 %v448, 1.442695
    %v458 = vpow.pop %v457
    %v459 = vmul.f32 %v449, 1.442695
    %v460 = vpow.pop %v459
    %v461 = vmul.f32 %v450, 1.442695
    %v462 = vpow.pop %v461
    %v463 = vmul.f32 %v451, 1.442695
    %v464 = vpow.pop %v463
    %v465 = vmul.f32 %v452, 1.442695
    %v466 = vpow.pop %v465
    %v467 = vmul.f32 %v453, 1.442695
    %v468 = vpow.pop %v467
    %v469 = vmul.f32 %v454, 1.442695
    %v470 = vpow.pop %v469
    %v471 = vadd.f32 %v456, 1.0
    %v472 = vadd.f32 %v458, 1.0
    %v473 = vadd.f32 %v460, 1.0
    %v474 = vadd.f32 %v462, 1.0
    %v475 = vadd.f32 %v464, 1.0
    %v476 = vadd.f32 %v466, 1.0
    %v477 = vadd.f32 %v468, 1.0
    %v478 = vadd.f32 %v470, 1.0
    %v479 = vrcp.pop %v471
    %v480 = vmul.f32 %v471, %v479
    %v481 = vsub.f32 1.0, %v480
    %v482 = vmul.f32 %v479, %v481
    %v483 = vadd.f32 %v479, %v482
    %vm484 = vweird.f32 %v471
    %vm485 = vweird.f32 %v479
    %vm486 = vmor %vm484, %vm485
    %v487 = vsel %vm486, %v479, %v483
    %v488 = vand.u32 2147483647, %v471
    %vm489 = vcmp.eq.f32.partialorder %v488, 8.507059e+37
    %v490 = vand.u32 %v471, 2147483648
    %v491 = vor.u32 1.1754944e-38, %v490
    %v492 = vsel %vm489, %v491, %v487
    %v493 = vmul.f32 1.0, %v492
    %v494 = vrcp.pop %v472
    %v495 = vmul.f32 %v472, %v494
    %v496 = vsub.f32 1.0, %v495
    %v497 = vmul.f32 %v494, %v496
    %v498 = vadd.f32 %v494, %v497
    %vm499 = vweird.f32 %v472
    %vm500 = vweird.f32 %v494
    %vm501 = vmor %vm499, %vm500
    %v502 = vsel %vm501, %v494, %v498
    %v503 = vand.u32 2147483647, %v472
    %vm504 = vcmp.eq.f32.partialorder %v503, 8.507059e+37
    %v505 = vand.u32 %v472, 2147483648
    %v506 = vor.u32 1.1754944e-38, %v505
    %v507 = vsel %vm504, %v506, %v502
    %v508 = vmul.f32 1.0, %v507
    %v509 = vrcp.pop %v473
    %v510 = vmul.f32 %v473, %v509
    %v511 = vsub.f32 1.0, %v510
    %v512 = vmul.f32 %v509, %v511
    %v513 = vadd.f32 %v509, %v512
    %vm514 = vweird.f32 %v473
    %vm515 = vweird.f32 %v509
    %vm516 = vmor %vm514, %vm515
    %v517 = vsel %vm516, %v509, %v513
    %v518 = vand.u32 2147483647, %v473
    %vm519 = vcmp.eq.f32.partialorder %v518, 8.507059e+37
    %v520 = vand.u32 %v473, 2147483648
    %v521 = vor.u32 1.1754944e-38, %v520
    %v522 = vsel %vm519, %v521, %v517
    %v523 = vmul.f32 1.0, %v522
    %v524 = vrcp.pop %v474
    %v525 = vmul.f32 %v474, %v524
    %v526 = vsub.f32 1.0, %v525
    %v527 = vmul.f32 %v524, %v526
    %v528 = vadd.f32 %v524, %v527
    %vm529 = vweird.f32 %v474
    %vm530 = vweird.f32 %v524
    %vm531 = vmor %vm529, %vm530
    %v532 = vsel %vm531, %v524, %v528
    %v533 = vand.u32 2147483647, %v474
    %vm534 = vcmp.eq.f32.partialorder %v533, 8.507059e+37
    %v535 = vand.u32 %v474, 2147483648
    %v536 = vor.u32 1.1754944e-38, %v535
    %v537 = vsel %vm534, %v536, %v532
    %v538 = vmul.f32 1.0, %v537
    %v539 = vrcp.pop %v475
    %v540 = vmul.f32 %v475, %v539
    %v541 = vsub.f32 1.0, %v540
    %v542 = vmul.f32 %v539, %v541
    %v543 = vadd.f32 %v539, %v542
    %vm544 = vweird.f32 %v475
    %vm545 = vweird.f32 %v539
    %vm546 = vmor %vm544, %vm545
    %v547 = vsel %vm546, %v539, %v543
    %v548 = vand.u32 2147483647, %v475
    %vm549 = vcmp.eq.f32.partialorder %v548, 8.507059e+37
    %v550 = vand.u32 %v475, 2147483648
    %v551 = vor.u32 1.1754944e-38, %v550
    %v552 = vsel %vm549, %v551, %v547
    %v553 = vmul.f32 1.0, %v552
    %v554 = vrcp.pop %v476
    %v555 = vmul.f32 %v476, %v554
    %v556 = vsub.f32 1.0, %v555
    %v557 = vmul.f32 %v554, %v556
    %v558 = vadd.f32 %v554, %v557
    %vm559 = vweird.f32 %v476
    %vm560 = vweird.f32 %v554
    %vm561 = vmor %vm559, %vm560
    %v562 = vsel %vm561, %v554, %v558
    %v563 = vand.u32 2147483647, %v476
    %vm564 = vcmp.eq.f32.partialorder %v563, 8.507059e+37
    %v565 = vand.u32 %v476, 2147483648
    %v566 = vor.u32 1.1754944e-38, %v565
    %v567 = vsel %vm564, %v566, %v562
    %v568 = vmul.f32 1.0, %v567
    %v569 = vrcp.pop %v477
    %v570 = vmul.f32 %v477, %v569
    %v571 = vsub.f32 1.0, %v570
    %v572 = vmul.f32 %v569, %v571
    %v573 = vadd.f32 %v569, %v572
    %vm574 = vweird.f32 %v477
    %vm575 = vweird.f32 %v569
    %vm576 = vmor %vm574, %vm575
    %v577 = vsel %vm576, %v569, %v573
    %v578 = vand.u32 2147483647, %v477
    %vm579 = vcmp.eq.f32.partialorder %v578, 8.507059e+37
    %v580 = vand.u32 %v477, 2147483648
    %v581 = vor.u32 1.1754944e-38, %v580
    %v582 = vsel %vm579, %v581, %v577
    %v583 = vmul.f32 1.0, %v582
    %v584 = vrcp.pop %v478
    %v585 = vmul.f32 %v478, %v584
    %v586 = vsub.f32 1.0, %v585
    %v587 = vmul.f32 %v584, %v586
    %v588 = vadd.f32 %v584, %v587
    %vm589 = vweird.f32 %v478
    %vm590 = vweird.f32 %v584
    %vm591 = vmor %vm589, %vm590
    %v592 = vsel %vm591, %v584, %v588
    %v593 = vand.u32 2147483647, %v478
    %vm594 = vcmp.eq.f32.partialorder %v593, 8.507059e+37
    %v595 = vand.u32 %v478, 2147483648
    %v596 = vor.u32 1.1754944e-38, %v595
    %v597 = vsel %vm594, %v596, %v592
    %v598 = vmul.f32 1.0, %v597
    %v599 = vmul.f32 %v353, %v493
    %v600 = vmul.f32 %v366, %v508
    %v601 = vmul.f32 %v379, %v523
    %v602 = vmul.f32 %v392, %v538
    %v603 = vmul.f32 %v405, %v553
    %v604 = vmul.f32 %v418, %v568
    %v605 = vmul.f32 %v431, %v583
    %v606 = vmul.f32 %v444, %v598
    %v607 = vpack.c.bf16 %v599, %v599
    %v608 = vpack.c.bf16 %v600, %v600
    %v609 = vpack.c.bf16 %v601, %v601
    %v610 = vpack.c.bf16 %v602, %v602
    %v611 = vpack.c.bf16 %v603, %v603
    %v612 = vpack.c.bf16 %v604, %v604
    %v613 = vpack.c.bf16 %v605, %v605
    %v614 = vpack.c.bf16 %v606, %v606
    %v615 = vld [vmem:[#allocation7] sm:$0xff]
    %v616 = vld [vmem:[#allocation7 + $0x8] sm:$0xff]
    %v617 = vld [vmem:[#allocation7 + $0x10] sm:$0xff]
    %v618 = vld [vmem:[#allocation7 + $0x18] sm:$0xff]
    %v619 = vld [vmem:[#allocation7 + $0x20] sm:$0xff]
    %v620 = vld [vmem:[#allocation7 + $0x28] sm:$0xff]
    %v621 = vld [vmem:[#allocation7 + $0x30] sm:$0xff]
    %v622 = vld [vmem:[#allocation7 + $0x38] sm:$0xff]
    %v623 = vld [vmem:[#allocation7 + $0x40] sm:$0xff]
    %v624 = vld [vmem:[#allocation7 + $0x48] sm:$0xff]
    %v625 = vld [vmem:[#allocation7 + $0x50] sm:$0xff]
    %v626 = vld [vmem:[#allocation7 + $0x58] sm:$0xff]
    %v627 = vld [vmem:[#allocation7 + $0x60] sm:$0xff]
    %v628 = vld [vmem:[#allocation7 + $0x68] sm:$0xff]
    %v629 = vld [vmem:[#allocation7 + $0x70] sm:$0xff]
    %v630 = vld [vmem:[#allocation7 + $0x78] sm:$0xff]
    %v631 = vld [vmem:[#allocation7 + $0x80] sm:$0xff]
    %v632 = vld [vmem:[#allocation7 + $0x88] sm:$0xff]
    %v633 = vld [vmem:[#allocation7 + $0x90] sm:$0xff]
    %v634 = vld [vmem:[#allocation7 + $0x98] sm:$0xff]
    %v635 = vld [vmem:[#allocation7 + $0xa0] sm:$0xff]
    %v636 = vld [vmem:[#allocation7 + $0xa8] sm:$0xff]
    %v637 = vld [vmem:[#allocation7 + $0xb0] sm:$0xff]
    %v638 = vld [vmem:[#allocation7 + $0xb8] sm:$0xff]
    %v639 = vld [vmem:[#allocation7 + $0xc0] sm:$0xff]
    %v640 = vld [vmem:[#allocation7 + $0xc8] sm:$0xff]
    %v641 = vld [vmem:[#allocation7 + $0xd0] sm:$0xff]
    %v642 = vld [vmem:[#allocation7 + $0xd8] sm:$0xff]
    %v643 = vld [vmem:[#allocation7 + $0xe0] sm:$0xff]
    %v644 = vld [vmem:[#allocation7 + $0xe8] sm:$0xff]
    %v645 = vld [vmem:[#allocation7 + $0xf0] sm:$0xff]
    %v646 = vld [vmem:[#allocation7 + $0xf8] sm:$0xff]
    %v647 = vld [vmem:[#allocation7 + $0x100] sm:$0xff]
    %v648 = vld [vmem:[#allocation7 + $0x108] sm:$0xff]
    %v649 = vld [vmem:[#allocation7 + $0x110] sm:$0xff]
    %v650 = vld [vmem:[#allocation7 + $0x118] sm:$0xff]
    %v651 = vld [vmem:[#allocation7 + $0x120] sm:$0xff]
    %v652 = vld [vmem:[#allocation7 + $0x128] sm:$0xff]
    %v653 = vld [vmem:[#allocation7 + $0x130] sm:$0xff]
    %v654 = vld [vmem:[#allocation7 + $0x138] sm:$0xff]
    %v655 = vld [vmem:[#allocation7 + $0x140] sm:$0xff]
    %v656 = vld [vmem:[#allocation7 + $0x148] sm:$0xff]
    %v657 = vld [vmem:[#allocation7 + $0x150] sm:$0xff]
    %v658 = vld [vmem:[#allocation7 + $0x158] sm:$0xff]
    %v659 = vld [vmem:[#allocation7 + $0x160] sm:$0xff]
    %v660 = vld [vmem:[#allocation7 + $0x168] sm:$0xff]
    %v661 = vld [vmem:[#allocation7 + $0x170] sm:$0xff]
    %v662 = vld [vmem:[#allocation7 + $0x178] sm:$0xff]
    %v663 = vld [vmem:[#allocation7 + $0x180] sm:$0xff]
    %v664 = vld [vmem:[#allocation7 + $0x188] sm:$0xff]
    %v665 = vld [vmem:[#allocation7 + $0x190] sm:$0xff]
    %v666 = vld [vmem:[#allocation7 + $0x198] sm:$0xff]
    %v667 = vld [vmem:[#allocation7 + $0x1a0] sm:$0xff]
    %v668 = vld [vmem:[#allocation7 + $0x1a8] sm:$0xff]
    %v669 = vld [vmem:[#allocation7 + $0x1b0] sm:$0xff]
    %v670 = vld [vmem:[#allocation7 + $0x1b8] sm:$0xff]
    %v671 = vld [vmem:[#allocation7 + $0x1c0] sm:$0xff]
    %v672 = vld [vmem:[#allocation7 + $0x1c8] sm:$0xff]
    %v673 = vld [vmem:[#allocation7 + $0x1d0] sm:$0xff]
    %v674 = vld [vmem:[#allocation7 + $0x1d8] sm:$0xff]
    %v675 = vld [vmem:[#allocation7 + $0x1e0] sm:$0xff]
    %v676 = vld [vmem:[#allocation7 + $0x1e8] sm:$0xff]
    %v677 = vld [vmem:[#allocation7 + $0x1f0] sm:$0xff]
    %v678 = vld [vmem:[#allocation7 + $0x1f8] sm:$0xff]
    %v679 = vld [vmem:[#allocation7 + $0x200] sm:$0xff]
    %v680 = vld [vmem:[#allocation7 + $0x208] sm:$0xff]
    %v681 = vld [vmem:[#allocation7 + $0x210] sm:$0xff]
    %v682 = vld [vmem:[#allocation7 + $0x218] sm:$0xff]
    %v683 = vld [vmem:[#allocation7 + $0x220] sm:$0xff]
    %v684 = vld [vmem:[#allocation7 + $0x228] sm:$0xff]
    %v685 = vld [vmem:[#allocation7 + $0x230] sm:$0xff]
    %v686 = vld [vmem:[#allocation7 + $0x238] sm:$0xff]
    %v687 = vld [vmem:[#allocation7 + $0x240] sm:$0xff]
    %v688 = vld [vmem:[#allocation7 + $0x248] sm:$0xff]
    %v689 = vld [vmem:[#allocation7 + $0x250] sm:$0xff]
    %v690 = vld [vmem:[#allocation7 + $0x258] sm:$0xff]
    %v691 = vld [vmem:[#allocation7 + $0x260] sm:$0xff]
    %v692 = vld [vmem:[#allocation7 + $0x268] sm:$0xff]
    %v693 = vld [vmem:[#allocation7 + $0x270] sm:$0xff]
    %v694 = vld [vmem:[#allocation7 + $0x278] sm:$0xff]
    %v695 = vld [vmem:[#allocation7 + $0x280] sm:$0xff]
    %v696 = vld [vmem:[#allocation7 + $0x288] sm:$0xff]
    %v697 = vld [vmem:[#allocation7 + $0x290] sm:$0xff]
    %v698 = vld [vmem:[#allocation7 + $0x298] sm:$0xff]
    %v699 = vld [vmem:[#allocation7 + $0x2a0] sm:$0xff]
    %v700 = vld [vmem:[#allocation7 + $0x2a8] sm:$0xff]
    %v701 = vld [vmem:[#allocation7 + $0x2b0] sm:$0xff]
    %v702 = vld [vmem:[#allocation7 + $0x2b8] sm:$0xff]
    %v703 = vld [vmem:[#allocation7 + $0x2c0] sm:$0xff]
    %v704 = vld [vmem:[#allocation7 + $0x2c8] sm:$0xff]
    %v705 = vld [vmem:[#allocation7 + $0x2d0] sm:$0xff]
    %v706 = vld [vmem:[#allocation7 + $0x2d8] sm:$0xff]
    %v707 = vld [vmem:[#allocation7 + $0x2e0] sm:$0xff]
    %v708 = vld [vmem:[#allocation7 + $0x2e8] sm:$0xff]
    %v709 = vld [vmem:[#allocation7 + $0x2f0] sm:$0xff]
    %v710 = vld [vmem:[#allocation7 + $0x2f8] sm:$0xff]
    %v711 = vld [vmem:[#allocation7 + $0x300] sm:$0xff]
    %v712 = vld [vmem:[#allocation7 + $0x308] sm:$0xff]
    %v713 = vld [vmem:[#allocation7 + $0x310] sm:$0xff]
    %v714 = vld [vmem:[#allocation7 + $0x318] sm:$0xff]
    %v715 = vld [vmem:[#allocation7 + $0x320] sm:$0xff]
    %v716 = vld [vmem:[#allocation7 + $0x328] sm:$0xff]
    %v717 = vld [vmem:[#allocation7 + $0x330] sm:$0xff]
    %v718 = vld [vmem:[#allocation7 + $0x338] sm:$0xff]
    %v719 = vld [vmem:[#allocation7 + $0x340] sm:$0xff]
    %v720 = vld [vmem:[#allocation7 + $0x348] sm:$0xff]
    %v721 = vld [vmem:[#allocation7 + $0x350] sm:$0xff]
    %v722 = vld [vmem:[#allocation7 + $0x358] sm:$0xff]
    %v723 = vld [vmem:[#allocation7 + $0x360] sm:$0xff]
    %v724 = vld [vmem:[#allocation7 + $0x368] sm:$0xff]
    %v725 = vld [vmem:[#allocation7 + $0x370] sm:$0xff]
    %v726 = vld [vmem:[#allocation7 + $0x378] sm:$0xff]
    %v727 = vld [vmem:[#allocation7 + $0x380] sm:$0xff]
    %v728 = vld [vmem:[#allocation7 + $0x388] sm:$0xff]
    %v729 = vld [vmem:[#allocation7 + $0x390] sm:$0xff]
    %v730 = vld [vmem:[#allocation7 + $0x398] sm:$0xff]
    %v731 = vld [vmem:[#allocation7 + $0x3a0] sm:$0xff]
    %v732 = vld [vmem:[#allocation7 + $0x3a8] sm:$0xff]
    %v733 = vld [vmem:[#allocation7 + $0x3b0] sm:$0xff]
    %v734 = vld [vmem:[#allocation7 + $0x3b8] sm:$0xff]
    %v735 = vld [vmem:[#allocation7 + $0x3c0] sm:$0xff]
    %v736 = vld [vmem:[#allocation7 + $0x3c8] sm:$0xff]
    %v737 = vld [vmem:[#allocation7 + $0x3d0] sm:$0xff]
    %v738 = vld [vmem:[#allocation7 + $0x3d8] sm:$0xff]
    %v739 = vld [vmem:[#allocation7 + $0x3e0] sm:$0xff]
    %v740 = vld [vmem:[#allocation7 + $0x3e8] sm:$0xff]
    %v741 = vld [vmem:[#allocation7 + $0x3f0] sm:$0xff]
    %v742 = vld [vmem:[#allocation7 + $0x3f8] sm:$0xff]
    %v743 = vld [vmem:[#allocation7 + $0x400] sm:$0xff]
    %v744 = vld [vmem:[#allocation7 + $0x408] sm:$0xff]
    %v745 = vld [vmem:[#allocation7 + $0x410] sm:$0xff]
    %v746 = vld [vmem:[#allocation7 + $0x418] sm:$0xff]
    %v747 = vld [vmem:[#allocation7 + $0x420] sm:$0xff]
    %v748 = vld [vmem:[#allocation7 + $0x428] sm:$0xff]
    %v749 = vld [vmem:[#allocation7 + $0x430] sm:$0xff]
    %v750 = vld [vmem:[#allocation7 + $0x438] sm:$0xff]
    %v751 = vld [vmem:[#allocation7 + $0x440] sm:$0xff]
    %v752 = vld [vmem:[#allocation7 + $0x448] sm:$0xff]
    %v753 = vld [vmem:[#allocation7 + $0x450] sm:$0xff]
    %v754 = vld [vmem:[#allocation7 + $0x458] sm:$0xff]
    %v755 = vld [vmem:[#allocation7 + $0x460] sm:$0xff]
    %v756 = vld [vmem:[#allocation7 + $0x468] sm:$0xff]
    %v757 = vld [vmem:[#allocation7 + $0x470] sm:$0xff]
    %v758 = vld [vmem:[#allocation7 + $0x478] sm:$0xff]
    %v759 = vld [vmem:[#allocation7 + $0x480] sm:$0xff]
    %v760 = vld [vmem:[#allocation7 + $0x488] sm:$0xff]
    %v761 = vld [vmem:[#allocation7 + $0x490] sm:$0xff]
    %v762 = vld [vmem:[#allocation7 + $0x498] sm:$0xff]
    %v763 = vld [vmem:[#allocation7 + $0x4a0] sm:$0xff]
    %v764 = vld [vmem:[#allocation7 + $0x4a8] sm:$0xff]
    %v765 = vld [vmem:[#allocation7 + $0x4b0] sm:$0xff]
    %v766 = vld [vmem:[#allocation7 + $0x4b8] sm:$0xff]
    %v767 = vld [vmem:[#allocation7 + $0x4c0] sm:$0xff]
    %v768 = vld [vmem:[#allocation7 + $0x4c8] sm:$0xff]
    %v769 = vld [vmem:[#allocation7 + $0x4d0] sm:$0xff]
    %v770 = vld [vmem:[#allocation7 + $0x4d8] sm:$0xff]
    %v771 = vld [vmem:[#allocation7 + $0x4e0] sm:$0xff]
    %v772 = vld [vmem:[#allocation7 + $0x4e8] sm:$0xff]
    %v773 = vld [vmem:[#allocation7 + $0x4f0] sm:$0xff]
    %v774 = vld [vmem:[#allocation7 + $0x4f8] sm:$0xff]
    %v775 = vld [vmem:[#allocation7 + $0x500] sm:$0xff]
    %v776 = vld [vmem:[#allocation7 + $0x508] sm:$0xff]
    %v777 = vld [vmem:[#allocation7 + $0x510] sm:$0xff]
    %v778 = vld [vmem:[#allocation7 + $0x518] sm:$0xff]
    %v779 = vld [vmem:[#allocation7 + $0x520] sm:$0xff]
    %v780 = vld [vmem:[#allocation7 + $0x528] sm:$0xff]
    %v781 = vld [vmem:[#allocation7 + $0x530] sm:$0xff]
    %v782 = vld [vmem:[#allocation7 + $0x538] sm:$0xff]
    %v783 = vld [vmem:[#allocation7 + $0x540] sm:$0xff]
    %v784 = vld [vmem:[#allocation7 + $0x548] sm:$0xff]
    %v785 = vld [vmem:[#allocation7 + $0x550] sm:$0xff]
    %v786 = vld [vmem:[#allocation7 + $0x558] sm:$0xff]
    %v787 = vld [vmem:[#allocation7 + $0x560] sm:$0xff]
    %v788 = vld [vmem:[#allocation7 + $0x568] sm:$0xff]
    %v789 = vld [vmem:[#allocation7 + $0x570] sm:$0xff]
    %v790 = vld [vmem:[#allocation7 + $0x578] sm:$0xff]
    %v791 = vld [vmem:[#allocation7 + $0x580] sm:$0xff]
    %v792 = vld [vmem:[#allocation7 + $0x588] sm:$0xff]
    %v793 = vld [vmem:[#allocation7 + $0x590] sm:$0xff]
    %v794 = vld [vmem:[#allocation7 + $0x598] sm:$0xff]
    %v795 = vld [vmem:[#allocation7 + $0x5a0] sm:$0xff]
    %v796 = vld [vmem:[#allocation7 + $0x5a8] sm:$0xff]
    %v797 = vld [vmem:[#allocation7 + $0x5b0] sm:$0xff]
    %v798 = vld [vmem:[#allocation7 + $0x5b8] sm:$0xff]
    %v799 = vld [vmem:[#allocation7 + $0x5c0] sm:$0xff]
    %v800 = vld [vmem:[#allocation7 + $0x5c8] sm:$0xff]
    %v801 = vld [vmem:[#allocation7 + $0x5d0] sm:$0xff]
    %v802 = vld [vmem:[#allocation7 + $0x5d8] sm:$0xff]
    %v803 = vld [vmem:[#allocation7 + $0x5e0] sm:$0xff]
    %v804 = vld [vmem:[#allocation7 + $0x5e8] sm:$0xff]
    %v805 = vld [vmem:[#allocation7 + $0x5f0] sm:$0xff]
    %v806 = vld [vmem:[#allocation7 + $0x5f8] sm:$0xff]
    %v807 = vld [vmem:[#allocation7 + $0x600] sm:$0xff]
    %v808 = vld [vmem:[#allocation7 + $0x608] sm:$0xff]
    %v809 = vld [vmem:[#allocation7 + $0x610] sm:$0xff]
    %v810 = vld [vmem:[#allocation7 + $0x618] sm:$0xff]
    %v811 = vld [vmem:[#allocation7 + $0x620] sm:$0xff]
    %v812 = vld [vmem:[#allocation7 + $0x628] sm:$0xff]
    %v813 = vld [vmem:[#allocation7 + $0x630] sm:$0xff]
    %v814 = vld [vmem:[#allocation7 + $0x638] sm:$0xff]
    %v815 = vld [vmem:[#allocation7 + $0x640] sm:$0xff]
    %v816 = vld [vmem:[#allocation7 + $0x648] sm:$0xff]
    %v817 = vld [vmem:[#allocation7 + $0x650] sm:$0xff]
    %v818 = vld [vmem:[#allocation7 + $0x658] sm:$0xff]
    %v819 = vld [vmem:[#allocation7 + $0x660] sm:$0xff]
    %v820 = vld [vmem:[#allocation7 + $0x668] sm:$0xff]
    %v821 = vld [vmem:[#allocation7 + $0x670] sm:$0xff]
    %v822 = vld [vmem:[#allocation7 + $0x678] sm:$0xff]
    %v823 = vld [vmem:[#allocation7 + $0x680] sm:$0xff]
    %v824 = vld [vmem:[#allocation7 + $0x688] sm:$0xff]
    %v825 = vld [vmem:[#allocation7 + $0x690] sm:$0xff]
    %v826 = vld [vmem:[#allocation7 + $0x698] sm:$0xff]
    %v827 = vld [vmem:[#allocation7 + $0x6a0] sm:$0xff]
    %v828 = vld [vmem:[#allocation7 + $0x6a8] sm:$0xff]
    %v829 = vld [vmem:[#allocation7 + $0x6b0] sm:$0xff]
    %v830 = vld [vmem:[#allocation7 + $0x6b8] sm:$0xff]
    %v831 = vld [vmem:[#allocation7 + $0x6c0] sm:$0xff]
    %v832 = vld [vmem:[#allocation7 + $0x6c8] sm:$0xff]
    %v833 = vld [vmem:[#allocation7 + $0x6d0] sm:$0xff]
    %v834 = vld [vmem:[#allocation7 + $0x6d8] sm:$0xff]
    %v835 = vld [vmem:[#allocation7 + $0x6e0] sm:$0xff]
    %v836 = vld [vmem:[#allocation7 + $0x6e8] sm:$0xff]
    %v837 = vld [vmem:[#allocation7 + $0x6f0] sm:$0xff]
    %v838 = vld [vmem:[#allocation7 + $0x6f8] sm:$0xff]
    %v839 = vld [vmem:[#allocation7 + $0x700] sm:$0xff]
    %v840 = vld [vmem:[#allocation7 + $0x708] sm:$0xff]
    %v841 = vld [vmem:[#allocation7 + $0x710] sm:$0xff]
    %v842 = vld [vmem:[#allocation7 + $0x718] sm:$0xff]
    %v843 = vld [vmem:[#allocation7 + $0x720] sm:$0xff]
    %v844 = vld [vmem:[#allocation7 + $0x728] sm:$0xff]
    %v845 = vld [vmem:[#allocation7 + $0x730] sm:$0xff]
    %v846 = vld [vmem:[#allocation7 + $0x738] sm:$0xff]
    %v847 = vld [vmem:[#allocation7 + $0x740] sm:$0xff]
    %v848 = vld [vmem:[#allocation7 + $0x748] sm:$0xff]
    %v849 = vld [vmem:[#allocation7 + $0x750] sm:$0xff]
    %v850 = vld [vmem:[#allocation7 + $0x758] sm:$0xff]
    %v851 = vld [vmem:[#allocation7 + $0x760] sm:$0xff]
    %v852 = vld [vmem:[#allocation7 + $0x768] sm:$0xff]
    %v853 = vld [vmem:[#allocation7 + $0x770] sm:$0xff]
    %v854 = vld [vmem:[#allocation7 + $0x778] sm:$0xff]
    %v855 = vld [vmem:[#allocation7 + $0x780] sm:$0xff]
    %v856 = vld [vmem:[#allocation7 + $0x788] sm:$0xff]
    %v857 = vld [vmem:[#allocation7 + $0x790] sm:$0xff]
    %v858 = vld [vmem:[#allocation7 + $0x798] sm:$0xff]
    %v859 = vld [vmem:[#allocation7 + $0x7a0] sm:$0xff]
    %v860 = vld [vmem:[#allocation7 + $0x7a8] sm:$0xff]
    %v861 = vld [vmem:[#allocation7 + $0x7b0] sm:$0xff]
    %v862 = vld [vmem:[#allocation7 + $0x7b8] sm:$0xff]
    %v863 = vld [vmem:[#allocation7 + $0x7c0] sm:$0xff]
    %v864 = vld [vmem:[#allocation7 + $0x7c8] sm:$0xff]
    %v865 = vld [vmem:[#allocation7 + $0x7d0] sm:$0xff]
    %v866 = vld [vmem:[#allocation7 + $0x7d8] sm:$0xff]
    %v867 = vld [vmem:[#allocation7 + $0x7e0] sm:$0xff]
    %v868 = vld [vmem:[#allocation7 + $0x7e8] sm:$0xff]
    %v869 = vld [vmem:[#allocation7 + $0x7f0] sm:$0xff]
    %v870 = vld [vmem:[#allocation7 + $0x7f8] sm:$0xff]
    %v871 = vld [vmem:[#allocation7 + $0x800] sm:$0xff]
    %v872 = vld [vmem:[#allocation7 + $0x808] sm:$0xff]
    %v873 = vld [vmem:[#allocation7 + $0x810] sm:$0xff]
    %v874 = vld [vmem:[#allocation7 + $0x818] sm:$0xff]
    %v875 = vld [vmem:[#allocation7 + $0x820] sm:$0xff]
    %v876 = vld [vmem:[#allocation7 + $0x828] sm:$0xff]
    %v877 = vld [vmem:[#allocation7 + $0x830] sm:$0xff]
    %v878 = vld [vmem:[#allocation7 + $0x838] sm:$0xff]
    %v879 = vld [vmem:[#allocation7 + $0x840] sm:$0xff]
    %v880 = vld [vmem:[#allocation7 + $0x848] sm:$0xff]
    %v881 = vld [vmem:[#allocation7 + $0x850] sm:$0xff]
    %v882 = vld [vmem:[#allocation7 + $0x858] sm:$0xff]
    %v883 = vld [vmem:[#allocation7 + $0x860] sm:$0xff]
    %v884 = vld [vmem:[#allocation7 + $0x868] sm:$0xff]
    %v885 = vld [vmem:[#allocation7 + $0x870] sm:$0xff]
    %v886 = vld [vmem:[#allocation7 + $0x878] sm:$0xff]
    %v887 = vld [vmem:[#allocation7 + $0x880] sm:$0xff]
    %v888 = vld [vmem:[#allocation7 + $0x888] sm:$0xff]
    %v889 = vld [vmem:[#allocation7 + $0x890] sm:$0xff]
    %v890 = vld [vmem:[#allocation7 + $0x898] sm:$0xff]
    %v891 = vld [vmem:[#allocation7 + $0x8a0] sm:$0xff]
    %v892 = vld [vmem:[#allocation7 + $0x8a8] sm:$0xff]
    %v893 = vld [vmem:[#allocation7 + $0x8b0] sm:$0xff]
    %v894 = vld [vmem:[#allocation7 + $0x8b8] sm:$0xff]
    %v895 = vld [vmem:[#allocation7 + $0x8c0] sm:$0xff]
    %v896 = vld [vmem:[#allocation7 + $0x8c8] sm:$0xff]
    %v897 = vld [vmem:[#allocation7 + $0x8d0] sm:$0xff]
    %v898 = vld [vmem:[#allocation7 + $0x8d8] sm:$0xff]
    %v899 = vld [vmem:[#allocation7 + $0x8e0] sm:$0xff]
    %v900 = vld [vmem:[#allocation7 + $0x8e8] sm:$0xff]
    %v901 = vld [vmem:[#allocation7 + $0x8f0] sm:$0xff]
    %v902 = vld [vmem:[#allocation7 + $0x8f8] sm:$0xff]
    %v903 = vld [vmem:[#allocation7 + $0x900] sm:$0xff]
    %v904 = vld [vmem:[#allocation7 + $0x908] sm:$0xff]
    %v905 = vld [vmem:[#allocation7 + $0x910] sm:$0xff]
    %v906 = vld [vmem:[#allocation7 + $0x918] sm:$0xff]
    %v907 = vld [vmem:[#allocation7 + $0x920] sm:$0xff]
    %v908 = vld [vmem:[#allocation7 + $0x928] sm:$0xff]
    %v909 = vld [vmem:[#allocation7 + $0x930] sm:$0xff]
    %v910 = vld [vmem:[#allocation7 + $0x938] sm:$0xff]
    %v911 = vld [vmem:[#allocation7 + $0x940] sm:$0xff]
    %v912 = vld [vmem:[#allocation7 + $0x948] sm:$0xff]
    %v913 = vld [vmem:[#allocation7 + $0x950] sm:$0xff]
    %v914 = vld [vmem:[#allocation7 + $0x958] sm:$0xff]
    %v915 = vld [vmem:[#allocation7 + $0x960] sm:$0xff]
    %v916 = vld [vmem:[#allocation7 + $0x968] sm:$0xff]
    %v917 = vld [vmem:[#allocation7 + $0x970] sm:$0xff]
    %v918 = vld [vmem:[#allocation7 + $0x978] sm:$0xff]
    %v919 = vld [vmem:[#allocation7 + $0x980] sm:$0xff]
    %v920 = vld [vmem:[#allocation7 + $0x988] sm:$0xff]
    %v921 = vld [vmem:[#allocation7 + $0x990] sm:$0xff]
    %v922 = vld [vmem:[#allocation7 + $0x998] sm:$0xff]
    %v923 = vld [vmem:[#allocation7 + $0x9a0] sm:$0xff]
    %v924 = vld [vmem:[#allocation7 + $0x9a8] sm:$0xff]
    %v925 = vld [vmem:[#allocation7 + $0x9b0] sm:$0xff]
    %v926 = vld [vmem:[#allocation7 + $0x9b8] sm:$0xff]
    %v927 = vld [vmem:[#allocation7 + $0x9c0] sm:$0xff]
    %v928 = vld [vmem:[#allocation7 + $0x9c8] sm:$0xff]
    %v929 = vld [vmem:[#allocation7 + $0x9d0] sm:$0xff]
    %v930 = vld [vmem:[#allocation7 + $0x9d8] sm:$0xff]
    %v931 = vld [vmem:[#allocation7 + $0x9e0] sm:$0xff]
    %v932 = vld [vmem:[#allocation7 + $0x9e8] sm:$0xff]
    %v933 = vld [vmem:[#allocation7 + $0x9f0] sm:$0xff]
    %v934 = vld [vmem:[#allocation7 + $0x9f8] sm:$0xff]
    %v935 = vld [vmem:[#allocation7 + $0xa00] sm:$0xff]
    %v936 = vld [vmem:[#allocation7 + $0xa08] sm:$0xff]
    %v937 = vld [vmem:[#allocation7 + $0xa10] sm:$0xff]
    %v938 = vld [vmem:[#allocation7 + $0xa18] sm:$0xff]
    %v939 = vld [vmem:[#allocation7 + $0xa20] sm:$0xff]
    %v940 = vld [vmem:[#allocation7 + $0xa28] sm:$0xff]
    %v941 = vld [vmem:[#allocation7 + $0xa30] sm:$0xff]
    %v942 = vld [vmem:[#allocation7 + $0xa38] sm:$0xff]
    %v943 = vld [vmem:[#allocation7 + $0xa40] sm:$0xff]
    %v944 = vld [vmem:[#allocation7 + $0xa48] sm:$0xff]
    %v945 = vld [vmem:[#allocation7 + $0xa50] sm:$0xff]
    %v946 = vld [vmem:[#allocation7 + $0xa58] sm:$0xff]
    %v947 = vld [vmem:[#allocation7 + $0xa60] sm:$0xff]
    %v948 = vld [vmem:[#allocation7 + $0xa68] sm:$0xff]
    %v949 = vld [vmem:[#allocation7 + $0xa70] sm:$0xff]
    %v950 = vld [vmem:[#allocation7 + $0xa78] sm:$0xff]
    %v951 = vld [vmem:[#allocation7 + $0xa80] sm:$0xff]
    %v952 = vld [vmem:[#allocation7 + $0xa88] sm:$0xff]
    %v953 = vld [vmem:[#allocation7 + $0xa90] sm:$0xff]
    %v954 = vld [vmem:[#allocation7 + $0xa98] sm:$0xff]
    %v955 = vld [vmem:[#allocation7 + $0xaa0] sm:$0xff]
    %v956 = vld [vmem:[#allocation7 + $0xaa8] sm:$0xff]
    %v957 = vld [vmem:[#allocation7 + $0xab0] sm:$0xff]
    %v958 = vld [vmem:[#allocation7 + $0xab8] sm:$0xff]
    %v959 = vld [vmem:[#allocation7 + $0xac0] sm:$0xff]
    %v960 = vld [vmem:[#allocation7 + $0xac8] sm:$0xff]
    %v961 = vld [vmem:[#allocation7 + $0xad0] sm:$0xff]
    %v962 = vld [vmem:[#allocation7 + $0xad8] sm:$0xff]
    %v963 = vld [vmem:[#allocation7 + $0xae0] sm:$0xff]
    %v964 = vld [vmem:[#allocation7 + $0xae8] sm:$0xff]
    %v965 = vld [vmem:[#allocation7 + $0xaf0] sm:$0xff]
    %v966 = vld [vmem:[#allocation7 + $0xaf8] sm:$0xff]
    %v967 = vld [vmem:[#allocation7 + $0xb00] sm:$0xff]
    %v968 = vld [vmem:[#allocation7 + $0xb08] sm:$0xff]
    %v969 = vld [vmem:[#allocation7 + $0xb10] sm:$0xff]
    %v970 = vld [vmem:[#allocation7 + $0xb18] sm:$0xff]
    %v971 = vld [vmem:[#allocation7 + $0xb20] sm:$0xff]
    %v972 = vld [vmem:[#allocation7 + $0xb28] sm:$0xff]
    %v973 = vld [vmem:[#allocation7 + $0xb30] sm:$0xff]
    %v974 = vld [vmem:[#allocation7 + $0xb38] sm:$0xff]
    %v975 = vld [vmem:[#allocation7 + $0xb40] sm:$0xff]
    %v976 = vld [vmem:[#allocation7 + $0xb48] sm:$0xff]
    %v977 = vld [vmem:[#allocation7 + $0xb50] sm:$0xff]
    %v978 = vld [vmem:[#allocation7 + $0xb58] sm:$0xff]
    %v979 = vld [vmem:[#allocation7 + $0xb60] sm:$0xff]
    %v980 = vld [vmem:[#allocation7 + $0xb68] sm:$0xff]
    %v981 = vld [vmem:[#allocation7 + $0xb70] sm:$0xff]
    %v982 = vld [vmem:[#allocation7 + $0xb78] sm:$0xff]
    %v983 = vld [vmem:[#allocation7 + $0xb80] sm:$0xff]
    %v984 = vld [vmem:[#allocation7 + $0xb88] sm:$0xff]
    %v985 = vld [vmem:[#allocation7 + $0xb90] sm:$0xff]
    %v986 = vld [vmem:[#allocation7 + $0xb98] sm:$0xff]
    %v987 = vld [vmem:[#allocation7 + $0xba0] sm:$0xff]
    %v988 = vld [vmem:[#allocation7 + $0xba8] sm:$0xff]
    %v989 = vld [vmem:[#allocation7 + $0xbb0] sm:$0xff]
    %v990 = vld [vmem:[#allocation7 + $0xbb8] sm:$0xff]
    %v991 = vld [vmem:[#allocation7 + $0xbc0] sm:$0xff]
    %v992 = vld [vmem:[#allocation7 + $0xbc8] sm:$0xff]
    %v993 = vld [vmem:[#allocation7 + $0xbd0] sm:$0xff]
    %v994 = vld [vmem:[#allocation7 + $0xbd8] sm:$0xff]
    %v995 = vld [vmem:[#allocation7 + $0xbe0] sm:$0xff]
    %v996 = vld [vmem:[#allocation7 + $0xbe8] sm:$0xff]
    %v997 = vld [vmem:[#allocation7 + $0xbf0] sm:$0xff]
    %v998 = vld [vmem:[#allocation7 + $0xbf8] sm:$0xff]
    %v999 = vld [vmem:[#allocation7 + $0xc00] sm:$0xff]
    %v1000 = vld [vmem:[#allocation7 + $0xc08] sm:$0xff]
    %v1001 = vld [vmem:[#allocation7 + $0xc10] sm:$0xff]
    %v1002 = vld [vmem:[#allocation7 + $0xc18] sm:$0xff]
    %v1003 = vld [vmem:[#allocation7 + $0xc20] sm:$0xff]
    %v1004 = vld [vmem:[#allocation7 + $0xc28] sm:$0xff]
    %v1005 = vld [vmem:[#allocation7 + $0xc30] sm:$0xff]
    %v1006 = vld [vmem:[#allocation7 + $0xc38] sm:$0xff]
    %v1007 = vld [vmem:[#allocation7 + $0xc40] sm:$0xff]
    %v1008 = vld [vmem:[#allocation7 + $0xc48] sm:$0xff]
    %v1009 = vld [vmem:[#allocation7 + $0xc50] sm:$0xff]
    %v1010 = vld [vmem:[#allocation7 + $0xc58] sm:$0xff]
    %v1011 = vld [vmem:[#allocation7 + $0xc60] sm:$0xff]
    %v1012 = vld [vmem:[#allocation7 + $0xc68] sm:$0xff]
    %v1013 = vld [vmem:[#allocation7 + $0xc70] sm:$0xff]
    %v1014 = vld [vmem:[#allocation7 + $0xc78] sm:$0xff]
    %v1015 = vld [vmem:[#allocation7 + $0xc80] sm:$0xff]
    %v1016 = vld [vmem:[#allocation7 + $0xc88] sm:$0xff]
    %v1017 = vld [vmem:[#allocation7 + $0xc90] sm:$0xff]
    %v1018 = vld [vmem:[#allocation7 + $0xc98] sm:$0xff]
    %v1019 = vld [vmem:[#allocation7 + $0xca0] sm:$0xff]
    %v1020 = vld [vmem:[#allocation7 + $0xca8] sm:$0xff]
    %v1021 = vld [vmem:[#allocation7 + $0xcb0] sm:$0xff]
    %v1022 = vld [vmem:[#allocation7 + $0xcb8] sm:$0xff]
    %v1023 = vld [vmem:[#allocation7 + $0xcc0] sm:$0xff]
    %v1024 = vld [vmem:[#allocation7 + $0xcc8] sm:$0xff]
    %v1025 = vld [vmem:[#allocation7 + $0xcd0] sm:$0xff]
    %v1026 = vld [vmem:[#allocation7 + $0xcd8] sm:$0xff]
    %v1027 = vld [vmem:[#allocation7 + $0xce0] sm:$0xff]
    %v1028 = vld [vmem:[#allocation7 + $0xce8] sm:$0xff]
    %v1029 = vld [vmem:[#allocation7 + $0xcf0] sm:$0xff]
    %v1030 = vld [vmem:[#allocation7 + $0xcf8] sm:$0xff]
    %v1031 = vld [vmem:[#allocation7 + $0xd00] sm:$0xff]
    %v1032 = vld [vmem:[#allocation7 + $0xd08] sm:$0xff]
    %v1033 = vld [vmem:[#allocation7 + $0xd10] sm:$0xff]
    %v1034 = vld [vmem:[#allocation7 + $0xd18] sm:$0xff]
    %v1035 = vld [vmem:[#allocation7 + $0xd20] sm:$0xff]
    %v1036 = vld [vmem:[#allocation7 + $0xd28] sm:$0xff]
    %v1037 = vld [vmem:[#allocation7 + $0xd30] sm:$0xff]
    %v1038 = vld [vmem:[#allocation7 + $0xd38] sm:$0xff]
    %v1039 = vld [vmem:[#allocation7 + $0xd40] sm:$0xff]
    %v1040 = vld [vmem:[#allocation7 + $0xd48] sm:$0xff]
    %v1041 = vld [vmem:[#allocation7 + $0xd50] sm:$0xff]
    %v1042 = vld [vmem:[#allocation7 + $0xd58] sm:$0xff]
    %v1043 = vld [vmem:[#allocation7 + $0xd60] sm:$0xff]
    %v1044 = vld [vmem:[#allocation7 + $0xd68] sm:$0xff]
    %v1045 = vld [vmem:[#allocation7 + $0xd70] sm:$0xff]
    %v1046 = vld [vmem:[#allocation7 + $0xd78] sm:$0xff]
    %v1047 = vld [vmem:[#allocation7 + $0xd80] sm:$0xff]
    %v1048 = vld [vmem:[#allocation7 + $0xd88] sm:$0xff]
    %v1049 = vld [vmem:[#allocation7 + $0xd90] sm:$0xff]
    %v1050 = vld [vmem:[#allocation7 + $0xd98] sm:$0xff]
    %v1051 = vld [vmem:[#allocation7 + $0xda0] sm:$0xff]
    %v1052 = vld [vmem:[#allocation7 + $0xda8] sm:$0xff]
    %v1053 = vld [vmem:[#allocation7 + $0xdb0] sm:$0xff]
    %v1054 = vld [vmem:[#allocation7 + $0xdb8] sm:$0xff]
    %v1055 = vld [vmem:[#allocation7 + $0xdc0] sm:$0xff]
    %v1056 = vld [vmem:[#allocation7 + $0xdc8] sm:$0xff]
    %v1057 = vld [vmem:[#allocation7 + $0xdd0] sm:$0xff]
    %v1058 = vld [vmem:[#allocation7 + $0xdd8] sm:$0xff]
    %v1059 = vld [vmem:[#allocation7 + $0xde0] sm:$0xff]
    %v1060 = vld [vmem:[#allocation7 + $0xde8] sm:$0xff]
    %v1061 = vld [vmem:[#allocation7 + $0xdf0] sm:$0xff]
    %v1062 = vld [vmem:[#allocation7 + $0xdf8] sm:$0xff]
    %v1063 = vld [vmem:[#allocation7 + $0xe00] sm:$0xff]
    %v1064 = vld [vmem:[#allocation7 + $0xe08] sm:$0xff]
    %v1065 = vld [vmem:[#allocation7 + $0xe10] sm:$0xff]
    %v1066 = vld [vmem:[#allocation7 + $0xe18] sm:$0xff]
    %v1067 = vld [vmem:[#allocation7 + $0xe20] sm:$0xff]
    %v1068 = vld [vmem:[#allocation7 + $0xe28] sm:$0xff]
    %v1069 = vld [vmem:[#allocation7 + $0xe30] sm:$0xff]
    %v1070 = vld [vmem:[#allocation7 + $0xe38] sm:$0xff]
    %v1071 = vld [vmem:[#allocation7 + $0xe40] sm:$0xff]
    %v1072 = vld [vmem:[#allocation7 + $0xe48] sm:$0xff]
    %v1073 = vld [vmem:[#allocation7 + $0xe50] sm:$0xff]
    %v1074 = vld [vmem:[#allocation7 + $0xe58] sm:$0xff]
    %v1075 = vld [vmem:[#allocation7 + $0xe60] sm:$0xff]
    %v1076 = vld [vmem:[#allocation7 + $0xe68] sm:$0xff]
    %v1077 = vld [vmem:[#allocation7 + $0xe70] sm:$0xff]
    %v1078 = vld [vmem:[#allocation7 + $0xe78] sm:$0xff]
    %v1079 = vld [vmem:[#allocation7 + $0xe80] sm:$0xff]
    %v1080 = vld [vmem:[#allocation7 + $0xe88] sm:$0xff]
    %v1081 = vld [vmem:[#allocation7 + $0xe90] sm:$0xff]
    %v1082 = vld [vmem:[#allocation7 + $0xe98] sm:$0xff]
    %v1083 = vld [vmem:[#allocation7 + $0xea0] sm:$0xff]
    %v1084 = vld [vmem:[#allocation7 + $0xea8] sm:$0xff]
    %v1085 = vld [vmem:[#allocation7 + $0xeb0] sm:$0xff]
    %v1086 = vld [vmem:[#allocation7 + $0xeb8] sm:$0xff]
    %v1087 = vld [vmem:[#allocation7 + $0xec0] sm:$0xff]
    %v1088 = vld [vmem:[#allocation7 + $0xec8] sm:$0xff]
    %v1089 = vld [vmem:[#allocation7 + $0xed0] sm:$0xff]
    %v1090 = vld [vmem:[#allocation7 + $0xed8] sm:$0xff]
    %v1091 = vld [vmem:[#allocation7 + $0xee0] sm:$0xff]
    %v1092 = vld [vmem:[#allocation7 + $0xee8] sm:$0xff]
    %v1093 = vld [vmem:[#allocation7 + $0xef0] sm:$0xff]
    %v1094 = vld [vmem:[#allocation7 + $0xef8] sm:$0xff]
    %v1095 = vld [vmem:[#allocation7 + $0xf00] sm:$0xff]
    %v1096 = vld [vmem:[#allocation7 + $0xf08] sm:$0xff]
    %v1097 = vld [vmem:[#allocation7 + $0xf10] sm:$0xff]
    %v1098 = vld [vmem:[#allocation7 + $0xf18] sm:$0xff]
    %v1099 = vld [vmem:[#allocation7 + $0xf20] sm:$0xff]
    %v1100 = vld [vmem:[#allocation7 + $0xf28] sm:$0xff]
    %v1101 = vld [vmem:[#allocation7 + $0xf30] sm:$0xff]
    %v1102 = vld [vmem:[#allocation7 + $0xf38] sm:$0xff]
    %v1103 = vld [vmem:[#allocation7 + $0xf40] sm:$0xff]
    %v1104 = vld [vmem:[#allocation7 + $0xf48] sm:$0xff]
    %v1105 = vld [vmem:[#allocation7 + $0xf50] sm:$0xff]
    %v1106 = vld [vmem:[#allocation7 + $0xf58] sm:$0xff]
    %v1107 = vld [vmem:[#allocation7 + $0xf60] sm:$0xff]
    %v1108 = vld [vmem:[#allocation7 + $0xf68] sm:$0xff]
    %v1109 = vld [vmem:[#allocation7 + $0xf70] sm:$0xff]
    %v1110 = vld [vmem:[#allocation7 + $0xf78] sm:$0xff]
    %v1111 = vld [vmem:[#allocation7 + $0xf80] sm:$0xff]
    %v1112 = vld [vmem:[#allocation7 + $0xf88] sm:$0xff]
    %v1113 = vld [vmem:[#allocation7 + $0xf90] sm:$0xff]
    %v1114 = vld [vmem:[#allocation7 + $0xf98] sm:$0xff]
    %v1115 = vld [vmem:[#allocation7 + $0xfa0] sm:$0xff]
    %v1116 = vld [vmem:[#allocation7 + $0xfa8] sm:$0xff]
    %v1117 = vld [vmem:[#allocation7 + $0xfb0] sm:$0xff]
    %v1118 = vld [vmem:[#allocation7 + $0xfb8] sm:$0xff]
    %v1119 = vld [vmem:[#allocation7 + $0xfc0] sm:$0xff]
    %v1120 = vld [vmem:[#allocation7 + $0xfc8] sm:$0xff]
    %v1121 = vld [vmem:[#allocation7 + $0xfd0] sm:$0xff]
    %v1122 = vld [vmem:[#allocation7 + $0xfd8] sm:$0xff]
    %v1123 = vld [vmem:[#allocation7 + $0xfe0] sm:$0xff]
    %v1124 = vld [vmem:[#allocation7 + $0xfe8] sm:$0xff]
    %v1125 = vld [vmem:[#allocation7 + $0xff0] sm:$0xff]
    %v1126 = vld [vmem:[#allocation7 + $0xff8] sm:$0xff]
    %v1127 = vld [vmem:[#allocation9] sm:$0xff]
    %v1129 = vperm.slane %v1127, 0
    %v1130 = vperm.slane %v1127, 1
    %v1131 = vperm.slane %v1127, 2
    %v1132 = vperm.slane %v1127, 3
    %v1133 = vperm.slane %v1127, 4
    %v1134 = vperm.slane %v1127, 5
    %v1135 = vperm.slane %v1127, 6
    %v1136 = vperm.slane %v1127, 7
    %v1657 = vunpack.c.l.b16 %v615
    %v1658 = vunpack.c.h.b16 %v615
    %v1659 = vunpack.c.l.b16 %v616
    %v1660 = vunpack.c.h.b16 %v616
    %v1661 = vunpack.c.l.b16 %v617
    %v1662 = vunpack.c.h.b16 %v617
    %v1663 = vunpack.c.l.b16 %v618
    %v1664 = vunpack.c.h.b16 %v618
    %v1665 = vunpack.c.l.b16 %v619
    %v1666 = vunpack.c.h.b16 %v619
    %v1667 = vunpack.c.l.b16 %v620
    %v1668 = vunpack.c.h.b16 %v620
    %v1669 = vunpack.c.l.b16 %v621
    %v1670 = vunpack.c.h.b16 %v621
    %v1671 = vunpack.c.l.b16 %v622
    %v1672 = vunpack.c.h.b16 %v622
    %v1673 = vunpack.c.l.b16 %v623
    %v1674 = vunpack.c.h.b16 %v623
    %v1675 = vunpack.c.l.b16 %v624
    %v1676 = vunpack.c.h.b16 %v624
    %v1677 = vunpack.c.l.b16 %v625
    %v1678 = vunpack.c.h.b16 %v625
    %v1679 = vunpack.c.l.b16 %v626
    %v1680 = vunpack.c.h.b16 %v626
    %v1681 = vunpack.c.l.b16 %v627
    %v1682 = vunpack.c.h.b16 %v627
    %v1683 = vunpack.c.l.b16 %v628
    %v1684 = vunpack.c.h.b16 %v628
    %v1685 = vunpack.c.l.b16 %v629
    %v1686 = vunpack.c.h.b16 %v629
    %v1687 = vunpack.c.l.b16 %v630
    %v1688 = vunpack.c.h.b16 %v630
    %v1689 = vunpack.c.l.b16 %v631
    %v1690 = vunpack.c.h.b16 %v631
    %v1691 = vunpack.c.l.b16 %v632
    %v1692 = vunpack.c.h.b16 %v632
    %v1693 = vunpack.c.l.b16 %v633
    %v1694 = vunpack.c.h.b16 %v633
    %v1695 = vunpack.c.l.b16 %v634
    %v1696 = vunpack.c.h.b16 %v634
    %v1697 = vunpack.c.l.b16 %v635
    %v1698 = vunpack.c.h.b16 %v635
    %v1699 = vunpack.c.l.b16 %v636
    %v1700 = vunpack.c.h.b16 %v636
    %v1701 = vunpack.c.l.b16 %v637
    %v1702 = vunpack.c.h.b16 %v637
    %v1703 = vunpack.c.l.b16 %v638
    %v1704 = vunpack.c.h.b16 %v638
    %v1705 = vunpack.c.l.b16 %v639
    %v1706 = vunpack.c.h.b16 %v639
    %v1707 = vunpack.c.l.b16 %v640
    %v1708 = vunpack.c.h.b16 %v640
    %v1709 = vunpack.c.l.b16 %v641
    %v1710 = vunpack.c.h.b16 %v641
    %v1711 = vunpack.c.l.b16 %v642
    %v1712 = vunpack.c.h.b16 %v642
    %v1713 = vunpack.c.l.b16 %v643
    %v1714 = vunpack.c.h.b16 %v643
    %v1715 = vunpack.c.l.b16 %v644
    %v1716 = vunpack.c.h.b16 %v644
    %v1717 = vunpack.c.l.b16 %v645
    %v1718 = vunpack.c.h.b16 %v645
    %v1719 = vunpack.c.l.b16 %v646
    %v1720 = vunpack.c.h.b16 %v646
    %v1721 = vunpack.c.l.b16 %v647
    %v1722 = vunpack.c.h.b16 %v647
    %v1723 = vunpack.c.l.b16 %v648
    %v1724 = vunpack.c.h.b16 %v648
    %v1725 = vunpack.c.l.b16 %v649
    %v1726 = vunpack.c.h.b16 %v649
    %v1727 = vunpack.c.l.b16 %v650
    %v1728 = vunpack.c.h.b16 %v650
    %v1729 = vunpack.c.l.b16 %v651
    %v1730 = vunpack.c.h.b16 %v651
    %v1731 = vunpack.c.l.b16 %v652
    %v1732 = vunpack.c.h.b16 %v652
    %v1733 = vunpack.c.l.b16 %v653
    %v1734 = vunpack.c.h.b16 %v653
    %v1735 = vunpack.c.l.b16 %v654
    %v1736 = vunpack.c.h.b16 %v654
    %v1737 = vunpack.c.l.b16 %v655
    %v1738 = vunpack.c.h.b16 %v655
    %v1739 = vunpack.c.l.b16 %v656
    %v1740 = vunpack.c.h.b16 %v656
    %v1741 = vunpack.c.l.b16 %v657
    %v1742 = vunpack.c.h.b16 %v657
    %v1743 = vunpack.c.l.b16 %v658
    %v1744 = vunpack.c.h.b16 %v658
    %v1745 = vunpack.c.l.b16 %v659
    %v1746 = vunpack.c.h.b16 %v659
    %v1747 = vunpack.c.l.b16 %v660
    %v1748 = vunpack.c.h.b16 %v660
    %v1749 = vunpack.c.l.b16 %v661
    %v1750 = vunpack.c.h.b16 %v661
    %v1751 = vunpack.c.l.b16 %v662
    %v1752 = vunpack.c.h.b16 %v662
    %v1753 = vunpack.c.l.b16 %v663
    %v1754 = vunpack.c.h.b16 %v663
    %v1755 = vunpack.c.l.b16 %v664
    %v1756 = vunpack.c.h.b16 %v664
    %v1757 = vunpack.c.l.b16 %v665
    %v1758 = vunpack.c.h.b16 %v665
    %v1759 = vunpack.c.l.b16 %v666
    %v1760 = vunpack.c.h.b16 %v666
    %v1761 = vunpack.c.l.b16 %v667
    %v1762 = vunpack.c.h.b16 %v667
    %v1763 = vunpack.c.l.b16 %v668
    %v1764 = vunpack.c.h.b16 %v668
    %v1765 = vunpack.c.l.b16 %v669
    %v1766 = vunpack.c.h.b16 %v669
    %v1767 = vunpack.c.l.b16 %v670
    %v1768 = vunpack.c.h.b16 %v670
    %v1769 = vunpack.c.l.b16 %v671
    %v1770 = vunpack.c.h.b16 %v671
    %v1771 = vunpack.c.l.b16 %v672
    %v1772 = vunpack.c.h.b16 %v672
    %v1773 = vunpack.c.l.b16 %v673
    %v1774 = vunpack.c.h.b16 %v673
    %v1775 = vunpack.c.l.b16 %v674
    %v1776 = vunpack.c.h.b16 %v674
    %v1777 = vunpack.c.l.b16 %v675
    %v1778 = vunpack.c.h.b16 %v675
    %v1779 = vunpack.c.l.b16 %v676
    %v1780 = vunpack.c.h.b16 %v676
    %v1781 = vunpack.c.l.b16 %v677
    %v1782 = vunpack.c.h.b16 %v677
    %v1783 = vunpack.c.l.b16 %v678
    %v1784 = vunpack.c.h.b16 %v678
    %v1785 = vunpack.c.l.b16 %v679
    %v1786 = vunpack.c.h.b16 %v679
    %v1787 = vunpack.c.l.b16 %v680
    %v1788 = vunpack.c.h.b16 %v680
    %v1789 = vunpack.c.l.b16 %v681
    %v1790 = vunpack.c.h.b16 %v681
    %v1791 = vunpack.c.l.b16 %v682
    %v1792 = vunpack.c.h.b16 %v682
    %v1793 = vunpack.c.l.b16 %v683
    %v1794 = vunpack.c.h.b16 %v683
    %v1795 = vunpack.c.l.b16 %v684
    %v1796 = vunpack.c.h.b16 %v684
    %v1797 = vunpack.c.l.b16 %v685
    %v1798 = vunpack.c.h.b16 %v685
    %v1799 = vunpack.c.l.b16 %v686
    %v1800 = vunpack.c.h.b16 %v686
    %v1801 = vunpack.c.l.b16 %v687
    %v1802 = vunpack.c.h.b16 %v687
    %v1803 = vunpack.c.l.b16 %v688
    %v1804 = vunpack.c.h.b16 %v688
    %v1805 = vunpack.c.l.b16 %v689
    %v1806 = vunpack.c.h.b16 %v689
    %v1807 = vunpack.c.l.b16 %v690
    %v1808 = vunpack.c.h.b16 %v690
    %v1809 = vunpack.c.l.b16 %v691
    %v1810 = vunpack.c.h.b16 %v691
    %v1811 = vunpack.c.l.b16 %v692
    %v1812 = vunpack.c.h.b16 %v692
    %v1813 = vunpack.c.l.b16 %v693
    %v1814 = vunpack.c.h.b16 %v693
    %v1815 = vunpack.c.l.b16 %v694
    %v1816 = vunpack.c.h.b16 %v694
    %v1817 = vunpack.c.l.b16 %v695
    %v1818 = vunpack.c.h.b16 %v695
    %v1819 = vunpack.c.l.b16 %v696
    %v1820 = vunpack.c.h.b16 %v696
    %v1821 = vunpack.c.l.b16 %v697
    %v1822 = vunpack.c.h.b16 %v697
    %v1823 = vunpack.c.l.b16 %v698
    %v1824 = vunpack.c.h.b16 %v698
    %v1825 = vunpack.c.l.b16 %v699
    %v1826 = vunpack.c.h.b16 %v699
    %v1827 = vunpack.c.l.b16 %v700
    %v1828 = vunpack.c.h.b16 %v700
    %v1829 = vunpack.c.l.b16 %v701
    %v1830 = vunpack.c.h.b16 %v701
    %v1831 = vunpack.c.l.b16 %v702
    %v1832 = vunpack.c.h.b16 %v702
    %v1833 = vunpack.c.l.b16 %v703
    %v1834 = vunpack.c.h.b16 %v703
    %v1835 = vunpack.c.l.b16 %v704
    %v1836 = vunpack.c.h.b16 %v704
    %v1837 = vunpack.c.l.b16 %v705
    %v1838 = vunpack.c.h.b16 %v705
    %v1839 = vunpack.c.l.b16 %v706
    %v1840 = vunpack.c.h.b16 %v706
    %v1841 = vunpack.c.l.b16 %v707
    %v1842 = vunpack.c.h.b16 %v707
    %v1843 = vunpack.c.l.b16 %v708
    %v1844 = vunpack.c.h.b16 %v708
    %v1845 = vunpack.c.l.b16 %v709
    %v1846 = vunpack.c.h.b16 %v709
    %v1847 = vunpack.c.l.b16 %v710
    %v1848 = vunpack.c.h.b16 %v710
    %v1849 = vunpack.c.l.b16 %v711
    %v1850 = vunpack.c.h.b16 %v711
    %v1851 = vunpack.c.l.b16 %v712
    %v1852 = vunpack.c.h.b16 %v712
    %v1853 = vunpack.c.l.b16 %v713
    %v1854 = vunpack.c.h.b16 %v713
    %v1855 = vunpack.c.l.b16 %v714
    %v1856 = vunpack.c.h.b16 %v714
    %v1857 = vunpack.c.l.b16 %v715
    %v1858 = vunpack.c.h.b16 %v715
    %v1859 = vunpack.c.l.b16 %v716
    %v1860 = vunpack.c.h.b16 %v716
    %v1861 = vunpack.c.l.b16 %v717
    %v1862 = vunpack.c.h.b16 %v717
    %v1863 = vunpack.c.l.b16 %v718
    %v1864 = vunpack.c.h.b16 %v718
    %v1865 = vunpack.c.l.b16 %v719
    %v1866 = vunpack.c.h.b16 %v719
    %v1867 = vunpack.c.l.b16 %v720
    %v1868 = vunpack.c.h.b16 %v720
    %v1869 = vunpack.c.l.b16 %v721
    %v1870 = vunpack.c.h.b16 %v721
    %v1871 = vunpack.c.l.b16 %v722
    %v1872 = vunpack.c.h.b16 %v722
    %v1873 = vunpack.c.l.b16 %v723
    %v1874 = vunpack.c.h.b16 %v723
    %v1875 = vunpack.c.l.b16 %v724
    %v1876 = vunpack.c.h.b16 %v724
    %v1877 = vunpack.c.l.b16 %v725
    %v1878 = vunpack.c.h.b16 %v725
    %v1879 = vunpack.c.l.b16 %v726
    %v1880 = vunpack.c.h.b16 %v726
    %v1881 = vunpack.c.l.b16 %v727
    %v1882 = vunpack.c.h.b16 %v727
    %v1883 = vunpack.c.l.b16 %v728
    %v1884 = vunpack.c.h.b16 %v728
    %v1885 = vunpack.c.l.b16 %v729
    %v1886 = vunpack.c.h.b16 %v729
    %v1887 = vunpack.c.l.b16 %v730
    %v1888 = vunpack.c.h.b16 %v730
    %v1889 = vunpack.c.l.b16 %v731
    %v1890 = vunpack.c.h.b16 %v731
    %v1891 = vunpack.c.l.b16 %v732
    %v1892 = vunpack.c.h.b16 %v732
    %v1893 = vunpack.c.l.b16 %v733
    %v1894 = vunpack.c.h.b16 %v733
    %v1895 = vunpack.c.l.b16 %v734
    %v1896 = vunpack.c.h.b16 %v734
    %v1897 = vunpack.c.l.b16 %v735
    %v1898 = vunpack.c.h.b16 %v735
    %v1899 = vunpack.c.l.b16 %v736
    %v1900 = vunpack.c.h.b16 %v736
    %v1901 = vunpack.c.l.b16 %v737
    %v1902 = vunpack.c.h.b16 %v737
    %v1903 = vunpack.c.l.b16 %v738
    %v1904 = vunpack.c.h.b16 %v738
    %v1905 = vunpack.c.l.b16 %v739
    %v1906 = vunpack.c.h.b16 %v739
    %v1907 = vunpack.c.l.b16 %v740
    %v1908 = vunpack.c.h.b16 %v740
    %v1909 = vunpack.c.l.b16 %v741
    %v1910 = vunpack.c.h.b16 %v741
    %v1911 = vunpack.c.l.b16 %v742
    %v1912 = vunpack.c.h.b16 %v742
    %v1913 = vunpack.c.l.b16 %v743
    %v1914 = vunpack.c.h.b16 %v743
    %v1915 = vunpack.c.l.b16 %v744
    %v1916 = vunpack.c.h.b16 %v744
    %v1917 = vunpack.c.l.b16 %v745
    %v1918 = vunpack.c.h.b16 %v745
    %v1919 = vunpack.c.l.b16 %v746
    %v1920 = vunpack.c.h.b16 %v746
    %v1921 = vunpack.c.l.b16 %v747
    %v1922 = vunpack.c.h.b16 %v747
    %v1923 = vunpack.c.l.b16 %v748
    %v1924 = vunpack.c.h.b16 %v748
    %v1925 = vunpack.c.l.b16 %v749
    %v1926 = vunpack.c.h.b16 %v749
    %v1927 = vunpack.c.l.b16 %v750
    %v1928 = vunpack.c.h.b16 %v750
    %v1929 = vunpack.c.l.b16 %v751
    %v1930 = vunpack.c.h.b16 %v751
    %v1931 = vunpack.c.l.b16 %v752
    %v1932 = vunpack.c.h.b16 %v752
    %v1933 = vunpack.c.l.b16 %v753
    %v1934 = vunpack.c.h.b16 %v753
    %v1935 = vunpack.c.l.b16 %v754
    %v1936 = vunpack.c.h.b16 %v754
    %v1937 = vunpack.c.l.b16 %v755
    %v1938 = vunpack.c.h.b16 %v755
    %v1939 = vunpack.c.l.b16 %v756
    %v1940 = vunpack.c.h.b16 %v756
    %v1941 = vunpack.c.l.b16 %v757
    %v1942 = vunpack.c.h.b16 %v757
    %v1943 = vunpack.c.l.b16 %v758
    %v1944 = vunpack.c.h.b16 %v758
    %v1945 = vunpack.c.l.b16 %v759
    %v1946 = vunpack.c.h.b16 %v759
    %v1947 = vunpack.c.l.b16 %v760
    %v1948 = vunpack.c.h.b16 %v760
    %v1949 = vunpack.c.l.b16 %v761
    %v1950 = vunpack.c.h.b16 %v761
    %v1951 = vunpack.c.l.b16 %v762
    %v1952 = vunpack.c.h.b16 %v762
    %v1953 = vunpack.c.l.b16 %v763
    %v1954 = vunpack.c.h.b16 %v763
    %v1955 = vunpack.c.l.b16 %v764
    %v1956 = vunpack.c.h.b16 %v764
    %v1957 = vunpack.c.l.b16 %v765
    %v1958 = vunpack.c.h.b16 %v765
    %v1959 = vunpack.c.l.b16 %v766
    %v1960 = vunpack.c.h.b16 %v766
    %v1961 = vunpack.c.l.b16 %v767
    %v1962 = vunpack.c.h.b16 %v767
    %v1963 = vunpack.c.l.b16 %v768
    %v1964 = vunpack.c.h.b16 %v768
    %v1965 = vunpack.c.l.b16 %v769
    %v1966 = vunpack.c.h.b16 %v769
    %v1967 = vunpack.c.l.b16 %v770
    %v1968 = vunpack.c.h.b16 %v770
    %v1969 = vunpack.c.l.b16 %v771
    %v1970 = vunpack.c.h.b16 %v771
    %v1971 = vunpack.c.l.b16 %v772
    %v1972 = vunpack.c.h.b16 %v772
    %v1973 = vunpack.c.l.b16 %v773
    %v1974 = vunpack.c.h.b16 %v773
    %v1975 = vunpack.c.l.b16 %v774
    %v1976 = vunpack.c.h.b16 %v774
    %v1977 = vunpack.c.l.b16 %v775
    %v1978 = vunpack.c.h.b16 %v775
    %v1979 = vunpack.c.l.b16 %v776
    %v1980 = vunpack.c.h.b16 %v776
    %v1981 = vunpack.c.l.b16 %v777
    %v1982 = vunpack.c.h.b16 %v777
    %v1983 = vunpack.c.l.b16 %v778
    %v1984 = vunpack.c.h.b16 %v778
    %v1985 = vunpack.c.l.b16 %v779
    %v1986 = vunpack.c.h.b16 %v779
    %v1987 = vunpack.c.l.b16 %v780
    %v1988 = vunpack.c.h.b16 %v780
    %v1989 = vunpack.c.l.b16 %v781
    %v1990 = vunpack.c.h.b16 %v781
    %v1991 = vunpack.c.l.b16 %v782
    %v1992 = vunpack.c.h.b16 %v782
    %v1993 = vunpack.c.l.b16 %v783
    %v1994 = vunpack.c.h.b16 %v783
    %v1995 = vunpack.c.l.b16 %v784
    %v1996 = vunpack.c.h.b16 %v784
    %v1997 = vunpack.c.l.b16 %v785
    %v1998 = vunpack.c.h.b16 %v785
    %v1999 = vunpack.c.l.b16 %v786
    %v2000 = vunpack.c.h.b16 %v786
    %v2001 = vunpack.c.l.b16 %v787
    %v2002 = vunpack.c.h.b16 %v787
    %v2003 = vunpack.c.l.b16 %v788
    %v2004 = vunpack.c.h.b16 %v788
    %v2005 = vunpack.c.l.b16 %v789
    %v2006 = vunpack.c.h.b16 %v789
    %v2007 = vunpack.c.l.b16 %v790
    %v2008 = vunpack.c.h.b16 %v790
    %v2009 = vunpack.c.l.b16 %v791
    %v2010 = vunpack.c.h.b16 %v791
    %v2011 = vunpack.c.l.b16 %v792
    %v2012 = vunpack.c.h.b16 %v792
    %v2013 = vunpack.c.l.b16 %v793
    %v2014 = vunpack.c.h.b16 %v793
    %v2015 = vunpack.c.l.b16 %v794
    %v2016 = vunpack.c.h.b16 %v794
    %v2017 = vunpack.c.l.b16 %v795
    %v2018 = vunpack.c.h.b16 %v795
    %v2019 = vunpack.c.l.b16 %v796
    %v2020 = vunpack.c.h.b16 %v796
    %v2021 = vunpack.c.l.b16 %v797
    %v2022 = vunpack.c.h.b16 %v797
    %v2023 = vunpack.c.l.b16 %v798
    %v2024 = vunpack.c.h.b16 %v798
    %v2025 = vunpack.c.l.b16 %v799
    %v2026 = vunpack.c.h.b16 %v799
    %v2027 = vunpack.c.l.b16 %v800
    %v2028 = vunpack.c.h.b16 %v800
    %v2029 = vunpack.c.l.b16 %v801
    %v2030 = vunpack.c.h.b16 %v801
    %v2031 = vunpack.c.l.b16 %v802
    %v2032 = vunpack.c.h.b16 %v802
    %v2033 = vunpack.c.l.b16 %v803
    %v2034 = vunpack.c.h.b16 %v803
    %v2035 = vunpack.c.l.b16 %v804
    %v2036 = vunpack.c.h.b16 %v804
    %v2037 = vunpack.c.l.b16 %v805
    %v2038 = vunpack.c.h.b16 %v805
    %v2039 = vunpack.c.l.b16 %v806
    %v2040 = vunpack.c.h.b16 %v806
    %v2041 = vunpack.c.l.b16 %v807
    %v2042 = vunpack.c.h.b16 %v807
    %v2043 = vunpack.c.l.b16 %v808
    %v2044 = vunpack.c.h.b16 %v808
    %v2045 = vunpack.c.l.b16 %v809
    %v2046 = vunpack.c.h.b16 %v809
    %v2047 = vunpack.c.l.b16 %v810
    %v2048 = vunpack.c.h.b16 %v810
    %v2049 = vunpack.c.l.b16 %v811
    %v2050 = vunpack.c.h.b16 %v811
    %v2051 = vunpack.c.l.b16 %v812
    %v2052 = vunpack.c.h.b16 %v812
    %v2053 = vunpack.c.l.b16 %v813
    %v2054 = vunpack.c.h.b16 %v813
    %v2055 = vunpack.c.l.b16 %v814
    %v2056 = vunpack.c.h.b16 %v814
    %v2057 = vunpack.c.l.b16 %v815
    %v2058 = vunpack.c.h.b16 %v815
    %v2059 = vunpack.c.l.b16 %v816
    %v2060 = vunpack.c.h.b16 %v816
    %v2061 = vunpack.c.l.b16 %v817
    %v2062 = vunpack.c.h.b16 %v817
    %v2063 = vunpack.c.l.b16 %v818
    %v2064 = vunpack.c.h.b16 %v818
    %v2065 = vunpack.c.l.b16 %v819
    %v2066 = vunpack.c.h.b16 %v819
    %v2067 = vunpack.c.l.b16 %v820
    %v2068 = vunpack.c.h.b16 %v820
    %v2069 = vunpack.c.l.b16 %v821
    %v2070 = vunpack.c.h.b16 %v821
    %v2071 = vunpack.c.l.b16 %v822
    %v2072 = vunpack.c.h.b16 %v822
    %v2073 = vunpack.c.l.b16 %v823
    %v2074 = vunpack.c.h.b16 %v823
    %v2075 = vunpack.c.l.b16 %v824
    %v2076 = vunpack.c.h.b16 %v824
    %v2077 = vunpack.c.l.b16 %v825
    %v2078 = vunpack.c.h.b16 %v825
    %v2079 = vunpack.c.l.b16 %v826
    %v2080 = vunpack.c.h.b16 %v826
    %v2081 = vunpack.c.l.b16 %v827
    %v2082 = vunpack.c.h.b16 %v827
    %v2083 = vunpack.c.l.b16 %v828
    %v2084 = vunpack.c.h.b16 %v828
    %v2085 = vunpack.c.l.b16 %v829
    %v2086 = vunpack.c.h.b16 %v829
    %v2087 = vunpack.c.l.b16 %v830
    %v2088 = vunpack.c.h.b16 %v830
    %v2089 = vunpack.c.l.b16 %v831
    %v2090 = vunpack.c.h.b16 %v831
    %v2091 = vunpack.c.l.b16 %v832
    %v2092 = vunpack.c.h.b16 %v832
    %v2093 = vunpack.c.l.b16 %v833
    %v2094 = vunpack.c.h.b16 %v833
    %v2095 = vunpack.c.l.b16 %v834
    %v2096 = vunpack.c.h.b16 %v834
    %v2097 = vunpack.c.l.b16 %v835
    %v2098 = vunpack.c.h.b16 %v835
    %v2099 = vunpack.c.l.b16 %v836
    %v2100 = vunpack.c.h.b16 %v836
    %v2101 = vunpack.c.l.b16 %v837
    %v2102 = vunpack.c.h.b16 %v837
    %v2103 = vunpack.c.l.b16 %v838
    %v2104 = vunpack.c.h.b16 %v838
    %v2105 = vunpack.c.l.b16 %v839
    %v2106 = vunpack.c.h.b16 %v839
    %v2107 = vunpack.c.l.b16 %v840
    %v2108 = vunpack.c.h.b16 %v840
    %v2109 = vunpack.c.l.b16 %v841
    %v2110 = vunpack.c.h.b16 %v841
    %v2111 = vunpack.c.l.b16 %v842
    %v2112 = vunpack.c.h.b16 %v842
    %v2113 = vunpack.c.l.b16 %v843
    %v2114 = vunpack.c.h.b16 %v843
    %v2115 = vunpack.c.l.b16 %v844
    %v2116 = vunpack.c.h.b16 %v844
    %v2117 = vunpack.c.l.b16 %v845
    %v2118 = vunpack.c.h.b16 %v845
    %v2119 = vunpack.c.l.b16 %v846
    %v2120 = vunpack.c.h.b16 %v846
    %v2121 = vunpack.c.l.b16 %v847
    %v2122 = vunpack.c.h.b16 %v847
    %v2123 = vunpack.c.l.b16 %v848
    %v2124 = vunpack.c.h.b16 %v848
    %v2125 = vunpack.c.l.b16 %v849
    %v2126 = vunpack.c.h.b16 %v849
    %v2127 = vunpack.c.l.b16 %v850
    %v2128 = vunpack.c.h.b16 %v850
    %v2129 = vunpack.c.l.b16 %v851
    %v2130 = vunpack.c.h.b16 %v851
    %v2131 = vunpack.c.l.b16 %v852
    %v2132 = vunpack.c.h.b16 %v852
    %v2133 = vunpack.c.l.b16 %v853
    %v2134 = vunpack.c.h.b16 %v853
    %v2135 = vunpack.c.l.b16 %v854
    %v2136 = vunpack.c.h.b16 %v854
    %v2137 = vunpack.c.l.b16 %v855
    %v2138 = vunpack.c.h.b16 %v855
    %v2139 = vunpack.c.l.b16 %v856
    %v2140 = vunpack.c.h.b16 %v856
    %v2141 = vunpack.c.l.b16 %v857
    %v2142 = vunpack.c.h.b16 %v857
    %v2143 = vunpack.c.l.b16 %v858
    %v2144 = vunpack.c.h.b16 %v858
    %v2145 = vunpack.c.l.b16 %v859
    %v2146 = vunpack.c.h.b16 %v859
    %v2147 = vunpack.c.l.b16 %v860
    %v2148 = vunpack.c.h.b16 %v860
    %v2149 = vunpack.c.l.b16 %v861
    %v2150 = vunpack.c.h.b16 %v861
    %v2151 = vunpack.c.l.b16 %v862
    %v2152 = vunpack.c.h.b16 %v862
    %v2153 = vunpack.c.l.b16 %v863
    %v2154 = vunpack.c.h.b16 %v863
    %v2155 = vunpack.c.l.b16 %v864
    %v2156 = vunpack.c.h.b16 %v864
    %v2157 = vunpack.c.l.b16 %v865
    %v2158 = vunpack.c.h.b16 %v865
    %v2159 = vunpack.c.l.b16 %v866
    %v2160 = vunpack.c.h.b16 %v866
    %v2161 = vunpack.c.l.b16 %v867
    %v2162 = vunpack.c.h.b16 %v867
    %v2163 = vunpack.c.l.b16 %v868
    %v2164 = vunpack.c.h.b16 %v868
    %v2165 = vunpack.c.l.b16 %v869
    %v2166 = vunpack.c.h.b16 %v869
    %v2167 = vunpack.c.l.b16 %v870
    %v2168 = vunpack.c.h.b16 %v870
    %v2169 = vunpack.c.l.b16 %v871
    %v2170 = vunpack.c.h.b16 %v871
    %v2171 = vunpack.c.l.b16 %v872
    %v2172 = vunpack.c.h.b16 %v872
    %v2173 = vunpack.c.l.b16 %v873
    %v2174 = vunpack.c.h.b16 %v873
    %v2175 = vunpack.c.l.b16 %v874
    %v2176 = vunpack.c.h.b16 %v874
    %v2177 = vunpack.c.l.b16 %v875
    %v2178 = vunpack.c.h.b16 %v875
    %v2179 = vunpack.c.l.b16 %v876
    %v2180 = vunpack.c.h.b16 %v876
    %v2181 = vunpack.c.l.b16 %v877
    %v2182 = vunpack.c.h.b16 %v877
    %v2183 = vunpack.c.l.b16 %v878
    %v2184 = vunpack.c.h.b16 %v878
    %v2185 = vunpack.c.l.b16 %v879
    %v2186 = vunpack.c.h.b16 %v879
    %v2187 = vunpack.c.l.b16 %v880
    %v2188 = vunpack.c.h.b16 %v880
    %v2189 = vunpack.c.l.b16 %v881
    %v2190 = vunpack.c.h.b16 %v881
    %v2191 = vunpack.c.l.b16 %v882
    %v2192 = vunpack.c.h.b16 %v882
    %v2193 = vunpack.c.l.b16 %v883
    %v2194 = vunpack.c.h.b16 %v883
    %v2195 = vunpack.c.l.b16 %v884
    %v2196 = vunpack.c.h.b16 %v884
    %v2197 = vunpack.c.l.b16 %v885
    %v2198 = vunpack.c.h.b16 %v885
    %v2199 = vunpack.c.l.b16 %v886
    %v2200 = vunpack.c.h.b16 %v886
    %v2201 = vunpack.c.l.b16 %v887
    %v2202 = vunpack.c.h.b16 %v887
    %v2203 = vunpack.c.l.b16 %v888
    %v2204 = vunpack.c.h.b16 %v888
    %v2205 = vunpack.c.l.b16 %v889
    %v2206 = vunpack.c.h.b16 %v889
    %v2207 = vunpack.c.l.b16 %v890
    %v2208 = vunpack.c.h.b16 %v890
    %v2209 = vunpack.c.l.b16 %v891
    %v2210 = vunpack.c.h.b16 %v891
    %v2211 = vunpack.c.l.b16 %v892
    %v2212 = vunpack.c.h.b16 %v892
    %v2213 = vunpack.c.l.b16 %v893
    %v2214 = vunpack.c.h.b16 %v893
    %v2215 = vunpack.c.l.b16 %v894
    %v2216 = vunpack.c.h.b16 %v894
    %v2217 = vunpack.c.l.b16 %v895
    %v2218 = vunpack.c.h.b16 %v895
    %v2219 = vunpack.c.l.b16 %v896
    %v2220 = vunpack.c.h.b16 %v896
    %v2221 = vunpack.c.l.b16 %v897
    %v2222 = vunpack.c.h.b16 %v897
    %v2223 = vunpack.c.l.b16 %v898
    %v2224 = vunpack.c.h.b16 %v898
    %v2225 = vunpack.c.l.b16 %v899
    %v2226 = vunpack.c.h.b16 %v899
    %v2227 = vunpack.c.l.b16 %v900
    %v2228 = vunpack.c.h.b16 %v900
    %v2229 = vunpack.c.l.b16 %v901
    %v2230 = vunpack.c.h.b16 %v901
    %v2231 = vunpack.c.l.b16 %v902
    %v2232 = vunpack.c.h.b16 %v902
    %v2233 = vunpack.c.l.b16 %v903
    %v2234 = vunpack.c.h.b16 %v903
    %v2235 = vunpack.c.l.b16 %v904
    %v2236 = vunpack.c.h.b16 %v904
    %v2237 = vunpack.c.l.b16 %v905
    %v2238 = vunpack.c.h.b16 %v905
    %v2239 = vunpack.c.l.b16 %v906
    %v2240 = vunpack.c.h.b16 %v906
    %v2241 = vunpack.c.l.b16 %v907
    %v2242 = vunpack.c.h.b16 %v907
    %v2243 = vunpack.c.l.b16 %v908
    %v2244 = vunpack.c.h.b16 %v908
    %v2245 = vunpack.c.l.b16 %v909
    %v2246 = vunpack.c.h.b16 %v909
    %v2247 = vunpack.c.l.b16 %v910
    %v2248 = vunpack.c.h.b16 %v910
    %v2249 = vunpack.c.l.b16 %v911
    %v2250 = vunpack.c.h.b16 %v911
    %v2251 = vunpack.c.l.b16 %v912
    %v2252 = vunpack.c.h.b16 %v912
    %v2253 = vunpack.c.l.b16 %v913
    %v2254 = vunpack.c.h.b16 %v913
    %v2255 = vunpack.c.l.b16 %v914
    %v2256 = vunpack.c.h.b16 %v914
    %v2257 = vunpack.c.l.b16 %v915
    %v2258 = vunpack.c.h.b16 %v915
    %v2259 = vunpack.c.l.b16 %v916
    %v2260 = vunpack.c.h.b16 %v916
    %v2261 = vunpack.c.l.b16 %v917
    %v2262 = vunpack.c.h.b16 %v917
    %v2263 = vunpack.c.l.b16 %v918
    %v2264 = vunpack.c.h.b16 %v918
    %v2265 = vunpack.c.l.b16 %v919
    %v2266 = vunpack.c.h.b16 %v919
    %v2267 = vunpack.c.l.b16 %v920
    %v2268 = vunpack.c.h.b16 %v920
    %v2269 = vunpack.c.l.b16 %v921
    %v2270 = vunpack.c.h.b16 %v921
    %v2271 = vunpack.c.l.b16 %v922
    %v2272 = vunpack.c.h.b16 %v922
    %v2273 = vunpack.c.l.b16 %v923
    %v2274 = vunpack.c.h.b16 %v923
    %v2275 = vunpack.c.l.b16 %v924
    %v2276 = vunpack.c.h.b16 %v924
    %v2277 = vunpack.c.l.b16 %v925
    %v2278 = vunpack.c.h.b16 %v925
    %v2279 = vunpack.c.l.b16 %v926
    %v2280 = vunpack.c.h.b16 %v926
    %v2281 = vunpack.c.l.b16 %v927
    %v2282 = vunpack.c.h.b16 %v927
    %v2283 = vunpack.c.l.b16 %v928
    %v2284 = vunpack.c.h.b16 %v928
    %v2285 = vunpack.c.l.b16 %v929
    %v2286 = vunpack.c.h.b16 %v929
    %v2287 = vunpack.c.l.b16 %v930
    %v2288 = vunpack.c.h.b16 %v930
    %v2289 = vunpack.c.l.b16 %v931
    %v2290 = vunpack.c.h.b16 %v931
    %v2291 = vunpack.c.l.b16 %v932
    %v2292 = vunpack.c.h.b16 %v932
    %v2293 = vunpack.c.l.b16 %v933
    %v2294 = vunpack.c.h.b16 %v933
    %v2295 = vunpack.c.l.b16 %v934
    %v2296 = vunpack.c.h.b16 %v934
    %v2297 = vunpack.c.l.b16 %v935
    %v2298 = vunpack.c.h.b16 %v935
    %v2299 = vunpack.c.l.b16 %v936
    %v2300 = vunpack.c.h.b16 %v936
    %v2301 = vunpack.c.l.b16 %v937
    %v2302 = vunpack.c.h.b16 %v937
    %v2303 = vunpack.c.l.b16 %v938
    %v2304 = vunpack.c.h.b16 %v938
    %v2305 = vunpack.c.l.b16 %v939
    %v2306 = vunpack.c.h.b16 %v939
    %v2307 = vunpack.c.l.b16 %v940
    %v2308 = vunpack.c.h.b16 %v940
    %v2309 = vunpack.c.l.b16 %v941
    %v2310 = vunpack.c.h.b16 %v941
    %v2311 = vunpack.c.l.b16 %v942
    %v2312 = vunpack.c.h.b16 %v942
    %v2313 = vunpack.c.l.b16 %v943
    %v2314 = vunpack.c.h.b16 %v943
    %v2315 = vunpack.c.l.b16 %v944
    %v2316 = vunpack.c.h.b16 %v944
    %v2317 = vunpack.c.l.b16 %v945
    %v2318 = vunpack.c.h.b16 %v945
    %v2319 = vunpack.c.l.b16 %v946
    %v2320 = vunpack.c.h.b16 %v946
    %v2321 = vunpack.c.l.b16 %v947
    %v2322 = vunpack.c.h.b16 %v947
    %v2323 = vunpack.c.l.b16 %v948
    %v2324 = vunpack.c.h.b16 %v948
    %v2325 = vunpack.c.l.b16 %v949
    %v2326 = vunpack.c.h.b16 %v949
    %v2327 = vunpack.c.l.b16 %v950
    %v2328 = vunpack.c.h.b16 %v950
    %v2329 = vunpack.c.l.b16 %v951
    %v2330 = vunpack.c.h.b16 %v951
    %v2331 = vunpack.c.l.b16 %v952
    %v2332 = vunpack.c.h.b16 %v952
    %v2333 = vunpack.c.l.b16 %v953
    %v2334 = vunpack.c.h.b16 %v953
    %v2335 = vunpack.c.l.b16 %v954
    %v2336 = vunpack.c.h.b16 %v954
    %v2337 = vunpack.c.l.b16 %v955
    %v2338 = vunpack.c.h.b16 %v955
    %v2339 = vunpack.c.l.b16 %v956
    %v2340 = vunpack.c.h.b16 %v956
    %v2341 = vunpack.c.l.b16 %v957
    %v2342 = vunpack.c.h.b16 %v957
    %v2343 = vunpack.c.l.b16 %v958
    %v2344 = vunpack.c.h.b16 %v958
    %v2345 = vunpack.c.l.b16 %v959
    %v2346 = vunpack.c.h.b16 %v959
    %v2347 = vunpack.c.l.b16 %v960
    %v2348 = vunpack.c.h.b16 %v960
    %v2349 = vunpack.c.l.b16 %v961
    %v2350 = vunpack.c.h.b16 %v961
    %v2351 = vunpack.c.l.b16 %v962
    %v2352 = vunpack.c.h.b16 %v962
    %v2353 = vunpack.c.l.b16 %v963
    %v2354 = vunpack.c.h.b16 %v963
    %v2355 = vunpack.c.l.b16 %v964
    %v2356 = vunpack.c.h.b16 %v964
    %v2357 = vunpack.c.l.b16 %v965
    %v2358 = vunpack.c.h.b16 %v965
    %v2359 = vunpack.c.l.b16 %v966
    %v2360 = vunpack.c.h.b16 %v966
    %v2361 = vunpack.c.l.b16 %v967
    %v2362 = vunpack.c.h.b16 %v967
    %v2363 = vunpack.c.l.b16 %v968
    %v2364 = vunpack.c.h.b16 %v968
    %v2365 = vunpack.c.l.b16 %v969
    %v2366 = vunpack.c.h.b16 %v969
    %v2367 = vunpack.c.l.b16 %v970
    %v2368 = vunpack.c.h.b16 %v970
    %v2369 = vunpack.c.l.b16 %v971
    %v2370 = vunpack.c.h.b16 %v971
    %v2371 = vunpack.c.l.b16 %v972
    %v2372 = vunpack.c.h.b16 %v972
    %v2373 = vunpack.c.l.b16 %v973
    %v2374 = vunpack.c.h.b16 %v973
    %v2375 = vunpack.c.l.b16 %v974
    %v2376 = vunpack.c.h.b16 %v974
    %v2377 = vunpack.c.l.b16 %v975
    %v2378 = vunpack.c.h.b16 %v975
    %v2379 = vunpack.c.l.b16 %v976
    %v2380 = vunpack.c.h.b16 %v976
    %v2381 = vunpack.c.l.b16 %v977
    %v2382 = vunpack.c.h.b16 %v977
    %v2383 = vunpack.c.l.b16 %v978
    %v2384 = vunpack.c.h.b16 %v978
    %v2385 = vunpack.c.l.b16 %v979
    %v2386 = vunpack.c.h.b16 %v979
    %v2387 = vunpack.c.l.b16 %v980
    %v2388 = vunpack.c.h.b16 %v980
    %v2389 = vunpack.c.l.b16 %v981
    %v2390 = vunpack.c.h.b16 %v981
    %v2391 = vunpack.c.l.b16 %v982
    %v2392 = vunpack.c.h.b16 %v982
    %v2393 = vunpack.c.l.b16 %v983
    %v2394 = vunpack.c.h.b16 %v983
    %v2395 = vunpack.c.l.b16 %v984
    %v2396 = vunpack.c.h.b16 %v984
    %v2397 = vunpack.c.l.b16 %v985
    %v2398 = vunpack.c.h.b16 %v985
    %v2399 = vunpack.c.l.b16 %v986
    %v2400 = vunpack.c.h.b16 %v986
    %v2401 = vunpack.c.l.b16 %v987
    %v2402 = vunpack.c.h.b16 %v987
    %v2403 = vunpack.c.l.b16 %v988
    %v2404 = vunpack.c.h.b16 %v988
    %v2405 = vunpack.c.l.b16 %v989
    %v2406 = vunpack.c.h.b16 %v989
    %v2407 = vunpack.c.l.b16 %v990
    %v2408 = vunpack.c.h.b16 %v990
    %v2409 = vunpack.c.l.b16 %v991
    %v2410 = vunpack.c.h.b16 %v991
    %v2411 = vunpack.c.l.b16 %v992
    %v2412 = vunpack.c.h.b16 %v992
    %v2413 = vunpack.c.l.b16 %v993
    %v2414 = vunpack.c.h.b16 %v993
    %v2415 = vunpack.c.l.b16 %v994
    %v2416 = vunpack.c.h.b16 %v994
    %v2417 = vunpack.c.l.b16 %v995
    %v2418 = vunpack.c.h.b16 %v995
    %v2419 = vunpack.c.l.b16 %v996
    %v2420 = vunpack.c.h.b16 %v996
    %v2421 = vunpack.c.l.b16 %v997
    %v2422 = vunpack.c.h.b16 %v997
    %v2423 = vunpack.c.l.b16 %v998
    %v2424 = vunpack.c.h.b16 %v998
    %v2425 = vunpack.c.l.b16 %v999
    %v2426 = vunpack.c.h.b16 %v999
    %v2427 = vunpack.c.l.b16 %v1000
    %v2428 = vunpack.c.h.b16 %v1000
    %v2429 = vunpack.c.l.b16 %v1001
    %v2430 = vunpack.c.h.b16 %v1001
    %v2431 = vunpack.c.l.b16 %v1002
    %v2432 = vunpack.c.h.b16 %v1002
    %v2433 = vunpack.c.l.b16 %v1003
    %v2434 = vunpack.c.h.b16 %v1003
    %v2435 = vunpack.c.l.b16 %v1004
    %v2436 = vunpack.c.h.b16 %v1004
    %v2437 = vunpack.c.l.b16 %v1005
    %v2438 = vunpack.c.h.b16 %v1005
    %v2439 = vunpack.c.l.b16 %v1006
    %v2440 = vunpack.c.h.b16 %v1006
    %v2441 = vunpack.c.l.b16 %v1007
    %v2442 = vunpack.c.h.b16 %v1007
    %v2443 = vunpack.c.l.b16 %v1008
    %v2444 = vunpack.c.h.b16 %v1008
    %v2445 = vunpack.c.l.b16 %v1009
    %v2446 = vunpack.c.h.b16 %v1009
    %v2447 = vunpack.c.l.b16 %v1010
    %v2448 = vunpack.c.h.b16 %v1010
    %v2449 = vunpack.c.l.b16 %v1011
    %v2450 = vunpack.c.h.b16 %v1011
    %v2451 = vunpack.c.l.b16 %v1012
    %v2452 = vunpack.c.h.b16 %v1012
    %v2453 = vunpack.c.l.b16 %v1013
    %v2454 = vunpack.c.h.b16 %v1013
    %v2455 = vunpack.c.l.b16 %v1014
    %v2456 = vunpack.c.h.b16 %v1014
    %v2457 = vunpack.c.l.b16 %v1015
    %v2458 = vunpack.c.h.b16 %v1015
    %v2459 = vunpack.c.l.b16 %v1016
    %v2460 = vunpack.c.h.b16 %v1016
    %v2461 = vunpack.c.l.b16 %v1017
    %v2462 = vunpack.c.h.b16 %v1017
    %v2463 = vunpack.c.l.b16 %v1018
    %v2464 = vunpack.c.h.b16 %v1018
    %v2465 = vunpack.c.l.b16 %v1019
    %v2466 = vunpack.c.h.b16 %v1019
    %v2467 = vunpack.c.l.b16 %v1020
    %v2468 = vunpack.c.h.b16 %v1020
    %v2469 = vunpack.c.l.b16 %v1021
    %v2470 = vunpack.c.h.b16 %v1021
    %v2471 = vunpack.c.l.b16 %v1022
    %v2472 = vunpack.c.h.b16 %v1022
    %v2473 = vunpack.c.l.b16 %v1023
    %v2474 = vunpack.c.h.b16 %v1023
    %v2475 = vunpack.c.l.b16 %v1024
    %v2476 = vunpack.c.h.b16 %v1024
    %v2477 = vunpack.c.l.b16 %v1025
    %v2478 = vunpack.c.h.b16 %v1025
    %v2479 = vunpack.c.l.b16 %v1026
    %v2480 = vunpack.c.h.b16 %v1026
    %v2481 = vunpack.c.l.b16 %v1027
    %v2482 = vunpack.c.h.b16 %v1027
    %v2483 = vunpack.c.l.b16 %v1028
    %v2484 = vunpack.c.h.b16 %v1028
    %v2485 = vunpack.c.l.b16 %v1029
    %v2486 = vunpack.c.h.b16 %v1029
    %v2487 = vunpack.c.l.b16 %v1030
    %v2488 = vunpack.c.h.b16 %v1030
    %v2489 = vunpack.c.l.b16 %v1031
    %v2490 = vunpack.c.h.b16 %v1031
    %v2491 = vunpack.c.l.b16 %v1032
    %v2492 = vunpack.c.h.b16 %v1032
    %v2493 = vunpack.c.l.b16 %v1033
    %v2494 = vunpack.c.h.b16 %v1033
    %v2495 = vunpack.c.l.b16 %v1034
    %v2496 = vunpack.c.h.b16 %v1034
    %v2497 = vunpack.c.l.b16 %v1035
    %v2498 = vunpack.c.h.b16 %v1035
    %v2499 = vunpack.c.l.b16 %v1036
    %v2500 = vunpack.c.h.b16 %v1036
    %v2501 = vunpack.c.l.b16 %v1037
    %v2502 = vunpack.c.h.b16 %v1037
    %v2503 = vunpack.c.l.b16 %v1038
    %v2504 = vunpack.c.h.b16 %v1038
    %v2505 = vunpack.c.l.b16 %v1039
    %v2506 = vunpack.c.h.b16 %v1039
    %v2507 = vunpack.c.l.b16 %v1040
    %v2508 = vunpack.c.h.b16 %v1040
    %v2509 = vunpack.c.l.b16 %v1041
    %v2510 = vunpack.c.h.b16 %v1041
    %v2511 = vunpack.c.l.b16 %v1042
    %v2512 = vunpack.c.h.b16 %v1042
    %v2513 = vunpack.c.l.b16 %v1043
    %v2514 = vunpack.c.h.b16 %v1043
    %v2515 = vunpack.c.l.b16 %v1044
    %v2516 = vunpack.c.h.b16 %v1044
    %v2517 = vunpack.c.l.b16 %v1045
    %v2518 = vunpack.c.h.b16 %v1045
    %v2519 = vunpack.c.l.b16 %v1046
    %v2520 = vunpack.c.h.b16 %v1046
    %v2521 = vunpack.c.l.b16 %v1047
    %v2522 = vunpack.c.h.b16 %v1047
    %v2523 = vunpack.c.l.b16 %v1048
    %v2524 = vunpack.c.h.b16 %v1048
    %v2525 = vunpack.c.l.b16 %v1049
    %v2526 = vunpack.c.h.b16 %v1049
    %v2527 = vunpack.c.l.b16 %v1050
    %v2528 = vunpack.c.h.b16 %v1050
    %v2529 = vunpack.c.l.b16 %v1051
    %v2530 = vunpack.c.h.b16 %v1051
    %v2531 = vunpack.c.l.b16 %v1052
    %v2532 = vunpack.c.h.b16 %v1052
    %v2533 = vunpack.c.l.b16 %v1053
    %v2534 = vunpack.c.h.b16 %v1053
    %v2535 = vunpack.c.l.b16 %v1054
    %v2536 = vunpack.c.h.b16 %v1054
    %v2537 = vunpack.c.l.b16 %v1055
    %v2538 = vunpack.c.h.b16 %v1055
    %v2539 = vunpack.c.l.b16 %v1056
    %v2540 = vunpack.c.h.b16 %v1056
    %v2541 = vunpack.c.l.b16 %v1057
    %v2542 = vunpack.c.h.b16 %v1057
    %v2543 = vunpack.c.l.b16 %v1058
    %v2544 = vunpack.c.h.b16 %v1058
    %v2545 = vunpack.c.l.b16 %v1059
    %v2546 = vunpack.c.h.b16 %v1059
    %v2547 = vunpack.c.l.b16 %v1060
    %v2548 = vunpack.c.h.b16 %v1060
    %v2549 = vunpack.c.l.b16 %v1061
    %v2550 = vunpack.c.h.b16 %v1061
    %v2551 = vunpack.c.l.b16 %v1062
    %v2552 = vunpack.c.h.b16 %v1062
    %v2553 = vunpack.c.l.b16 %v1063
    %v2554 = vunpack.c.h.b16 %v1063
    %v2555 = vunpack.c.l.b16 %v1064
    %v2556 = vunpack.c.h.b16 %v1064
    %v2557 = vunpack.c.l.b16 %v1065
    %v2558 = vunpack.c.h.b16 %v1065
    %v2559 = vunpack.c.l.b16 %v1066
    %v2560 = vunpack.c.h.b16 %v1066
    %v2561 = vunpack.c.l.b16 %v1067
    %v2562 = vunpack.c.h.b16 %v1067
    %v2563 = vunpack.c.l.b16 %v1068
    %v2564 = vunpack.c.h.b16 %v1068
    %v2565 = vunpack.c.l.b16 %v1069
    %v2566 = vunpack.c.h.b16 %v1069
    %v2567 = vunpack.c.l.b16 %v1070
    %v2568 = vunpack.c.h.b16 %v1070
    %v2569 = vunpack.c.l.b16 %v1071
    %v2570 = vunpack.c.h.b16 %v1071
    %v2571 = vunpack.c.l.b16 %v1072
    %v2572 = vunpack.c.h.b16 %v1072
    %v2573 = vunpack.c.l.b16 %v1073
    %v2574 = vunpack.c.h.b16 %v1073
    %v2575 = vunpack.c.l.b16 %v1074
    %v2576 = vunpack.c.h.b16 %v1074
    %v2577 = vunpack.c.l.b16 %v1075
    %v2578 = vunpack.c.h.b16 %v1075
    %v2579 = vunpack.c.l.b16 %v1076
    %v2580 = vunpack.c.h.b16 %v1076
    %v2581 = vunpack.c.l.b16 %v1077
    %v2582 = vunpack.c.h.b16 %v1077
    %v2583 = vunpack.c.l.b16 %v1078
    %v2584 = vunpack.c.h.b16 %v1078
    %v2585 = vunpack.c.l.b16 %v1079
    %v2586 = vunpack.c.h.b16 %v1079
    %v2587 = vunpack.c.l.b16 %v1080
    %v2588 = vunpack.c.h.b16 %v1080
    %v2589 = vunpack.c.l.b16 %v1081
    %v2590 = vunpack.c.h.b16 %v1081
    %v2591 = vunpack.c.l.b16 %v1082
    %v2592 = vunpack.c.h.b16 %v1082
    %v2593 = vunpack.c.l.b16 %v1083
    %v2594 = vunpack.c.h.b16 %v1083
    %v2595 = vunpack.c.l.b16 %v1084
    %v2596 = vunpack.c.h.b16 %v1084
    %v2597 = vunpack.c.l.b16 %v1085
    %v2598 = vunpack.c.h.b16 %v1085
    %v2599 = vunpack.c.l.b16 %v1086
    %v2600 = vunpack.c.h.b16 %v1086
    %v2601 = vunpack.c.l.b16 %v1087
    %v2602 = vunpack.c.h.b16 %v1087
    %v2603 = vunpack.c.l.b16 %v1088
    %v2604 = vunpack.c.h.b16 %v1088
    %v2605 = vunpack.c.l.b16 %v1089
    %v2606 = vunpack.c.h.b16 %v1089
    %v2607 = vunpack.c.l.b16 %v1090
    %v2608 = vunpack.c.h.b16 %v1090
    %v2609 = vunpack.c.l.b16 %v1091
    %v2610 = vunpack.c.h.b16 %v1091
    %v2611 = vunpack.c.l.b16 %v1092
    %v2612 = vunpack.c.h.b16 %v1092
    %v2613 = vunpack.c.l.b16 %v1093
    %v2614 = vunpack.c.h.b16 %v1093
    %v2615 = vunpack.c.l.b16 %v1094
    %v2616 = vunpack.c.h.b16 %v1094
    %v2617 = vunpack.c.l.b16 %v1095
    %v2618 = vunpack.c.h.b16 %v1095
    %v2619 = vunpack.c.l.b16 %v1096
    %v2620 = vunpack.c.h.b16 %v1096
    %v2621 = vunpack.c.l.b16 %v1097
    %v2622 = vunpack.c.h.b16 %v1097
    %v2623 = vunpack.c.l.b16 %v1098
    %v2624 = vunpack.c.h.b16 %v1098
    %v2625 = vunpack.c.l.b16 %v1099
    %v2626 = vunpack.c.h.b16 %v1099
    %v2627 = vunpack.c.l.b16 %v1100
    %v2628 = vunpack.c.h.b16 %v1100
    %v2629 = vunpack.c.l.b16 %v1101
    %v2630 = vunpack.c.h.b16 %v1101
    %v2631 = vunpack.c.l.b16 %v1102
    %v2632 = vunpack.c.h.b16 %v1102
    %v2633 = vunpack.c.l.b16 %v1103
    %v2634 = vunpack.c.h.b16 %v1103
    %v2635 = vunpack.c.l.b16 %v1104
    %v2636 = vunpack.c.h.b16 %v1104
    %v2637 = vunpack.c.l.b16 %v1105
    %v2638 = vunpack.c.h.b16 %v1105
    %v2639 = vunpack.c.l.b16 %v1106
    %v2640 = vunpack.c.h.b16 %v1106
    %v2641 = vunpack.c.l.b16 %v1107
    %v2642 = vunpack.c.h.b16 %v1107
    %v2643 = vunpack.c.l.b16 %v1108
    %v2644 = vunpack.c.h.b16 %v1108
    %v2645 = vunpack.c.l.b16 %v1109
    %v2646 = vunpack.c.h.b16 %v1109
    %v2647 = vunpack.c.l.b16 %v1110
    %v2648 = vunpack.c.h.b16 %v1110
    %v2649 = vunpack.c.l.b16 %v1111
    %v2650 = vunpack.c.h.b16 %v1111
    %v2651 = vunpack.c.l.b16 %v1112
    %v2652 = vunpack.c.h.b16 %v1112
    %v2653 = vunpack.c.l.b16 %v1113
    %v2654 = vunpack.c.h.b16 %v1113
    %v2655 = vunpack.c.l.b16 %v1114
    %v2656 = vunpack.c.h.b16 %v1114
    %v2657 = vunpack.c.l.b16 %v1115
    %v2658 = vunpack.c.h.b16 %v1115
    %v2659 = vunpack.c.l.b16 %v1116
    %v2660 = vunpack.c.h.b16 %v1116
    %v2661 = vunpack.c.l.b16 %v1117
    %v2662 = vunpack.c.h.b16 %v1117
    %v2663 = vunpack.c.l.b16 %v1118
    %v2664 = vunpack.c.h.b16 %v1118
    %v2665 = vunpack.c.l.b16 %v1119
    %v2666 = vunpack.c.h.b16 %v1119
    %v2667 = vunpack.c.l.b16 %v1120
    %v2668 = vunpack.c.h.b16 %v1120
    %v2669 = vunpack.c.l.b16 %v1121
    %v2670 = vunpack.c.h.b16 %v1121
    %v2671 = vunpack.c.l.b16 %v1122
    %v2672 = vunpack.c.h.b16 %v1122
    %v2673 = vunpack.c.l.b16 %v1123
    %v2674 = vunpack.c.h.b16 %v1123
    %v2675 = vunpack.c.l.b16 %v1124
    %v2676 = vunpack.c.h.b16 %v1124
    %v2677 = vunpack.c.l.b16 %v1125
    %v2678 = vunpack.c.h.b16 %v1125
    %v2679 = vunpack.c.l.b16 %v1126
    %v2680 = vunpack.c.h.b16 %v1126
    %v2681 = vpack.c.b16 %v1665, %v1657
    %v2682 = vpack.c.b16 %v1666, %v1658
    %v2683 = vpack.c.b16 %v1667, %v1659
    %v2684 = vpack.c.b16 %v1668, %v1660
    %v2685 = vpack.c.b16 %v1669, %v1661
    %v2686 = vpack.c.b16 %v1670, %v1662
    %v2687 = vpack.c.b16 %v1671, %v1663
    %v2688 = vpack.c.b16 %v1672, %v1664
    %v2689 = vpack.c.b16 %v1681, %v1673
    %v2690 = vpack.c.b16 %v1682, %v1674
    %v2691 = vpack.c.b16 %v1683, %v1675
    %v2692 = vpack.c.b16 %v1684, %v1676
    %v2693 = vpack.c.b16 %v1685, %v1677
    %v2694 = vpack.c.b16 %v1686, %v1678
    %v2695 = vpack.c.b16 %v1687, %v1679
    %v2696 = vpack.c.b16 %v1688, %v1680
    %v2697 = vpack.c.b16 %v1697, %v1689
    %v2698 = vpack.c.b16 %v1698, %v1690
    %v2699 = vpack.c.b16 %v1699, %v1691
    %v2700 = vpack.c.b16 %v1700, %v1692
    %v2701 = vpack.c.b16 %v1701, %v1693
    %v2702 = vpack.c.b16 %v1702, %v1694
    %v2703 = vpack.c.b16 %v1703, %v1695
    %v2704 = vpack.c.b16 %v1704, %v1696
    %v2705 = vpack.c.b16 %v1713, %v1705
    %v2706 = vpack.c.b16 %v1714, %v1706
    %v2707 = vpack.c.b16 %v1715, %v1707
    %v2708 = vpack.c.b16 %v1716, %v1708
    %v2709 = vpack.c.b16 %v1717, %v1709
    %v2710 = vpack.c.b16 %v1718, %v1710
    %v2711 = vpack.c.b16 %v1719, %v1711
    %v2712 = vpack.c.b16 %v1720, %v1712
    %v2713 = vpack.c.b16 %v1729, %v1721
    %v2714 = vpack.c.b16 %v1730, %v1722
    %v2715 = vpack.c.b16 %v1731, %v1723
    %v2716 = vpack.c.b16 %v1732, %v1724
    %v2717 = vpack.c.b16 %v1733, %v1725
    %v2718 = vpack.c.b16 %v1734, %v1726
    %v2719 = vpack.c.b16 %v1735, %v1727
    %v2720 = vpack.c.b16 %v1736, %v1728
    %v2721 = vpack.c.b16 %v1745, %v1737
    %v2722 = vpack.c.b16 %v1746, %v1738
    %v2723 = vpack.c.b16 %v1747, %v1739
    %v2724 = vpack.c.b16 %v1748, %v1740
    %v2725 = vpack.c.b16 %v1749, %v1741
    %v2726 = vpack.c.b16 %v1750, %v1742
    %v2727 = vpack.c.b16 %v1751, %v1743
    %v2728 = vpack.c.b16 %v1752, %v1744
    %v2729 = vpack.c.b16 %v1761, %v1753
    %v2730 = vpack.c.b16 %v1762, %v1754
    %v2731 = vpack.c.b16 %v1763, %v1755
    %v2732 = vpack.c.b16 %v1764, %v1756
    %v2733 = vpack.c.b16 %v1765, %v1757
    %v2734 = vpack.c.b16 %v1766, %v1758
    %v2735 = vpack.c.b16 %v1767, %v1759
    %v2736 = vpack.c.b16 %v1768, %v1760
    %v2737 = vpack.c.b16 %v1777, %v1769
    %v2738 = vpack.c.b16 %v1778, %v1770
    %v2739 = vpack.c.b16 %v1779, %v1771
    %v2740 = vpack.c.b16 %v1780, %v1772
    %v2741 = vpack.c.b16 %v1781, %v1773
    %v2742 = vpack.c.b16 %v1782, %v1774
    %v2743 = vpack.c.b16 %v1783, %v1775
    %v2744 = vpack.c.b16 %v1784, %v1776
    %v2745 = vpack.c.b16 %v1793, %v1785
    %v2746 = vpack.c.b16 %v1794, %v1786
    %v2747 = vpack.c.b16 %v1795, %v1787
    %v2748 = vpack.c.b16 %v1796, %v1788
    %v2749 = vpack.c.b16 %v1797, %v1789
    %v2750 = vpack.c.b16 %v1798, %v1790
    %v2751 = vpack.c.b16 %v1799, %v1791
    %v2752 = vpack.c.b16 %v1800, %v1792
    %v2753 = vpack.c.b16 %v1809, %v1801
    %v2754 = vpack.c.b16 %v1810, %v1802
    %v2755 = vpack.c.b16 %v1811, %v1803
    %v2756 = vpack.c.b16 %v1812, %v1804
    %v2757 = vpack.c.b16 %v1813, %v1805
    %v2758 = vpack.c.b16 %v1814, %v1806
    %v2759 = vpack.c.b16 %v1815, %v1807
    %v2760 = vpack.c.b16 %v1816, %v1808
    %v2761 = vpack.c.b16 %v1825, %v1817
    %v2762 = vpack.c.b16 %v1826, %v1818
    %v2763 = vpack.c.b16 %v1827, %v1819
    %v2764 = vpack.c.b16 %v1828, %v1820
    %v2765 = vpack.c.b16 %v1829, %v1821
    %v2766 = vpack.c.b16 %v1830, %v1822
    %v2767 = vpack.c.b16 %v1831, %v1823
    %v2768 = vpack.c.b16 %v1832, %v1824
    %v2769 = vpack.c.b16 %v1841, %v1833
    %v2770 = vpack.c.b16 %v1842, %v1834
    %v2771 = vpack.c.b16 %v1843, %v1835
    %v2772 = vpack.c.b16 %v1844, %v1836
    %v2773 = vpack.c.b16 %v1845, %v1837
    %v2774 = vpack.c.b16 %v1846, %v1838
    %v2775 = vpack.c.b16 %v1847, %v1839
    %v2776 = vpack.c.b16 %v1848, %v1840
    %v2777 = vpack.c.b16 %v1857, %v1849
    %v2778 = vpack.c.b16 %v1858, %v1850
    %v2779 = vpack.c.b16 %v1859, %v1851
    %v2780 = vpack.c.b16 %v1860, %v1852
    %v2781 = vpack.c.b16 %v1861, %v1853
    %v2782 = vpack.c.b16 %v1862, %v1854
    %v2783 = vpack.c.b16 %v1863, %v1855
    %v2784 = vpack.c.b16 %v1864, %v1856
    %v2785 = vpack.c.b16 %v1873, %v1865
    %v2786 = vpack.c.b16 %v1874, %v1866
    %v2787 = vpack.c.b16 %v1875, %v1867
    %v2788 = vpack.c.b16 %v1876, %v1868
    %v2789 = vpack.c.b16 %v1877, %v1869
    %v2790 = vpack.c.b16 %v1878, %v1870
    %v2791 = vpack.c.b16 %v1879, %v1871
    %v2792 = vpack.c.b16 %v1880, %v1872
    %v2793 = vpack.c.b16 %v1889, %v1881
    %v2794 = vpack.c.b16 %v1890, %v1882
    %v2795 = vpack.c.b16 %v1891, %v1883
    %v2796 = vpack.c.b16 %v1892, %v1884
    %v2797 = vpack.c.b16 %v1893, %v1885
    %v2798 = vpack.c.b16 %v1894, %v1886
    %v2799 = vpack.c.b16 %v1895, %v1887
    %v2800 = vpack.c.b16 %v1896, %v1888
    %v2801 = vpack.c.b16 %v1905, %v1897
    %v2802 = vpack.c.b16 %v1906, %v1898
    %v2803 = vpack.c.b16 %v1907, %v1899
    %v2804 = vpack.c.b16 %v1908, %v1900
    %v2805 = vpack.c.b16 %v1909, %v1901
    %v2806 = vpack.c.b16 %v1910, %v1902
    %v2807 = vpack.c.b16 %v1911, %v1903
    %v2808 = vpack.c.b16 %v1912, %v1904
    %v2809 = vpack.c.b16 %v1921, %v1913
    %v2810 = vpack.c.b16 %v1922, %v1914
    %v2811 = vpack.c.b16 %v1923, %v1915
    %v2812 = vpack.c.b16 %v1924, %v1916
    %v2813 = vpack.c.b16 %v1925, %v1917
    %v2814 = vpack.c.b16 %v1926, %v1918
    %v2815 = vpack.c.b16 %v1927, %v1919
    %v2816 = vpack.c.b16 %v1928, %v1920
    %v2817 = vpack.c.b16 %v1937, %v1929
    %v2818 = vpack.c.b16 %v1938, %v1930
    %v2819 = vpack.c.b16 %v1939, %v1931
    %v2820 = vpack.c.b16 %v1940, %v1932
    %v2821 = vpack.c.b16 %v1941, %v1933
    %v2822 = vpack.c.b16 %v1942, %v1934
    %v2823 = vpack.c.b16 %v1943, %v1935
    %v2824 = vpack.c.b16 %v1944, %v1936
    %v2825 = vpack.c.b16 %v1953, %v1945
    %v2826 = vpack.c.b16 %v1954, %v1946
    %v2827 = vpack.c.b16 %v1955, %v1947
    %v2828 = vpack.c.b16 %v1956, %v1948
    %v2829 = vpack.c.b16 %v1957, %v1949
    %v2830 = vpack.c.b16 %v1958, %v1950
    %v2831 = vpack.c.b16 %v1959, %v1951
    %v2832 = vpack.c.b16 %v1960, %v1952
    %v2833 = vpack.c.b16 %v1969, %v1961
    %v2834 = vpack.c.b16 %v1970, %v1962
    %v2835 = vpack.c.b16 %v1971, %v1963
    %v2836 = vpack.c.b16 %v1972, %v1964
    %v2837 = vpack.c.b16 %v1973, %v1965
    %v2838 = vpack.c.b16 %v1974, %v1966
    %v2839 = vpack.c.b16 %v1975, %v1967
    %v2840 = vpack.c.b16 %v1976, %v1968
    %v2841 = vpack.c.b16 %v1985, %v1977
    %v2842 = vpack.c.b16 %v1986, %v1978
    %v2843 = vpack.c.b16 %v1987, %v1979
    %v2844 = vpack.c.b16 %v1988, %v1980
    %v2845 = vpack.c.b16 %v1989, %v1981
    %v2846 = vpack.c.b16 %v1990, %v1982
    %v2847 = vpack.c.b16 %v1991, %v1983
    %v2848 = vpack.c.b16 %v1992, %v1984
    %v2849 = vpack.c.b16 %v2001, %v1993
    %v2850 = vpack.c.b16 %v2002, %v1994
    %v2851 = vpack.c.b16 %v2003, %v1995
    %v2852 = vpack.c.b16 %v2004, %v1996
    %v2853 = vpack.c.b16 %v2005, %v1997
    %v2854 = vpack.c.b16 %v2006, %v1998
    %v2855 = vpack.c.b16 %v2007, %v1999
    %v2856 = vpack.c.b16 %v2008, %v2000
    %v2857 = vpack.c.b16 %v2017, %v2009
    %v2858 = vpack.c.b16 %v2018, %v2010
    %v2859 = vpack.c.b16 %v2019, %v2011
    %v2860 = vpack.c.b16 %v2020, %v2012
    %v2861 = vpack.c.b16 %v2021, %v2013
    %v2862 = vpack.c.b16 %v2022, %v2014
    %v2863 = vpack.c.b16 %v2023, %v2015
    %v2864 = vpack.c.b16 %v2024, %v2016
    %v2865 = vpack.c.b16 %v2033, %v2025
    %v2866 = vpack.c.b16 %v2034, %v2026
    %v2867 = vpack.c.b16 %v2035, %v2027
    %v2868 = vpack.c.b16 %v2036, %v2028
    %v2869 = vpack.c.b16 %v2037, %v2029
    %v2870 = vpack.c.b16 %v2038, %v2030
    %v2871 = vpack.c.b16 %v2039, %v2031
    %v2872 = vpack.c.b16 %v2040, %v2032
    %v2873 = vpack.c.b16 %v2049, %v2041
    %v2874 = vpack.c.b16 %v2050, %v2042
    %v2875 = vpack.c.b16 %v2051, %v2043
    %v2876 = vpack.c.b16 %v2052, %v2044
    %v2877 = vpack.c.b16 %v2053, %v2045
    %v2878 = vpack.c.b16 %v2054, %v2046
    %v2879 = vpack.c.b16 %v2055, %v2047
    %v2880 = vpack.c.b16 %v2056, %v2048
    %v2881 = vpack.c.b16 %v2065, %v2057
    %v2882 = vpack.c.b16 %v2066, %v2058
    %v2883 = vpack.c.b16 %v2067, %v2059
    %v2884 = vpack.c.b16 %v2068, %v2060
    %v2885 = vpack.c.b16 %v2069, %v2061
    %v2886 = vpack.c.b16 %v2070, %v2062
    %v2887 = vpack.c.b16 %v2071, %v2063
    %v2888 = vpack.c.b16 %v2072, %v2064
    %v2889 = vpack.c.b16 %v2081, %v2073
    %v2890 = vpack.c.b16 %v2082, %v2074
    %v2891 = vpack.c.b16 %v2083, %v2075
    %v2892 = vpack.c.b16 %v2084, %v2076
    %v2893 = vpack.c.b16 %v2085, %v2077
    %v2894 = vpack.c.b16 %v2086, %v2078
    %v2895 = vpack.c.b16 %v2087, %v2079
    %v2896 = vpack.c.b16 %v2088, %v2080
    %v2897 = vpack.c.b16 %v2097, %v2089
    %v2898 = vpack.c.b16 %v2098, %v2090
    %v2899 = vpack.c.b16 %v2099, %v2091
    %v2900 = vpack.c.b16 %v2100, %v2092
    %v2901 = vpack.c.b16 %v2101, %v2093
    %v2902 = vpack.c.b16 %v2102, %v2094
    %v2903 = vpack.c.b16 %v2103, %v2095
    %v2904 = vpack.c.b16 %v2104, %v2096
    %v2905 = vpack.c.b16 %v2113, %v2105
    %v2906 = vpack.c.b16 %v2114, %v2106
    %v2907 = vpack.c.b16 %v2115, %v2107
    %v2908 = vpack.c.b16 %v2116, %v2108
    %v2909 = vpack.c.b16 %v2117, %v2109
    %v2910 = vpack.c.b16 %v2118, %v2110
    %v2911 = vpack.c.b16 %v2119, %v2111
    %v2912 = vpack.c.b16 %v2120, %v2112
    %v2913 = vpack.c.b16 %v2129, %v2121
    %v2914 = vpack.c.b16 %v2130, %v2122
    %v2915 = vpack.c.b16 %v2131, %v2123
    %v2916 = vpack.c.b16 %v2132, %v2124
    %v2917 = vpack.c.b16 %v2133, %v2125
    %v2918 = vpack.c.b16 %v2134, %v2126
    %v2919 = vpack.c.b16 %v2135, %v2127
    %v2920 = vpack.c.b16 %v2136, %v2128
    %v2921 = vpack.c.b16 %v2145, %v2137
    %v2922 = vpack.c.b16 %v2146, %v2138
    %v2923 = vpack.c.b16 %v2147, %v2139
    %v2924 = vpack.c.b16 %v2148, %v2140
    %v2925 = vpack.c.b16 %v2149, %v2141
    %v2926 = vpack.c.b16 %v2150, %v2142
    %v2927 = vpack.c.b16 %v2151, %v2143
    %v2928 = vpack.c.b16 %v2152, %v2144
    %v2929 = vpack.c.b16 %v2161, %v2153
    %v2930 = vpack.c.b16 %v2162, %v2154
    %v2931 = vpack.c.b16 %v2163, %v2155
    %v2932 = vpack.c.b16 %v2164, %v2156
    %v2933 = vpack.c.b16 %v2165, %v2157
    %v2934 = vpack.c.b16 %v2166, %v2158
    %v2935 = vpack.c.b16 %v2167, %v2159
    %v2936 = vpack.c.b16 %v2168, %v2160
    %v2937 = vpack.c.b16 %v2177, %v2169
    %v2938 = vpack.c.b16 %v2178, %v2170
    %v2939 = vpack.c.b16 %v2179, %v2171
    %v2940 = vpack.c.b16 %v2180, %v2172
    %v2941 = vpack.c.b16 %v2181, %v2173
    %v2942 = vpack.c.b16 %v2182, %v2174
    %v2943 = vpack.c.b16 %v2183, %v2175
    %v2944 = vpack.c.b16 %v2184, %v2176
    %v2945 = vpack.c.b16 %v2193, %v2185
    %v2946 = vpack.c.b16 %v2194, %v2186
    %v2947 = vpack.c.b16 %v2195, %v2187
    %v2948 = vpack.c.b16 %v2196, %v2188
    %v2949 = vpack.c.b16 %v2197, %v2189
    %v2950 = vpack.c.b16 %v2198, %v2190
    %v2951 = vpack.c.b16 %v2199, %v2191
    %v2952 = vpack.c.b16 %v2200, %v2192
    %v2953 = vpack.c.b16 %v2209, %v2201
    %v2954 = vpack.c.b16 %v2210, %v2202
    %v2955 = vpack.c.b16 %v2211, %v2203
    %v2956 = vpack.c.b16 %v2212, %v2204
    %v2957 = vpack.c.b16 %v2213, %v2205
    %v2958 = vpack.c.b16 %v2214, %v2206
    %v2959 = vpack.c.b16 %v2215, %v2207
    %v2960 = vpack.c.b16 %v2216, %v2208
    %v2961 = vpack.c.b16 %v2225, %v2217
    %v2962 = vpack.c.b16 %v2226, %v2218
    %v2963 = vpack.c.b16 %v2227, %v2219
    %v2964 = vpack.c.b16 %v2228, %v2220
    %v2965 = vpack.c.b16 %v2229, %v2221
    %v2966 = vpack.c.b16 %v2230, %v2222
    %v2967 = vpack.c.b16 %v2231, %v2223
    %v2968 = vpack.c.b16 %v2232, %v2224
    %v2969 = vpack.c.b16 %v2241, %v2233
    %v2970 = vpack.c.b16 %v2242, %v2234
    %v2971 = vpack.c.b16 %v2243, %v2235
    %v2972 = vpack.c.b16 %v2244, %v2236
    %v2973 = vpack.c.b16 %v2245, %v2237
    %v2974 = vpack.c.b16 %v2246, %v2238
    %v2975 = vpack.c.b16 %v2247, %v2239
    %v2976 = vpack.c.b16 %v2248, %v2240
    %v2977 = vpack.c.b16 %v2257, %v2249
    %v2978 = vpack.c.b16 %v2258, %v2250
    %v2979 = vpack.c.b16 %v2259, %v2251
    %v2980 = vpack.c.b16 %v2260, %v2252
    %v2981 = vpack.c.b16 %v2261, %v2253
    %v2982 = vpack.c.b16 %v2262, %v2254
    %v2983 = vpack.c.b16 %v2263, %v2255
    %v2984 = vpack.c.b16 %v2264, %v2256
    %v2985 = vpack.c.b16 %v2273, %v2265
    %v2986 = vpack.c.b16 %v2274, %v2266
    %v2987 = vpack.c.b16 %v2275, %v2267
    %v2988 = vpack.c.b16 %v2276, %v2268
    %v2989 = vpack.c.b16 %v2277, %v2269
    %v2990 = vpack.c.b16 %v2278, %v2270
    %v2991 = vpack.c.b16 %v2279, %v2271
    %v2992 = vpack.c.b16 %v2280, %v2272
    %v2993 = vpack.c.b16 %v2289, %v2281
    %v2994 = vpack.c.b16 %v2290, %v2282
    %v2995 = vpack.c.b16 %v2291, %v2283
    %v2996 = vpack.c.b16 %v2292, %v2284
    %v2997 = vpack.c.b16 %v2293, %v2285
    %v2998 = vpack.c.b16 %v2294, %v2286
    %v2999 = vpack.c.b16 %v2295, %v2287
    %v3000 = vpack.c.b16 %v2296, %v2288
    %v3001 = vpack.c.b16 %v2305, %v2297
    %v3002 = vpack.c.b16 %v2306, %v2298
    %v3003 = vpack.c.b16 %v2307, %v2299
    %v3004 = vpack.c.b16 %v2308, %v2300
    %v3005 = vpack.c.b16 %v2309, %v2301
    %v3006 = vpack.c.b16 %v2310, %v2302
    %v3007 = vpack.c.b16 %v2311, %v2303
    %v3008 = vpack.c.b16 %v2312, %v2304
    %v3009 = vpack.c.b16 %v2321, %v2313
    %v3010 = vpack.c.b16 %v2322, %v2314
    %v3011 = vpack.c.b16 %v2323, %v2315
    %v3012 = vpack.c.b16 %v2324, %v2316
    %v3013 = vpack.c.b16 %v2325, %v2317
    %v3014 = vpack.c.b16 %v2326, %v2318
    %v3015 = vpack.c.b16 %v2327, %v2319
    %v3016 = vpack.c.b16 %v2328, %v2320
    %v3017 = vpack.c.b16 %v2337, %v2329
    %v3018 = vpack.c.b16 %v2338, %v2330
    %v3019 = vpack.c.b16 %v2339, %v2331
    %v3020 = vpack.c.b16 %v2340, %v2332
    %v3021 = vpack.c.b16 %v2341, %v2333
    %v3022 = vpack.c.b16 %v2342, %v2334
    %v3023 = vpack.c.b16 %v2343, %v2335
    %v3024 = vpack.c.b16 %v2344, %v2336
    %v3025 = vpack.c.b16 %v2353, %v2345
    %v3026 = vpack.c.b16 %v2354, %v2346
    %v3027 = vpack.c.b16 %v2355, %v2347
    %v3028 = vpack.c.b16 %v2356, %v2348
    %v3029 = vpack.c.b16 %v2357, %v2349
    %v3030 = vpack.c.b16 %v2358, %v2350
    %v3031 = vpack.c.b16 %v2359, %v2351
    %v3032 = vpack.c.b16 %v2360, %v2352
    %v3033 = vpack.c.b16 %v2369, %v2361
    %v3034 = vpack.c.b16 %v2370, %v2362
    %v3035 = vpack.c.b16 %v2371, %v2363
    %v3036 = vpack.c.b16 %v2372, %v2364
    %v3037 = vpack.c.b16 %v2373, %v2365
    %v3038 = vpack.c.b16 %v2374, %v2366
    %v3039 = vpack.c.b16 %v2375, %v2367
    %v3040 = vpack.c.b16 %v2376, %v2368
    %v3041 = vpack.c.b16 %v2385, %v2377
    %v3042 = vpack.c.b16 %v2386, %v2378
    %v3043 = vpack.c.b16 %v2387, %v2379
    %v3044 = vpack.c.b16 %v2388, %v2380
    %v3045 = vpack.c.b16 %v2389, %v2381
    %v3046 = vpack.c.b16 %v2390, %v2382
    %v3047 = vpack.c.b16 %v2391, %v2383
    %v3048 = vpack.c.b16 %v2392, %v2384
    %v3049 = vpack.c.b16 %v2401, %v2393
    %v3050 = vpack.c.b16 %v2402, %v2394
    %v3051 = vpack.c.b16 %v2403, %v2395
    %v3052 = vpack.c.b16 %v2404, %v2396
    %v3053 = vpack.c.b16 %v2405, %v2397
    %v3054 = vpack.c.b16 %v2406, %v2398
    %v3055 = vpack.c.b16 %v2407, %v2399
    %v3056 = vpack.c.b16 %v2408, %v2400
    %v3057 = vpack.c.b16 %v2417, %v2409
    %v3058 = vpack.c.b16 %v2418, %v2410
    %v3059 = vpack.c.b16 %v2419, %v2411
    %v3060 = vpack.c.b16 %v2420, %v2412
    %v3061 = vpack.c.b16 %v2421, %v2413
    %v3062 = vpack.c.b16 %v2422, %v2414
    %v3063 = vpack.c.b16 %v2423, %v2415
    %v3064 = vpack.c.b16 %v2424, %v2416
    %v3065 = vpack.c.b16 %v2433, %v2425
    %v3066 = vpack.c.b16 %v2434, %v2426
    %v3067 = vpack.c.b16 %v2435, %v2427
    %v3068 = vpack.c.b16 %v2436, %v2428
    %v3069 = vpack.c.b16 %v2437, %v2429
    %v3070 = vpack.c.b16 %v2438, %v2430
    %v3071 = vpack.c.b16 %v2439, %v2431
    %v3072 = vpack.c.b16 %v2440, %v2432
    %v3073 = vpack.c.b16 %v2449, %v2441
    %v3074 = vpack.c.b16 %v2450, %v2442
    %v3075 = vpack.c.b16 %v2451, %v2443
    %v3076 = vpack.c.b16 %v2452, %v2444
    %v3077 = vpack.c.b16 %v2453, %v2445
    %v3078 = vpack.c.b16 %v2454, %v2446
    %v3079 = vpack.c.b16 %v2455, %v2447
    %v3080 = vpack.c.b16 %v2456, %v2448
    %v3081 = vpack.c.b16 %v2465, %v2457
    %v3082 = vpack.c.b16 %v2466, %v2458
    %v3083 = vpack.c.b16 %v2467, %v2459
    %v3084 = vpack.c.b16 %v2468, %v2460
    %v3085 = vpack.c.b16 %v2469, %v2461
    %v3086 = vpack.c.b16 %v2470, %v2462
    %v3087 = vpack.c.b16 %v2471, %v2463
    %v3088 = vpack.c.b16 %v2472, %v2464
    %v3089 = vpack.c.b16 %v2481, %v2473
    %v3090 = vpack.c.b16 %v2482, %v2474
    %v3091 = vpack.c.b16 %v2483, %v2475
    %v3092 = vpack.c.b16 %v2484, %v2476
    %v3093 = vpack.c.b16 %v2485, %v2477
    %v3094 = vpack.c.b16 %v2486, %v2478
    %v3095 = vpack.c.b16 %v2487, %v2479
    %v3096 = vpack.c.b16 %v2488, %v2480
    %v3097 = vpack.c.b16 %v2497, %v2489
    %v3098 = vpack.c.b16 %v2498, %v2490
    %v3099 = vpack.c.b16 %v2499, %v2491
    %v3100 = vpack.c.b16 %v2500, %v2492
    %v3101 = vpack.c.b16 %v2501, %v2493
    %v3102 = vpack.c.b16 %v2502, %v2494
    %v3103 = vpack.c.b16 %v2503, %v2495
    %v3104 = vpack.c.b16 %v2504, %v2496
    %v3105 = vpack.c.b16 %v2513, %v2505
    %v3106 = vpack.c.b16 %v2514, %v2506
    %v3107 = vpack.c.b16 %v2515, %v2507
    %v3108 = vpack.c.b16 %v2516, %v2508
    %v3109 = vpack.c.b16 %v2517, %v2509
    %v3110 = vpack.c.b16 %v2518, %v2510
    %v3111 = vpack.c.b16 %v2519, %v2511
    %v3112 = vpack.c.b16 %v2520, %v2512
    %v3113 = vpack.c.b16 %v2529, %v2521
    %v3114 = vpack.c.b16 %v2530, %v2522
    %v3115 = vpack.c.b16 %v2531, %v2523
    %v3116 = vpack.c.b16 %v2532, %v2524
    %v3117 = vpack.c.b16 %v2533, %v2525
    %v3118 = vpack.c.b16 %v2534, %v2526
    %v3119 = vpack.c.b16 %v2535, %v2527
    %v3120 = vpack.c.b16 %v2536, %v2528
    %v3121 = vpack.c.b16 %v2545, %v2537
    %v3122 = vpack.c.b16 %v2546, %v2538
    %v3123 = vpack.c.b16 %v2547, %v2539
    %v3124 = vpack.c.b16 %v2548, %v2540
    %v3125 = vpack.c.b16 %v2549, %v2541
    %v3126 = vpack.c.b16 %v2550, %v2542
    %v3127 = vpack.c.b16 %v2551, %v2543
    %v3128 = vpack.c.b16 %v2552, %v2544
    %v3129 = vpack.c.b16 %v2561, %v2553
    %v3130 = vpack.c.b16 %v2562, %v2554
    %v3131 = vpack.c.b16 %v2563, %v2555
    %v3132 = vpack.c.b16 %v2564, %v2556
    %v3133 = vpack.c.b16 %v2565, %v2557
    %v3134 = vpack.c.b16 %v2566, %v2558
    %v3135 = vpack.c.b16 %v2567, %v2559
    %v3136 = vpack.c.b16 %v2568, %v2560
    %v3137 = vpack.c.b16 %v2577, %v2569
    %v3138 = vpack.c.b16 %v2578, %v2570
    %v3139 = vpack.c.b16 %v2579, %v2571
    %v3140 = vpack.c.b16 %v2580, %v2572
    %v3141 = vpack.c.b16 %v2581, %v2573
    %v3142 = vpack.c.b16 %v2582, %v2574
    %v3143 = vpack.c.b16 %v2583, %v2575
    %v3144 = vpack.c.b16 %v2584, %v2576
    %v3145 = vpack.c.b16 %v2593, %v2585
    %v3146 = vpack.c.b16 %v2594, %v2586
    %v3147 = vpack.c.b16 %v2595, %v2587
    %v3148 = vpack.c.b16 %v2596, %v2588
    %v3149 = vpack.c.b16 %v2597, %v2589
    %v3150 = vpack.c.b16 %v2598, %v2590
    %v3151 = vpack.c.b16 %v2599, %v2591
    %v3152 = vpack.c.b16 %v2600, %v2592
    %v3153 = vpack.c.b16 %v2609, %v2601
    %v3154 = vpack.c.b16 %v2610, %v2602
    %v3155 = vpack.c.b16 %v2611, %v2603
    %v3156 = vpack.c.b16 %v2612, %v2604
    %v3157 = vpack.c.b16 %v2613, %v2605
    %v3158 = vpack.c.b16 %v2614, %v2606
    %v3159 = vpack.c.b16 %v2615, %v2607
    %v3160 = vpack.c.b16 %v2616, %v2608
    %v3161 = vpack.c.b16 %v2625, %v2617
    %v3162 = vpack.c.b16 %v2626, %v2618
    %v3163 = vpack.c.b16 %v2627, %v2619
    %v3164 = vpack.c.b16 %v2628, %v2620
    %v3165 = vpack.c.b16 %v2629, %v2621
    %v3166 = vpack.c.b16 %v2630, %v2622
    %v3167 = vpack.c.b16 %v2631, %v2623
    %v3168 = vpack.c.b16 %v2632, %v2624
    %v3169 = vpack.c.b16 %v2641, %v2633
    %v3170 = vpack.c.b16 %v2642, %v2634
    %v3171 = vpack.c.b16 %v2643, %v2635
    %v3172 = vpack.c.b16 %v2644, %v2636
    %v3173 = vpack.c.b16 %v2645, %v2637
    %v3174 = vpack.c.b16 %v2646, %v2638
    %v3175 = vpack.c.b16 %v2647, %v2639
    %v3176 = vpack.c.b16 %v2648, %v2640
    %v3177 = vpack.c.b16 %v2657, %v2649
    %v3178 = vpack.c.b16 %v2658, %v2650
    %v3179 = vpack.c.b16 %v2659, %v2651
    %v3180 = vpack.c.b16 %v2660, %v2652
    %v3181 = vpack.c.b16 %v2661, %v2653
    %v3182 = vpack.c.b16 %v2662, %v2654
    %v3183 = vpack.c.b16 %v2663, %v2655
    %v3184 = vpack.c.b16 %v2664, %v2656
    %v3185 = vpack.c.b16 %v2673, %v2665
    %v3186 = vpack.c.b16 %v2674, %v2666
    %v3187 = vpack.c.b16 %v2675, %v2667
    %v3188 = vpack.c.b16 %v2676, %v2668
    %v3189 = vpack.c.b16 %v2677, %v2669
    %v3190 = vpack.c.b16 %v2678, %v2670
    %v3191 = vpack.c.b16 %v2679, %v2671
    %v3192 = vpack.c.b16 %v2680, %v2672
    %3705 = vmatpush.bf16.msra.mxu0 %v2737
    %3706 = vmatpush.bf16.msra.mxu0 %v2729
    %3707 = vmatpush.bf16.msra.mxu0 %v2721
    %3708 = vmatpush.bf16.msra.mxu0 %v2713
    %3709 = vmatpush.bf16.msra.mxu0 %v2705
    %3710 = vmatpush.bf16.msra.mxu0 %v2697
    %3711 = vmatpush.bf16.msra.mxu0 %v2689
    %3712 = vmatpush.bf16.msra.mxu0 %v2681
    %3713 = vmatmul.bf16.gmra.mxu0 %v607
    %v3714 = vpop.f32.mrf.mxu0
    %v3715 = vadd.f32 %v1129, %v3714
    %v3716 = vpop.f32.mrf.mxu0
    %3717 = vdwg.mxu0
    %3718 = vmatpush.bf16.msra.mxu0 %v2801
    %3719 = vmatpush.bf16.msra.mxu0 %v2793
    %3720 = vmatpush.bf16.msra.mxu0 %v2785
    %3721 = vmatpush.bf16.msra.mxu0 %v2777
    %3722 = vmatpush.bf16.msra.mxu0 %v2769
    %3723 = vmatpush.bf16.msra.mxu0 %v2761
    %3724 = vmatpush.bf16.msra.mxu0 %v2753
    %3725 = vmatpush.bf16.msra.mxu0 %v2745
    %3726 = vmatmul.bf16.gmra.mxu0 %v608
    %v3727 = vpop.f32.mrf.mxu0
    %v3728 = vadd.f32 %v3715, %v3727
    %v3729 = vpop.f32.mrf.mxu0
    %3730 = vdwg.mxu0
    %3731 = vmatpush.bf16.msra.mxu0 %v2865
    %3732 = vmatpush.bf16.msra.mxu0 %v2857
    %3733 = vmatpush.bf16.msra.mxu0 %v2849
    %3734 = vmatpush.bf16.msra.mxu0 %v2841
    %3735 = vmatpush.bf16.msra.mxu0 %v2833
    %3736 = vmatpush.bf16.msra.mxu0 %v2825
    %3737 = vmatpush.bf16.msra.mxu0 %v2817
    %3738 = vmatpush.bf16.msra.mxu0 %v2809
    %3739 = vmatmul.bf16.gmra.mxu0 %v609
    %v3740 = vpop.f32.mrf.mxu0
    %v3741 = vadd.f32 %v3728, %v3740
    %v3742 = vpop.f32.mrf.mxu0
    %3743 = vdwg.mxu0
    %3744 = vmatpush.bf16.msra.mxu0 %v2929
    %3745 = vmatpush.bf16.msra.mxu0 %v2921
    %3746 = vmatpush.bf16.msra.mxu0 %v2913
    %3747 = vmatpush.bf16.msra.mxu0 %v2905
    %3748 = vmatpush.bf16.msra.mxu0 %v2897
    %3749 = vmatpush.bf16.msra.mxu0 %v2889
    %3750 = vmatpush.bf16.msra.mxu0 %v2881
    %3751 = vmatpush.bf16.msra.mxu0 %v2873
    %3752 = vmatmul.bf16.gmra.mxu0 %v610
    %v3753 = vpop.f32.mrf.mxu0
    %v3754 = vadd.f32 %v3741, %v3753
    %v3755 = vpop.f32.mrf.mxu0
    %3756 = vdwg.mxu0
    %3757 = vmatpush.bf16.msra.mxu0 %v2993
    %3758 = vmatpush.bf16.msra.mxu0 %v2985
    %3759 = vmatpush.bf16.msra.mxu0 %v2977
    %3760 = vmatpush.bf16.msra.mxu0 %v2969
    %3761 = vmatpush.bf16.msra.mxu0 %v2961
    %3762 = vmatpush.bf16.msra.mxu0 %v2953
    %3763 = vmatpush.bf16.msra.mxu0 %v2945
    %3764 = vmatpush.bf16.msra.mxu0 %v2937
    %3765 = vmatmul.bf16.gmra.mxu0 %v611
    %v3766 = vpop.f32.mrf.mxu0
    %v3767 = vadd.f32 %v3754, %v3766
    %v3768 = vpop.f32.mrf.mxu0
    %3769 = vdwg.mxu0
    %3770 = vmatpush.bf16.msra.mxu0 %v3057
    %3771 = vmatpush.bf16.msra.mxu0 %v3049
    %3772 = vmatpush.bf16.msra.mxu0 %v3041
    %3773 = vmatpush.bf16.msra.mxu0 %v3033
    %3774 = vmatpush.bf16.msra.mxu0 %v3025
    %3775 = vmatpush.bf16.msra.mxu0 %v3017
    %3776 = vmatpush.bf16.msra.mxu0 %v3009
    %3777 = vmatpush.bf16.msra.mxu0 %v3001
    %3778 = vmatmul.bf16.gmra.mxu0 %v612
    %v3779 = vpop.f32.mrf.mxu0
    %v3780 = vadd.f32 %v3767, %v3779
    %v3781 = vpop.f32.mrf.mxu0
    %3782 = vdwg.mxu0
    %3783 = vmatpush.bf16.msra.mxu0 %v3121
    %3784 = vmatpush.bf16.msra.mxu0 %v3113
    %3785 = vmatpush.bf16.msra.mxu0 %v3105
    %3786 = vmatpush.bf16.msra.mxu0 %v3097
    %3787 = vmatpush.bf16.msra.mxu0 %v3089
    %3788 = vmatpush.bf16.msra.mxu0 %v3081
    %3789 = vmatpush.bf16.msra.mxu0 %v3073
    %3790 = vmatpush.bf16.msra.mxu0 %v3065
    %3791 = vmatmul.bf16.gmra.mxu0 %v613
    %v3792 = vpop.f32.mrf.mxu0
    %v3793 = vadd.f32 %v3780, %v3792
    %v3794 = vpop.f32.mrf.mxu0
    %3795 = vdwg.mxu0
    %3796 = vmatpush.bf16.msra.mxu0 %v3185
    %3797 = vmatpush.bf16.msra.mxu0 %v3177
    %3798 = vmatpush.bf16.msra.mxu0 %v3169
    %3799 = vmatpush.bf16.msra.mxu0 %v3161
    %3800 = vmatpush.bf16.msra.mxu0 %v3153
    %3801 = vmatpush.bf16.msra.mxu0 %v3145
    %3802 = vmatpush.bf16.msra.mxu0 %v3137
    %3803 = vmatpush.bf16.msra.mxu0 %v3129
    %3804 = vmatmul.bf16.gmra.mxu0 %v614
    %v3805 = vpop.f32.mrf.mxu0
    %v3806 = vadd.f32 %v3793, %v3805
    %v3807 = vpop.f32.mrf.mxu0
    %3808 = vdwg.mxu0
    %3809 = vmatpush.bf16.msra.mxu0 %v2738
    %3810 = vmatpush.bf16.msra.mxu0 %v2730
    %3811 = vmatpush.bf16.msra.mxu0 %v2722
    %3812 = vmatpush.bf16.msra.mxu0 %v2714
    %3813 = vmatpush.bf16.msra.mxu0 %v2706
    %3814 = vmatpush.bf16.msra.mxu0 %v2698
    %3815 = vmatpush.bf16.msra.mxu0 %v2690
    %3816 = vmatpush.bf16.msra.mxu0 %v2682
    %3817 = vmatmul.bf16.gmra.mxu0 %v607
    %v3818 = vpop.f32.mrf.mxu0
    %v3819 = vadd.f32 %v1130, %v3818
    %v3820 = vpop.f32.mrf.mxu0
    %3821 = vdwg.mxu0
    %3822 = vmatpush.bf16.msra.mxu0 %v2802
    %3823 = vmatpush.bf16.msra.mxu0 %v2794
    %3824 = vmatpush.bf16.msra.mxu0 %v2786
    %3825 = vmatpush.bf16.msra.mxu0 %v2778
    %3826 = vmatpush.bf16.msra.mxu0 %v2770
    %3827 = vmatpush.bf16.msra.mxu0 %v2762
    %3828 = vmatpush.bf16.msra.mxu0 %v2754
    %3829 = vmatpush.bf16.msra.mxu0 %v2746
    %3830 = vmatmul.bf16.gmra.mxu0 %v608
    %v3831 = vpop.f32.mrf.mxu0
    %v3832 = vadd.f32 %v3819, %v3831
    %v3833 = vpop.f32.mrf.mxu0
    %3834 = vdwg.mxu0
    %3835 = vmatpush.bf16.msra.mxu0 %v2866
    %3836 = vmatpush.bf16.msra.mxu0 %v2858
    %3837 = vmatpush.bf16.msra.mxu0 %v2850
    %3838 = vmatpush.bf16.msra.mxu0 %v2842
    %3839 = vmatpush.bf16.msra.mxu0 %v2834
    %3840 = vmatpush.bf16.msra.mxu0 %v2826
    %3841 = vmatpush.bf16.msra.mxu0 %v2818
    %3842 = vmatpush.bf16.msra.mxu0 %v2810
    %3843 = vmatmul.bf16.gmra.mxu0 %v609
    %v3844 = vpop.f32.mrf.mxu0
    %v3845 = vadd.f32 %v3832, %v3844
    %v3846 = vpop.f32.mrf.mxu0
    %3847 = vdwg.mxu0
    %3848 = vmatpush.bf16.msra.mxu0 %v2930
    %3849 = vmatpush.bf16.msra.mxu0 %v2922
    %3850 = vmatpush.bf16.msra.mxu0 %v2914
    %3851 = vmatpush.bf16.msra.mxu0 %v2906
    %3852 = vmatpush.bf16.msra.mxu0 %v2898
    %3853 = vmatpush.bf16.msra.mxu0 %v2890
    %3854 = vmatpush.bf16.msra.mxu0 %v2882
    %3855 = vmatpush.bf16.msra.mxu0 %v2874
    %3856 = vmatmul.bf16.gmra.mxu0 %v610
    %v3857 = vpop.f32.mrf.mxu0
    %v3858 = vadd.f32 %v3845, %v3857
    %v3859 = vpop.f32.mrf.mxu0
    %3860 = vdwg.mxu0
    %3861 = vmatpush.bf16.msra.mxu0 %v2994
    %3862 = vmatpush.bf16.msra.mxu0 %v2986
    %3863 = vmatpush.bf16.msra.mxu0 %v2978
    %3864 = vmatpush.bf16.msra.mxu0 %v2970
    %3865 = vmatpush.bf16.msra.mxu0 %v2962
    %3866 = vmatpush.bf16.msra.mxu0 %v2954
    %3867 = vmatpush.bf16.msra.mxu0 %v2946
    %3868 = vmatpush.bf16.msra.mxu0 %v2938
    %3869 = vmatmul.bf16.gmra.mxu0 %v611
    %v3870 = vpop.f32.mrf.mxu0
    %v3871 = vadd.f32 %v3858, %v3870
    %v3872 = vpop.f32.mrf.mxu0
    %3873 = vdwg.mxu0
    %3874 = vmatpush.bf16.msra.mxu0 %v3058
    %3875 = vmatpush.bf16.msra.mxu0 %v3050
    %3876 = vmatpush.bf16.msra.mxu0 %v3042
    %3877 = vmatpush.bf16.msra.mxu0 %v3034
    %3878 = vmatpush.bf16.msra.mxu0 %v3026
    %3879 = vmatpush.bf16.msra.mxu0 %v3018
    %3880 = vmatpush.bf16.msra.mxu0 %v3010
    %3881 = vmatpush.bf16.msra.mxu0 %v3002
    %3882 = vmatmul.bf16.gmra.mxu0 %v612
    %v3883 = vpop.f32.mrf.mxu0
    %v3884 = vadd.f32 %v3871, %v3883
    %v3885 = vpop.f32.mrf.mxu0
    %3886 = vdwg.mxu0
    %3887 = vmatpush.bf16.msra.mxu0 %v3122
    %3888 = vmatpush.bf16.msra.mxu0 %v3114
    %3889 = vmatpush.bf16.msra.mxu0 %v3106
    %3890 = vmatpush.bf16.msra.mxu0 %v3098
    %3891 = vmatpush.bf16.msra.mxu0 %v3090
    %3892 = vmatpush.bf16.msra.mxu0 %v3082
    %3893 = vmatpush.bf16.msra.mxu0 %v3074
    %3894 = vmatpush.bf16.msra.mxu0 %v3066
    %3895 = vmatmul.bf16.gmra.mxu0 %v613
    %v3896 = vpop.f32.mrf.mxu0
    %v3897 = vadd.f32 %v3884, %v3896
    %v3898 = vpop.f32.mrf.mxu0
    %3899 = vdwg.mxu0
    %3900 = vmatpush.bf16.msra.mxu0 %v3186
    %3901 = vmatpush.bf16.msra.mxu0 %v3178
    %3902 = vmatpush.bf16.msra.mxu0 %v3170
    %3903 = vmatpush.bf16.msra.mxu0 %v3162
    %3904 = vmatpush.bf16.msra.mxu0 %v3154
    %3905 = vmatpush.bf16.msra.mxu0 %v3146
    %3906 = vmatpush.bf16.msra.mxu0 %v3138
    %3907 = vmatpush.bf16.msra.mxu0 %v3130
    %3908 = vmatmul.bf16.gmra.mxu0 %v614
    %v3909 = vpop.f32.mrf.mxu0
    %v3910 = vadd.f32 %v3897, %v3909
    %v3911 = vpop.f32.mrf.mxu0
    %3912 = vdwg.mxu0
    %3913 = vmatpush.bf16.msra.mxu0 %v2739
    %3914 = vmatpush.bf16.msra.mxu0 %v2731
    %3915 = vmatpush.bf16.msra.mxu0 %v2723
    %3916 = vmatpush.bf16.msra.mxu0 %v2715
    %3917 = vmatpush.bf16.msra.mxu0 %v2707
    %3918 = vmatpush.bf16.msra.mxu0 %v2699
    %3919 = vmatpush.bf16.msra.mxu0 %v2691
    %3920 = vmatpush.bf16.msra.mxu0 %v2683
    %3921 = vmatmul.bf16.gmra.mxu0 %v607
    %v3922 = vpop.f32.mrf.mxu0
    %v3923 = vadd.f32 %v1131, %v3922
    %v3924 = vpop.f32.mrf.mxu0
    %3925 = vdwg.mxu0
    %3926 = vmatpush.bf16.msra.mxu0 %v2803
    %3927 = vmatpush.bf16.msra.mxu0 %v2795
    %3928 = vmatpush.bf16.msra.mxu0 %v2787
    %3929 = vmatpush.bf16.msra.mxu0 %v2779
    %3930 = vmatpush.bf16.msra.mxu0 %v2771
    %3931 = vmatpush.bf16.msra.mxu0 %v2763
    %3932 = vmatpush.bf16.msra.mxu0 %v2755
    %3933 = vmatpush.bf16.msra.mxu0 %v2747
    %3934 = vmatmul.bf16.gmra.mxu0 %v608
    %v3935 = vpop.f32.mrf.mxu0
    %v3936 = vadd.f32 %v3923, %v3935
    %v3937 = vpop.f32.mrf.mxu0
    %3938 = vdwg.mxu0
    %3939 = vmatpush.bf16.msra.mxu0 %v2867
    %3940 = vmatpush.bf16.msra.mxu0 %v2859
    %3941 = vmatpush.bf16.msra.mxu0 %v2851
    %3942 = vmatpush.bf16.msra.mxu0 %v2843
    %3943 = vmatpush.bf16.msra.mxu0 %v2835
    %3944 = vmatpush.bf16.msra.mxu0 %v2827
    %3945 = vmatpush.bf16.msra.mxu0 %v2819
    %3946 = vmatpush.bf16.msra.mxu0 %v2811
    %3947 = vmatmul.bf16.gmra.mxu0 %v609
    %v3948 = vpop.f32.mrf.mxu0
    %v3949 = vadd.f32 %v3936, %v3948
    %v3950 = vpop.f32.mrf.mxu0
    %3951 = vdwg.mxu0
    %3952 = vmatpush.bf16.msra.mxu0 %v2931
    %3953 = vmatpush.bf16.msra.mxu0 %v2923
    %3954 = vmatpush.bf16.msra.mxu0 %v2915
    %3955 = vmatpush.bf16.msra.mxu0 %v2907
    %3956 = vmatpush.bf16.msra.mxu0 %v2899
    %3957 = vmatpush.bf16.msra.mxu0 %v2891
    %3958 = vmatpush.bf16.msra.mxu0 %v2883
    %3959 = vmatpush.bf16.msra.mxu0 %v2875
    %3960 = vmatmul.bf16.gmra.mxu0 %v610
    %v3961 = vpop.f32.mrf.mxu0
    %v3962 = vadd.f32 %v3949, %v3961
    %v3963 = vpop.f32.mrf.mxu0
    %3964 = vdwg.mxu0
    %3965 = vmatpush.bf16.msra.mxu0 %v2995
    %3966 = vmatpush.bf16.msra.mxu0 %v2987
    %3967 = vmatpush.bf16.msra.mxu0 %v2979
    %3968 = vmatpush.bf16.msra.mxu0 %v2971
    %3969 = vmatpush.bf16.msra.mxu0 %v2963
    %3970 = vmatpush.bf16.msra.mxu0 %v2955
    %3971 = vmatpush.bf16.msra.mxu0 %v2947
    %3972 = vmatpush.bf16.msra.mxu0 %v2939
    %3973 = vmatmul.bf16.gmra.mxu0 %v611
    %v3974 = vpop.f32.mrf.mxu0
    %v3975 = vadd.f32 %v3962, %v3974
    %v3976 = vpop.f32.mrf.mxu0
    %3977 = vdwg.mxu0
    %3978 = vmatpush.bf16.msra.mxu0 %v3059
    %3979 = vmatpush.bf16.msra.mxu0 %v3051
    %3980 = vmatpush.bf16.msra.mxu0 %v3043
    %3981 = vmatpush.bf16.msra.mxu0 %v3035
    %3982 = vmatpush.bf16.msra.mxu0 %v3027
    %3983 = vmatpush.bf16.msra.mxu0 %v3019
    %3984 = vmatpush.bf16.msra.mxu0 %v3011
    %3985 = vmatpush.bf16.msra.mxu0 %v3003
    %3986 = vmatmul.bf16.gmra.mxu0 %v612
    %v3987 = vpop.f32.mrf.mxu0
    %v3988 = vadd.f32 %v3975, %v3987
    %v3989 = vpop.f32.mrf.mxu0
    %3990 = vdwg.mxu0
    %3991 = vmatpush.bf16.msra.mxu0 %v3123
    %3992 = vmatpush.bf16.msra.mxu0 %v3115
    %3993 = vmatpush.bf16.msra.mxu0 %v3107
    %3994 = vmatpush.bf16.msra.mxu0 %v3099
    %3995 = vmatpush.bf16.msra.mxu0 %v3091
    %3996 = vmatpush.bf16.msra.mxu0 %v3083
    %3997 = vmatpush.bf16.msra.mxu0 %v3075
    %3998 = vmatpush.bf16.msra.mxu0 %v3067
    %3999 = vmatmul.bf16.gmra.mxu0 %v613
    %v4000 = vpop.f32.mrf.mxu0
    %v4001 = vadd.f32 %v3988, %v4000
    %v4002 = vpop.f32.mrf.mxu0
    %4003 = vdwg.mxu0
    %4004 = vmatpush.bf16.msra.mxu0 %v3187
    %4005 = vmatpush.bf16.msra.mxu0 %v3179
    %4006 = vmatpush.bf16.msra.mxu0 %v3171
    %4007 = vmatpush.bf16.msra.mxu0 %v3163
    %4008 = vmatpush.bf16.msra.mxu0 %v3155
    %4009 = vmatpush.bf16.msra.mxu0 %v3147
    %4010 = vmatpush.bf16.msra.mxu0 %v3139
    %4011 = vmatpush.bf16.msra.mxu0 %v3131
    %4012 = vmatmul.bf16.gmra.mxu0 %v614
    %v4013 = vpop.f32.mrf.mxu0
    %v4014 = vadd.f32 %v4001, %v4013
    %v4015 = vpop.f32.mrf.mxu0
    %4016 = vdwg.mxu0
    %4017 = vmatpush.bf16.msra.mxu0 %v2740
    %4018 = vmatpush.bf16.msra.mxu0 %v2732
    %4019 = vmatpush.bf16.msra.mxu0 %v2724
    %4020 = vmatpush.bf16.msra.mxu0 %v2716
    %4021 = vmatpush.bf16.msra.mxu0 %v2708
    %4022 = vmatpush.bf16.msra.mxu0 %v2700
    %4023 = vmatpush.bf16.msra.mxu0 %v2692
    %4024 = vmatpush.bf16.msra.mxu0 %v2684
    %4025 = vmatmul.bf16.gmra.mxu0 %v607
    %v4026 = vpop.f32.mrf.mxu0
    %v4027 = vadd.f32 %v1132, %v4026
    %v4028 = vpop.f32.mrf.mxu0
    %4029 = vdwg.mxu0
    %4030 = vmatpush.bf16.msra.mxu0 %v2804
    %4031 = vmatpush.bf16.msra.mxu0 %v2796
    %4032 = vmatpush.bf16.msra.mxu0 %v2788
    %4033 = vmatpush.bf16.msra.mxu0 %v2780
    %4034 = vmatpush.bf16.msra.mxu0 %v2772
    %4035 = vmatpush.bf16.msra.mxu0 %v2764
    %4036 = vmatpush.bf16.msra.mxu0 %v2756
    %4037 = vmatpush.bf16.msra.mxu0 %v2748
    %4038 = vmatmul.bf16.gmra.mxu0 %v608
    %v4039 = vpop.f32.mrf.mxu0
    %v4040 = vadd.f32 %v4027, %v4039
    %v4041 = vpop.f32.mrf.mxu0
    %4042 = vdwg.mxu0
    %4043 = vmatpush.bf16.msra.mxu0 %v2868
    %4044 = vmatpush.bf16.msra.mxu0 %v2860
    %4045 = vmatpush.bf16.msra.mxu0 %v2852
    %4046 = vmatpush.bf16.msra.mxu0 %v2844
    %4047 = vmatpush.bf16.msra.mxu0 %v2836
    %4048 = vmatpush.bf16.msra.mxu0 %v2828
    %4049 = vmatpush.bf16.msra.mxu0 %v2820
    %4050 = vmatpush.bf16.msra.mxu0 %v2812
    %4051 = vmatmul.bf16.gmra.mxu0 %v609
    %v4052 = vpop.f32.mrf.mxu0
    %v4053 = vadd.f32 %v4040, %v4052
    %v4054 = vpop.f32.mrf.mxu0
    %4055 = vdwg.mxu0
    %4056 = vmatpush.bf16.msra.mxu0 %v2932
    %4057 = vmatpush.bf16.msra.mxu0 %v2924
    %4058 = vmatpush.bf16.msra.mxu0 %v2916
    %4059 = vmatpush.bf16.msra.mxu0 %v2908
    %4060 = vmatpush.bf16.msra.mxu0 %v2900
    %4061 = vmatpush.bf16.msra.mxu0 %v2892
    %4062 = vmatpush.bf16.msra.mxu0 %v2884
    %4063 = vmatpush.bf16.msra.mxu0 %v2876
    %4064 = vmatmul.bf16.gmra.mxu0 %v610
    %v4065 = vpop.f32.mrf.mxu0
    %v4066 = vadd.f32 %v4053, %v4065
    %v4067 = vpop.f32.mrf.mxu0
    %4068 = vdwg.mxu0
    %4069 = vmatpush.bf16.msra.mxu0 %v2996
    %4070 = vmatpush.bf16.msra.mxu0 %v2988
    %4071 = vmatpush.bf16.msra.mxu0 %v2980
    %4072 = vmatpush.bf16.msra.mxu0 %v2972
    %4073 = vmatpush.bf16.msra.mxu0 %v2964
    %4074 = vmatpush.bf16.msra.mxu0 %v2956
    %4075 = vmatpush.bf16.msra.mxu0 %v2948
    %4076 = vmatpush.bf16.msra.mxu0 %v2940
    %4077 = vmatmul.bf16.gmra.mxu0 %v611
    %v4078 = vpop.f32.mrf.mxu0
    %v4079 = vadd.f32 %v4066, %v4078
    %v4080 = vpop.f32.mrf.mxu0
    %4081 = vdwg.mxu0
    %4082 = vmatpush.bf16.msra.mxu0 %v3060
    %4083 = vmatpush.bf16.msra.mxu0 %v3052
    %4084 = vmatpush.bf16.msra.mxu0 %v3044
    %4085 = vmatpush.bf16.msra.mxu0 %v3036
    %4086 = vmatpush.bf16.msra.mxu0 %v3028
    %4087 = vmatpush.bf16.msra.mxu0 %v3020
    %4088 = vmatpush.bf16.msra.mxu0 %v3012
    %4089 = vmatpush.bf16.msra.mxu0 %v3004
    %4090 = vmatmul.bf16.gmra.mxu0 %v612
    %v4091 = vpop.f32.mrf.mxu0
    %v4092 = vadd.f32 %v4079, %v4091
    %v4093 = vpop.f32.mrf.mxu0
    %4094 = vdwg.mxu0
    %4095 = vmatpush.bf16.msra.mxu0 %v3124
    %4096 = vmatpush.bf16.msra.mxu0 %v3116
    %4097 = vmatpush.bf16.msra.mxu0 %v3108
    %4098 = vmatpush.bf16.msra.mxu0 %v3100
    %4099 = vmatpush.bf16.msra.mxu0 %v3092
    %4100 = vmatpush.bf16.msra.mxu0 %v3084
    %4101 = vmatpush.bf16.msra.mxu0 %v3076
    %4102 = vmatpush.bf16.msra.mxu0 %v3068
    %4103 = vmatmul.bf16.gmra.mxu0 %v613
    %v4104 = vpop.f32.mrf.mxu0
    %v4105 = vadd.f32 %v4092, %v4104
    %v4106 = vpop.f32.mrf.mxu0
    %4107 = vdwg.mxu0
    %4108 = vmatpush.bf16.msra.mxu0 %v3188
    %4109 = vmatpush.bf16.msra.mxu0 %v3180
    %4110 = vmatpush.bf16.msra.mxu0 %v3172
    %4111 = vmatpush.bf16.msra.mxu0 %v3164
    %4112 = vmatpush.bf16.msra.mxu0 %v3156
    %4113 = vmatpush.bf16.msra.mxu0 %v3148
    %4114 = vmatpush.bf16.msra.mxu0 %v3140
    %4115 = vmatpush.bf16.msra.mxu0 %v3132
    %4116 = vmatmul.bf16.gmra.mxu0 %v614
    %v4117 = vpop.f32.mrf.mxu0
    %v4118 = vadd.f32 %v4105, %v4117
    %v4119 = vpop.f32.mrf.mxu0
    %4120 = vdwg.mxu0
    %4121 = vmatpush.bf16.msra.mxu0 %v2741
    %4122 = vmatpush.bf16.msra.mxu0 %v2733
    %4123 = vmatpush.bf16.msra.mxu0 %v2725
    %4124 = vmatpush.bf16.msra.mxu0 %v2717
    %4125 = vmatpush.bf16.msra.mxu0 %v2709
    %4126 = vmatpush.bf16.msra.mxu0 %v2701
    %4127 = vmatpush.bf16.msra.mxu0 %v2693
    %4128 = vmatpush.bf16.msra.mxu0 %v2685
    %4129 = vmatmul.bf16.gmra.mxu0 %v607
    %v4130 = vpop.f32.mrf.mxu0
    %v4131 = vadd.f32 %v1133, %v4130
    %v4132 = vpop.f32.mrf.mxu0
    %4133 = vdwg.mxu0
    %4134 = vmatpush.bf16.msra.mxu0 %v2805
    %4135 = vmatpush.bf16.msra.mxu0 %v2797
    %4136 = vmatpush.bf16.msra.mxu0 %v2789
    %4137 = vmatpush.bf16.msra.mxu0 %v2781
    %4138 = vmatpush.bf16.msra.mxu0 %v2773
    %4139 = vmatpush.bf16.msra.mxu0 %v2765
    %4140 = vmatpush.bf16.msra.mxu0 %v2757
    %4141 = vmatpush.bf16.msra.mxu0 %v2749
    %4142 = vmatmul.bf16.gmra.mxu0 %v608
    %v4143 = vpop.f32.mrf.mxu0
    %v4144 = vadd.f32 %v4131, %v4143
    %v4145 = vpop.f32.mrf.mxu0
    %4146 = vdwg.mxu0
    %4147 = vmatpush.bf16.msra.mxu0 %v2869
    %4148 = vmatpush.bf16.msra.mxu0 %v2861
    %4149 = vmatpush.bf16.msra.mxu0 %v2853
    %4150 = vmatpush.bf16.msra.mxu0 %v2845
    %4151 = vmatpush.bf16.msra.mxu0 %v2837
    %4152 = vmatpush.bf16.msra.mxu0 %v2829
    %4153 = vmatpush.bf16.msra.mxu0 %v2821
    %4154 = vmatpush.bf16.msra.mxu0 %v2813
    %4155 = vmatmul.bf16.gmra.mxu0 %v609
    %v4156 = vpop.f32.mrf.mxu0
    %v4157 = vadd.f32 %v4144, %v4156
    %v4158 = vpop.f32.mrf.mxu0
    %4159 = vdwg.mxu0
    %4160 = vmatpush.bf16.msra.mxu0 %v2933
    %4161 = vmatpush.bf16.msra.mxu0 %v2925
    %4162 = vmatpush.bf16.msra.mxu0 %v2917
    %4163 = vmatpush.bf16.msra.mxu0 %v2909
    %4164 = vmatpush.bf16.msra.mxu0 %v2901
    %4165 = vmatpush.bf16.msra.mxu0 %v2893
    %4166 = vmatpush.bf16.msra.mxu0 %v2885
    %4167 = vmatpush.bf16.msra.mxu0 %v2877
    %4168 = vmatmul.bf16.gmra.mxu0 %v610
    %v4169 = vpop.f32.mrf.mxu0
    %v4170 = vadd.f32 %v4157, %v4169
    %v4171 = vpop.f32.mrf.mxu0
    %4172 = vdwg.mxu0
    %4173 = vmatpush.bf16.msra.mxu0 %v2997
    %4174 = vmatpush.bf16.msra.mxu0 %v2989
    %4175 = vmatpush.bf16.msra.mxu0 %v2981
    %4176 = vmatpush.bf16.msra.mxu0 %v2973
    %4177 = vmatpush.bf16.msra.mxu0 %v2965
    %4178 = vmatpush.bf16.msra.mxu0 %v2957
    %4179 = vmatpush.bf16.msra.mxu0 %v2949
    %4180 = vmatpush.bf16.msra.mxu0 %v2941
    %4181 = vmatmul.bf16.gmra.mxu0 %v611
    %v4182 = vpop.f32.mrf.mxu0
    %v4183 = vadd.f32 %v4170, %v4182
    %v4184 = vpop.f32.mrf.mxu0
    %4185 = vdwg.mxu0
    %4186 = vmatpush.bf16.msra.mxu0 %v3061
    %4187 = vmatpush.bf16.msra.mxu0 %v3053
    %4188 = vmatpush.bf16.msra.mxu0 %v3045
    %4189 = vmatpush.bf16.msra.mxu0 %v3037
    %4190 = vmatpush.bf16.msra.mxu0 %v3029
    %4191 = vmatpush.bf16.msra.mxu0 %v3021
    %4192 = vmatpush.bf16.msra.mxu0 %v3013
    %4193 = vmatpush.bf16.msra.mxu0 %v3005
    %4194 = vmatmul.bf16.gmra.mxu0 %v612
    %v4195 = vpop.f32.mrf.mxu0
    %v4196 = vadd.f32 %v4183, %v4195
    %v4197 = vpop.f32.mrf.mxu0
    %4198 = vdwg.mxu0
    %4199 = vmatpush.bf16.msra.mxu0 %v3125
    %4200 = vmatpush.bf16.msra.mxu0 %v3117
    %4201 = vmatpush.bf16.msra.mxu0 %v3109
    %4202 = vmatpush.bf16.msra.mxu0 %v3101
    %4203 = vmatpush.bf16.msra.mxu0 %v3093
    %4204 = vmatpush.bf16.msra.mxu0 %v3085
    %4205 = vmatpush.bf16.msra.mxu0 %v3077
    %4206 = vmatpush.bf16.msra.mxu0 %v3069
    %4207 = vmatmul.bf16.gmra.mxu0 %v613
    %v4208 = vpop.f32.mrf.mxu0
    %v4209 = vadd.f32 %v4196, %v4208
    %v4210 = vpop.f32.mrf.mxu0
    %4211 = vdwg.mxu0
    %4212 = vmatpush.bf16.msra.mxu0 %v3189
    %4213 = vmatpush.bf16.msra.mxu0 %v3181
    %4214 = vmatpush.bf16.msra.mxu0 %v3173
    %4215 = vmatpush.bf16.msra.mxu0 %v3165
    %4216 = vmatpush.bf16.msra.mxu0 %v3157
    %4217 = vmatpush.bf16.msra.mxu0 %v3149
    %4218 = vmatpush.bf16.msra.mxu0 %v3141
    %4219 = vmatpush.bf16.msra.mxu0 %v3133
    %4220 = vmatmul.bf16.gmra.mxu0 %v614
    %v4221 = vpop.f32.mrf.mxu0
    %v4222 = vadd.f32 %v4209, %v4221
    %v4223 = vpop.f32.mrf.mxu0
    %4224 = vdwg.mxu0
    %4225 = vmatpush.bf16.msra.mxu0 %v2742
    %4226 = vmatpush.bf16.msra.mxu0 %v2734
    %4227 = vmatpush.bf16.msra.mxu0 %v2726
    %4228 = vmatpush.bf16.msra.mxu0 %v2718
    %4229 = vmatpush.bf16.msra.mxu0 %v2710
    %4230 = vmatpush.bf16.msra.mxu0 %v2702
    %4231 = vmatpush.bf16.msra.mxu0 %v2694
    %4232 = vmatpush.bf16.msra.mxu0 %v2686
    %4233 = vmatmul.bf16.gmra.mxu0 %v607
    %v4234 = vpop.f32.mrf.mxu0
    %v4235 = vadd.f32 %v1134, %v4234
    %v4236 = vpop.f32.mrf.mxu0
    %4237 = vdwg.mxu0
    %4238 = vmatpush.bf16.msra.mxu0 %v2806
    %4239 = vmatpush.bf16.msra.mxu0 %v2798
    %4240 = vmatpush.bf16.msra.mxu0 %v2790
    %4241 = vmatpush.bf16.msra.mxu0 %v2782
    %4242 = vmatpush.bf16.msra.mxu0 %v2774
    %4243 = vmatpush.bf16.msra.mxu0 %v2766
    %4244 = vmatpush.bf16.msra.mxu0 %v2758
    %4245 = vmatpush.bf16.msra.mxu0 %v2750
    %4246 = vmatmul.bf16.gmra.mxu0 %v608
    %v4247 = vpop.f32.mrf.mxu0
    %v4248 = vadd.f32 %v4235, %v4247
    %v4249 = vpop.f32.mrf.mxu0
    %4250 = vdwg.mxu0
    %4251 = vmatpush.bf16.msra.mxu0 %v2870
    %4252 = vmatpush.bf16.msra.mxu0 %v2862
    %4253 = vmatpush.bf16.msra.mxu0 %v2854
    %4254 = vmatpush.bf16.msra.mxu0 %v2846
    %4255 = vmatpush.bf16.msra.mxu0 %v2838
    %4256 = vmatpush.bf16.msra.mxu0 %v2830
    %4257 = vmatpush.bf16.msra.mxu0 %v2822
    %4258 = vmatpush.bf16.msra.mxu0 %v2814
    %4259 = vmatmul.bf16.gmra.mxu0 %v609
    %v4260 = vpop.f32.mrf.mxu0
    %v4261 = vadd.f32 %v4248, %v4260
    %v4262 = vpop.f32.mrf.mxu0
    %4263 = vdwg.mxu0
    %4264 = vmatpush.bf16.msra.mxu0 %v2934
    %4265 = vmatpush.bf16.msra.mxu0 %v2926
    %4266 = vmatpush.bf16.msra.mxu0 %v2918
    %4267 = vmatpush.bf16.msra.mxu0 %v2910
    %4268 = vmatpush.bf16.msra.mxu0 %v2902
    %4269 = vmatpush.bf16.msra.mxu0 %v2894
    %4270 = vmatpush.bf16.msra.mxu0 %v2886
    %4271 = vmatpush.bf16.msra.mxu0 %v2878
    %4272 = vmatmul.bf16.gmra.mxu0 %v610
    %v4273 = vpop.f32.mrf.mxu0
    %v4274 = vadd.f32 %v4261, %v4273
    %v4275 = vpop.f32.mrf.mxu0
    %4276 = vdwg.mxu0
    %4277 = vmatpush.bf16.msra.mxu0 %v2998
    %4278 = vmatpush.bf16.msra.mxu0 %v2990
    %4279 = vmatpush.bf16.msra.mxu0 %v2982
    %4280 = vmatpush.bf16.msra.mxu0 %v2974
    %4281 = vmatpush.bf16.msra.mxu0 %v2966
    %4282 = vmatpush.bf16.msra.mxu0 %v2958
    %4283 = vmatpush.bf16.msra.mxu0 %v2950
    %4284 = vmatpush.bf16.msra.mxu0 %v2942
    %4285 = vmatmul.bf16.gmra.mxu0 %v611
    %v4286 = vpop.f32.mrf.mxu0
    %v4287 = vadd.f32 %v4274, %v4286
    %v4288 = vpop.f32.mrf.mxu0
    %4289 = vdwg.mxu0
    %4290 = vmatpush.bf16.msra.mxu0 %v3062
    %4291 = vmatpush.bf16.msra.mxu0 %v3054
    %4292 = vmatpush.bf16.msra.mxu0 %v3046
    %4293 = vmatpush.bf16.msra.mxu0 %v3038
    %4294 = vmatpush.bf16.msra.mxu0 %v3030
    %4295 = vmatpush.bf16.msra.mxu0 %v3022
    %4296 = vmatpush.bf16.msra.mxu0 %v3014
    %4297 = vmatpush.bf16.msra.mxu0 %v3006
    %4298 = vmatmul.bf16.gmra.mxu0 %v612
    %v4299 = vpop.f32.mrf.mxu0
    %v4300 = vadd.f32 %v4287, %v4299
    %v4301 = vpop.f32.mrf.mxu0
    %4302 = vdwg.mxu0
    %4303 = vmatpush.bf16.msra.mxu0 %v3126
    %4304 = vmatpush.bf16.msra.mxu0 %v3118
    %4305 = vmatpush.bf16.msra.mxu0 %v3110
    %4306 = vmatpush.bf16.msra.mxu0 %v3102
    %4307 = vmatpush.bf16.msra.mxu0 %v3094
    %4308 = vmatpush.bf16.msra.mxu0 %v3086
    %4309 = vmatpush.bf16.msra.mxu0 %v3078
    %4310 = vmatpush.bf16.msra.mxu0 %v3070
    %4311 = vmatmul.bf16.gmra.mxu0 %v613
    %v4312 = vpop.f32.mrf.mxu0
    %v4313 = vadd.f32 %v4300, %v4312
    %v4314 = vpop.f32.mrf.mxu0
    %4315 = vdwg.mxu0
    %4316 = vmatpush.bf16.msra.mxu0 %v3190
    %4317 = vmatpush.bf16.msra.mxu0 %v3182
    %4318 = vmatpush.bf16.msra.mxu0 %v3174
    %4319 = vmatpush.bf16.msra.mxu0 %v3166
    %4320 = vmatpush.bf16.msra.mxu0 %v3158
    %4321 = vmatpush.bf16.msra.mxu0 %v3150
    %4322 = vmatpush.bf16.msra.mxu0 %v3142
    %4323 = vmatpush.bf16.msra.mxu0 %v3134
    %4324 = vmatmul.bf16.gmra.mxu0 %v614
    %v4325 = vpop.f32.mrf.mxu0
    %v4326 = vadd.f32 %v4313, %v4325
    %v4327 = vpop.f32.mrf.mxu0
    %4328 = vdwg.mxu0
    %4329 = vmatpush.bf16.msra.mxu0 %v2743
    %4330 = vmatpush.bf16.msra.mxu0 %v2735
    %4331 = vmatpush.bf16.msra.mxu0 %v2727
    %4332 = vmatpush.bf16.msra.mxu0 %v2719
    %4333 = vmatpush.bf16.msra.mxu0 %v2711
    %4334 = vmatpush.bf16.msra.mxu0 %v2703
    %4335 = vmatpush.bf16.msra.mxu0 %v2695
    %4336 = vmatpush.bf16.msra.mxu0 %v2687
    %4337 = vmatmul.bf16.gmra.mxu0 %v607
    %v4338 = vpop.f32.mrf.mxu0
    %v4339 = vadd.f32 %v1135, %v4338
    %v4340 = vpop.f32.mrf.mxu0
    %4341 = vdwg.mxu0
    %4342 = vmatpush.bf16.msra.mxu0 %v2807
    %4343 = vmatpush.bf16.msra.mxu0 %v2799
    %4344 = vmatpush.bf16.msra.mxu0 %v2791
    %4345 = vmatpush.bf16.msra.mxu0 %v2783
    %4346 = vmatpush.bf16.msra.mxu0 %v2775
    %4347 = vmatpush.bf16.msra.mxu0 %v2767
    %4348 = vmatpush.bf16.msra.mxu0 %v2759
    %4349 = vmatpush.bf16.msra.mxu0 %v2751
    %4350 = vmatmul.bf16.gmra.mxu0 %v608
    %v4351 = vpop.f32.mrf.mxu0
    %v4352 = vadd.f32 %v4339, %v4351
    %v4353 = vpop.f32.mrf.mxu0
    %4354 = vdwg.mxu0
    %4355 = vmatpush.bf16.msra.mxu0 %v2871
    %4356 = vmatpush.bf16.msra.mxu0 %v2863
    %4357 = vmatpush.bf16.msra.mxu0 %v2855
    %4358 = vmatpush.bf16.msra.mxu0 %v2847
    %4359 = vmatpush.bf16.msra.mxu0 %v2839
    %4360 = vmatpush.bf16.msra.mxu0 %v2831
    %4361 = vmatpush.bf16.msra.mxu0 %v2823
    %4362 = vmatpush.bf16.msra.mxu0 %v2815
    %4363 = vmatmul.bf16.gmra.mxu0 %v609
    %v4364 = vpop.f32.mrf.mxu0
    %v4365 = vadd.f32 %v4352, %v4364
    %v4366 = vpop.f32.mrf.mxu0
    %4367 = vdwg.mxu0
    %4368 = vmatpush.bf16.msra.mxu0 %v2935
    %4369 = vmatpush.bf16.msra.mxu0 %v2927
    %4370 = vmatpush.bf16.msra.mxu0 %v2919
    %4371 = vmatpush.bf16.msra.mxu0 %v2911
    %4372 = vmatpush.bf16.msra.mxu0 %v2903
    %4373 = vmatpush.bf16.msra.mxu0 %v2895
    %4374 = vmatpush.bf16.msra.mxu0 %v2887
    %4375 = vmatpush.bf16.msra.mxu0 %v2879
    %4376 = vmatmul.bf16.gmra.mxu0 %v610
    %v4377 = vpop.f32.mrf.mxu0
    %v4378 = vadd.f32 %v4365, %v4377
    %v4379 = vpop.f32.mrf.mxu0
    %4380 = vdwg.mxu0
    %4381 = vmatpush.bf16.msra.mxu0 %v2999
    %4382 = vmatpush.bf16.msra.mxu0 %v2991
    %4383 = vmatpush.bf16.msra.mxu0 %v2983
    %4384 = vmatpush.bf16.msra.mxu0 %v2975
    %4385 = vmatpush.bf16.msra.mxu0 %v2967
    %4386 = vmatpush.bf16.msra.mxu0 %v2959
    %4387 = vmatpush.bf16.msra.mxu0 %v2951
    %4388 = vmatpush.bf16.msra.mxu0 %v2943
    %4389 = vmatmul.bf16.gmra.mxu0 %v611
    %v4390 = vpop.f32.mrf.mxu0
    %v4391 = vadd.f32 %v4378, %v4390
    %v4392 = vpop.f32.mrf.mxu0
    %4393 = vdwg.mxu0
    %4394 = vmatpush.bf16.msra.mxu0 %v3063
    %4395 = vmatpush.bf16.msra.mxu0 %v3055
    %4396 = vmatpush.bf16.msra.mxu0 %v3047
    %4397 = vmatpush.bf16.msra.mxu0 %v3039
    %4398 = vmatpush.bf16.msra.mxu0 %v3031
    %4399 = vmatpush.bf16.msra.mxu0 %v3023
    %4400 = vmatpush.bf16.msra.mxu0 %v3015
    %4401 = vmatpush.bf16.msra.mxu0 %v3007
    %4402 = vmatmul.bf16.gmra.mxu0 %v612
    %v4403 = vpop.f32.mrf.mxu0
    %v4404 = vadd.f32 %v4391, %v4403
    %v4405 = vpop.f32.mrf.mxu0
    %4406 = vdwg.mxu0
    %4407 = vmatpush.bf16.msra.mxu0 %v3127
    %4408 = vmatpush.bf16.msra.mxu0 %v3119
    %4409 = vmatpush.bf16.msra.mxu0 %v3111
    %4410 = vmatpush.bf16.msra.mxu0 %v3103
    %4411 = vmatpush.bf16.msra.mxu0 %v3095
    %4412 = vmatpush.bf16.msra.mxu0 %v3087
    %4413 = vmatpush.bf16.msra.mxu0 %v3079
    %4414 = vmatpush.bf16.msra.mxu0 %v3071
    %4415 = vmatmul.bf16.gmra.mxu0 %v613
    %v4416 = vpop.f32.mrf.mxu0
    %v4417 = vadd.f32 %v4404, %v4416
    %v4418 = vpop.f32.mrf.mxu0
    %4419 = vdwg.mxu0
    %4420 = vmatpush.bf16.msra.mxu0 %v3191
    %4421 = vmatpush.bf16.msra.mxu0 %v3183
    %4422 = vmatpush.bf16.msra.mxu0 %v3175
    %4423 = vmatpush.bf16.msra.mxu0 %v3167
    %4424 = vmatpush.bf16.msra.mxu0 %v3159
    %4425 = vmatpush.bf16.msra.mxu0 %v3151
    %4426 = vmatpush.bf16.msra.mxu0 %v3143
    %4427 = vmatpush.bf16.msra.mxu0 %v3135
    %4428 = vmatmul.bf16.gmra.mxu0 %v614
    %v4429 = vpop.f32.mrf.mxu0
    %v4430 = vadd.f32 %v4417, %v4429
    %v4431 = vpop.f32.mrf.mxu0
    %4432 = vdwg.mxu0
    %4433 = vmatpush.bf16.msra.mxu0 %v2744
    %4434 = vmatpush.bf16.msra.mxu0 %v2736
    %4435 = vmatpush.bf16.msra.mxu0 %v2728
    %4436 = vmatpush.bf16.msra.mxu0 %v2720
    %4437 = vmatpush.bf16.msra.mxu0 %v2712
    %4438 = vmatpush.bf16.msra.mxu0 %v2704
    %4439 = vmatpush.bf16.msra.mxu0 %v2696
    %4440 = vmatpush.bf16.msra.mxu0 %v2688
    %4441 = vmatmul.bf16.gmra.mxu0 %v607
    %v4442 = vpop.f32.mrf.mxu0
    %v4443 = vadd.f32 %v1136, %v4442
    %v4444 = vpop.f32.mrf.mxu0
    %4445 = vdwg.mxu0
    %4446 = vmatpush.bf16.msra.mxu0 %v2808
    %4447 = vmatpush.bf16.msra.mxu0 %v2800
    %4448 = vmatpush.bf16.msra.mxu0 %v2792
    %4449 = vmatpush.bf16.msra.mxu0 %v2784
    %4450 = vmatpush.bf16.msra.mxu0 %v2776
    %4451 = vmatpush.bf16.msra.mxu0 %v2768
    %4452 = vmatpush.bf16.msra.mxu0 %v2760
    %4453 = vmatpush.bf16.msra.mxu0 %v2752
    %4454 = vmatmul.bf16.gmra.mxu0 %v608
    %v4455 = vpop.f32.mrf.mxu0
    %v4456 = vadd.f32 %v4443, %v4455
    %v4457 = vpop.f32.mrf.mxu0
    %4458 = vdwg.mxu0
    %4459 = vmatpush.bf16.msra.mxu0 %v2872
    %4460 = vmatpush.bf16.msra.mxu0 %v2864
    %4461 = vmatpush.bf16.msra.mxu0 %v2856
    %4462 = vmatpush.bf16.msra.mxu0 %v2848
    %4463 = vmatpush.bf16.msra.mxu0 %v2840
    %4464 = vmatpush.bf16.msra.mxu0 %v2832
    %4465 = vmatpush.bf16.msra.mxu0 %v2824
    %4466 = vmatpush.bf16.msra.mxu0 %v2816
    %4467 = vmatmul.bf16.gmra.mxu0 %v609
    %v4468 = vpop.f32.mrf.mxu0
    %v4469 = vadd.f32 %v4456, %v4468
    %v4470 = vpop.f32.mrf.mxu0
    %4471 = vdwg.mxu0
    %4472 = vmatpush.bf16.msra.mxu0 %v2936
    %4473 = vmatpush.bf16.msra.mxu0 %v2928
    %4474 = vmatpush.bf16.msra.mxu0 %v2920
    %4475 = vmatpush.bf16.msra.mxu0 %v2912
    %4476 = vmatpush.bf16.msra.mxu0 %v2904
    %4477 = vmatpush.bf16.msra.mxu0 %v2896
    %4478 = vmatpush.bf16.msra.mxu0 %v2888
    %4479 = vmatpush.bf16.msra.mxu0 %v2880
    %4480 = vmatmul.bf16.gmra.mxu0 %v610
    %v4481 = vpop.f32.mrf.mxu0
    %v4482 = vadd.f32 %v4469, %v4481
    %v4483 = vpop.f32.mrf.mxu0
    %4484 = vdwg.mxu0
    %4485 = vmatpush.bf16.msra.mxu0 %v3000
    %4486 = vmatpush.bf16.msra.mxu0 %v2992
    %4487 = vmatpush.bf16.msra.mxu0 %v2984
    %4488 = vmatpush.bf16.msra.mxu0 %v2976
    %4489 = vmatpush.bf16.msra.mxu0 %v2968
    %4490 = vmatpush.bf16.msra.mxu0 %v2960
    %4491 = vmatpush.bf16.msra.mxu0 %v2952
    %4492 = vmatpush.bf16.msra.mxu0 %v2944
    %4493 = vmatmul.bf16.gmra.mxu0 %v611
    %v4494 = vpop.f32.mrf.mxu0
    %v4495 = vadd.f32 %v4482, %v4494
    %v4496 = vpop.f32.mrf.mxu0
    %4497 = vdwg.mxu0
    %4498 = vmatpush.bf16.msra.mxu0 %v3064
    %4499 = vmatpush.bf16.msra.mxu0 %v3056
    %4500 = vmatpush.bf16.msra.mxu0 %v3048
    %4501 = vmatpush.bf16.msra.mxu0 %v3040
    %4502 = vmatpush.bf16.msra.mxu0 %v3032
    %4503 = vmatpush.bf16.msra.mxu0 %v3024
    %4504 = vmatpush.bf16.msra.mxu0 %v3016
    %4505 = vmatpush.bf16.msra.mxu0 %v3008
    %4506 = vmatmul.bf16.gmra.mxu0 %v612
    %v4507 = vpop.f32.mrf.mxu0
    %v4508 = vadd.f32 %v4495, %v4507
    %v4509 = vpop.f32.mrf.mxu0
    %4510 = vdwg.mxu0
    %4511 = vmatpush.bf16.msra.mxu0 %v3128
    %4512 = vmatpush.bf16.msra.mxu0 %v3120
    %4513 = vmatpush.bf16.msra.mxu0 %v3112
    %4514 = vmatpush.bf16.msra.mxu0 %v3104
    %4515 = vmatpush.bf16.msra.mxu0 %v3096
    %4516 = vmatpush.bf16.msra.mxu0 %v3088
    %4517 = vmatpush.bf16.msra.mxu0 %v3080
    %4518 = vmatpush.bf16.msra.mxu0 %v3072
    %4519 = vmatmul.bf16.gmra.mxu0 %v613
    %v4520 = vpop.f32.mrf.mxu0
    %v4521 = vadd.f32 %v4508, %v4520
    %v4522 = vpop.f32.mrf.mxu0
    %4523 = vdwg.mxu0
    %4524 = vmatpush.bf16.msra.mxu0 %v3192
    %4525 = vmatpush.bf16.msra.mxu0 %v3184
    %4526 = vmatpush.bf16.msra.mxu0 %v3176
    %4527 = vmatpush.bf16.msra.mxu0 %v3168
    %4528 = vmatpush.bf16.msra.mxu0 %v3160
    %4529 = vmatpush.bf16.msra.mxu0 %v3152
    %4530 = vmatpush.bf16.msra.mxu0 %v3144
    %4531 = vmatpush.bf16.msra.mxu0 %v3136
    %4532 = vmatmul.bf16.gmra.mxu0 %v614
    %v4533 = vpop.f32.mrf.mxu0
    %v4534 = vadd.f32 %v4521, %v4533
    %v4535 = vpop.f32.mrf.mxu0
    %4536 = vdwg.mxu0
    %v4537 = vxor.u32 %v3806, 2147483648
    %v4538 = vxor.u32 %v3910, 2147483648
    %v4539 = vxor.u32 %v4014, 2147483648
    %v4540 = vxor.u32 %v4118, 2147483648
    %v4541 = vxor.u32 %v4222, 2147483648
    %v4542 = vxor.u32 %v4326, 2147483648
    %v4543 = vxor.u32 %v4430, 2147483648
    %v4544 = vxor.u32 %v4534, 2147483648
    %v4545 = vmul.f32 %v4537, 1.442695
    %v4546 = vpow.pop %v4545
    %v4547 = vmul.f32 %v4538, 1.442695
    %v4548 = vpow.pop %v4547
    %v4549 = vmul.f32 %v4539, 1.442695
    %v4550 = vpow.pop %v4549
    %v4551 = vmul.f32 %v4540, 1.442695
    %v4552 = vpow.pop %v4551
    %v4553 = vmul.f32 %v4541, 1.442695
    %v4554 = vpow.pop %v4553
    %v4555 = vmul.f32 %v4542, 1.442695
    %v4556 = vpow.pop %v4555
    %v4557 = vmul.f32 %v4543, 1.442695
    %v4558 = vpow.pop %v4557
    %v4559 = vmul.f32 %v4544, 1.442695
    %v4560 = vpow.pop %v4559
    %v4561 = vadd.f32 %v4546, 1.0
    %v4562 = vadd.f32 %v4548, 1.0
    %v4563 = vadd.f32 %v4550, 1.0
    %v4564 = vadd.f32 %v4552, 1.0
    %v4565 = vadd.f32 %v4554, 1.0
    %v4566 = vadd.f32 %v4556, 1.0
    %v4567 = vadd.f32 %v4558, 1.0
    %v4568 = vadd.f32 %v4560, 1.0
    %v4569 = vrcp.pop %v4561
    %v4570 = vmul.f32 %v4561, %v4569
    %v4571 = vsub.f32 1.0, %v4570
    %v4572 = vmul.f32 %v4569, %v4571
    %v4573 = vadd.f32 %v4569, %v4572
    %vm4574 = vweird.f32 %v4561
    %vm4575 = vweird.f32 %v4569
    %vm4576 = vmor %vm4574, %vm4575
    %v4577 = vsel %vm4576, %v4569, %v4573
    %v4578 = vand.u32 2147483647, %v4561
    %vm4579 = vcmp.eq.f32.partialorder %v4578, 8.507059e+37
    %v4580 = vand.u32 %v4561, 2147483648
    %v4581 = vor.u32 1.1754944e-38, %v4580
    %v4582 = vsel %vm4579, %v4581, %v4577
    %v4583 = vmul.f32 1.0, %v4582
    %v4584 = vrcp.pop %v4562
    %v4585 = vmul.f32 %v4562, %v4584
    %v4586 = vsub.f32 1.0, %v4585
    %v4587 = vmul.f32 %v4584, %v4586
    %v4588 = vadd.f32 %v4584, %v4587
    %vm4589 = vweird.f32 %v4562
    %vm4590 = vweird.f32 %v4584
    %vm4591 = vmor %vm4589, %vm4590
    %v4592 = vsel %vm4591, %v4584, %v4588
    %v4593 = vand.u32 2147483647, %v4562
    %vm4594 = vcmp.eq.f32.partialorder %v4593, 8.507059e+37
    %v4595 = vand.u32 %v4562, 2147483648
    %v4596 = vor.u32 1.1754944e-38, %v4595
    %v4597 = vsel %vm4594, %v4596, %v4592
    %v4598 = vmul.f32 1.0, %v4597
    %v4599 = vrcp.pop %v4563
    %v4600 = vmul.f32 %v4563, %v4599
    %v4601 = vsub.f32 1.0, %v4600
    %v4602 = vmul.f32 %v4599, %v4601
    %v4603 = vadd.f32 %v4599, %v4602
    %vm4604 = vweird.f32 %v4563
    %vm4605 = vweird.f32 %v4599
    %vm4606 = vmor %vm4604, %vm4605
    %v4607 = vsel %vm4606, %v4599, %v4603
    %v4608 = vand.u32 2147483647, %v4563
    %vm4609 = vcmp.eq.f32.partialorder %v4608, 8.507059e+37
    %v4610 = vand.u32 %v4563, 2147483648
    %v4611 = vor.u32 1.1754944e-38, %v4610
    %v4612 = vsel %vm4609, %v4611, %v4607
    %v4613 = vmul.f32 1.0, %v4612
    %v4614 = vrcp.pop %v4564
    %v4615 = vmul.f32 %v4564, %v4614
    %v4616 = vsub.f32 1.0, %v4615
    %v4617 = vmul.f32 %v4614, %v4616
    %v4618 = vadd.f32 %v4614, %v4617
    %vm4619 = vweird.f32 %v4564
    %vm4620 = vweird.f32 %v4614
    %vm4621 = vmor %vm4619, %vm4620
    %v4622 = vsel %vm4621, %v4614, %v4618
    %v4623 = vand.u32 2147483647, %v4564
    %vm4624 = vcmp.eq.f32.partialorder %v4623, 8.507059e+37
    %v4625 = vand.u32 %v4564, 2147483648
    %v4626 = vor.u32 1.1754944e-38, %v4625
    %v4627 = vsel %vm4624, %v4626, %v4622
    %v4628 = vmul.f32 1.0, %v4627
    %v4629 = vrcp.pop %v4565
    %v4630 = vmul.f32 %v4565, %v4629
    %v4631 = vsub.f32 1.0, %v4630
    %v4632 = vmul.f32 %v4629, %v4631
    %v4633 = vadd.f32 %v4629, %v4632
    %vm4634 = vweird.f32 %v4565
    %vm4635 = vweird.f32 %v4629
    %vm4636 = vmor %vm4634, %vm4635
    %v4637 = vsel %vm4636, %v4629, %v4633
    %v4638 = vand.u32 2147483647, %v4565
    %vm4639 = vcmp.eq.f32.partialorder %v4638, 8.507059e+37
    %v4640 = vand.u32 %v4565, 2147483648
    %v4641 = vor.u32 1.1754944e-38, %v4640
    %v4642 = vsel %vm4639, %v4641, %v4637
    %v4643 = vmul.f32 1.0, %v4642
    %v4644 = vrcp.pop %v4566
    %v4645 = vmul.f32 %v4566, %v4644
    %v4646 = vsub.f32 1.0, %v4645
    %v4647 = vmul.f32 %v4644, %v4646
    %v4648 = vadd.f32 %v4644, %v4647
    %vm4649 = vweird.f32 %v4566
    %vm4650 = vweird.f32 %v4644
    %vm4651 = vmor %vm4649, %vm4650
    %v4652 = vsel %vm4651, %v4644, %v4648
    %v4653 = vand.u32 2147483647, %v4566
    %vm4654 = vcmp.eq.f32.partialorder %v4653, 8.507059e+37
    %v4655 = vand.u32 %v4566, 2147483648
    %v4656 = vor.u32 1.1754944e-38, %v4655
    %v4657 = vsel %vm4654, %v4656, %v4652
    %v4658 = vmul.f32 1.0, %v4657
    %v4659 = vrcp.pop %v4567
    %v4660 = vmul.f32 %v4567, %v4659
    %v4661 = vsub.f32 1.0, %v4660
    %v4662 = vmul.f32 %v4659, %v4661
    %v4663 = vadd.f32 %v4659, %v4662
    %vm4664 = vweird.f32 %v4567
    %vm4665 = vweird.f32 %v4659
    %vm4666 = vmor %vm4664, %vm4665
    %v4667 = vsel %vm4666, %v4659, %v4663
    %v4668 = vand.u32 2147483647, %v4567
    %vm4669 = vcmp.eq.f32.partialorder %v4668, 8.507059e+37
    %v4670 = vand.u32 %v4567, 2147483648
    %v4671 = vor.u32 1.1754944e-38, %v4670
    %v4672 = vsel %vm4669, %v4671, %v4667
    %v4673 = vmul.f32 1.0, %v4672
    %v4674 = vrcp.pop %v4568
    %v4675 = vmul.f32 %v4568, %v4674
    %v4676 = vsub.f32 1.0, %v4675
    %v4677 = vmul.f32 %v4674, %v4676
    %v4678 = vadd.f32 %v4674, %v4677
    %vm4679 = vweird.f32 %v4568
    %vm4680 = vweird.f32 %v4674
    %vm4681 = vmor %vm4679, %vm4680
    %v4682 = vsel %vm4681, %v4674, %v4678
    %v4683 = vand.u32 2147483647, %v4568
    %vm4684 = vcmp.eq.f32.partialorder %v4683, 8.507059e+37
    %v4685 = vand.u32 %v4568, 2147483648
    %v4686 = vor.u32 1.1754944e-38, %v4685
    %v4687 = vsel %vm4684, %v4686, %v4682
    %v4688 = vmul.f32 1.0, %v4687
    %v4689 = vmul.f32 %v3806, %v4583
    %v4690 = vmul.f32 %v3910, %v4598
    %v4691 = vmul.f32 %v4014, %v4613
    %v4692 = vmul.f32 %v4118, %v4628
    %v4693 = vmul.f32 %v4222, %v4643
    %v4694 = vmul.f32 %v4326, %v4658
    %v4695 = vmul.f32 %v4430, %v4673
    %v4696 = vmul.f32 %v4534, %v4688
    %v4697 = vpack.c.bf16 %v4689, %v4689
    %v4698 = vpack.c.bf16 %v4690, %v4690
    %v4699 = vpack.c.bf16 %v4691, %v4691
    %v4700 = vpack.c.bf16 %v4692, %v4692
    %v4701 = vpack.c.bf16 %v4693, %v4693
    %v4702 = vpack.c.bf16 %v4694, %v4694
    %v4703 = vpack.c.bf16 %v4695, %v4695
    %v4704 = vpack.c.bf16 %v4696, %v4696
    %v4705 = vld [vmem:[#allocation10] sm:$0xf]
    %v4706 = vld [vmem:[#allocation10 + $0x4] sm:$0xf]
    %v4707 = vld [vmem:[#allocation10 + $0x8] sm:$0xf]
    %v4708 = vld [vmem:[#allocation10 + $0xc] sm:$0xf]
    %v4709 = vld [vmem:[#allocation10 + $0x10] sm:$0xf]
    %v4710 = vld [vmem:[#allocation10 + $0x14] sm:$0xf]
    %v4711 = vld [vmem:[#allocation10 + $0x18] sm:$0xf]
    %v4712 = vld [vmem:[#allocation10 + $0x1c] sm:$0xf]
    %v4713 = vld [vmem:[#allocation10 + $0x20] sm:$0xf]
    %v4714 = vld [vmem:[#allocation10 + $0x24] sm:$0xf]
    %v4715 = vld [vmem:[#allocation10 + $0x28] sm:$0xf]
    %v4716 = vld [vmem:[#allocation10 + $0x2c] sm:$0xf]
    %v4717 = vld [vmem:[#allocation10 + $0x30] sm:$0xf]
    %v4718 = vld [vmem:[#allocation10 + $0x34] sm:$0xf]
    %v4719 = vld [vmem:[#allocation10 + $0x38] sm:$0xf]
    %v4720 = vld [vmem:[#allocation10 + $0x3c] sm:$0xf]
    %v4721 = vld [vmem:[#allocation10 + $0x40] sm:$0xf]
    %v4722 = vld [vmem:[#allocation10 + $0x44] sm:$0xf]
    %v4723 = vld [vmem:[#allocation10 + $0x48] sm:$0xf]
    %v4724 = vld [vmem:[#allocation10 + $0x4c] sm:$0xf]
    %v4725 = vld [vmem:[#allocation10 + $0x50] sm:$0xf]
    %v4726 = vld [vmem:[#allocation10 + $0x54] sm:$0xf]
    %v4727 = vld [vmem:[#allocation10 + $0x58] sm:$0xf]
    %v4728 = vld [vmem:[#allocation10 + $0x5c] sm:$0xf]
    %v4729 = vld [vmem:[#allocation10 + $0x60] sm:$0xf]
    %v4730 = vld [vmem:[#allocation10 + $0x64] sm:$0xf]
    %v4731 = vld [vmem:[#allocation10 + $0x68] sm:$0xf]
    %v4732 = vld [vmem:[#allocation10 + $0x6c] sm:$0xf]
    %v4733 = vld [vmem:[#allocation10 + $0x70] sm:$0xf]
    %v4734 = vld [vmem:[#allocation10 + $0x74] sm:$0xf]
    %v4735 = vld [vmem:[#allocation10 + $0x78] sm:$0xf]
    %v4736 = vld [vmem:[#allocation10 + $0x7c] sm:$0xf]
    %v4737 = vld [vmem:[#allocation10 + $0x80] sm:$0xf]
    %v4738 = vld [vmem:[#allocation10 + $0x84] sm:$0xf]
    %v4739 = vld [vmem:[#allocation10 + $0x88] sm:$0xf]
    %v4740 = vld [vmem:[#allocation10 + $0x8c] sm:$0xf]
    %v4741 = vld [vmem:[#allocation10 + $0x90] sm:$0xf]
    %v4742 = vld [vmem:[#allocation10 + $0x94] sm:$0xf]
    %v4743 = vld [vmem:[#allocation10 + $0x98] sm:$0xf]
    %v4744 = vld [vmem:[#allocation10 + $0x9c] sm:$0xf]
    %v4745 = vld [vmem:[#allocation10 + $0xa0] sm:$0xf]
    %v4746 = vld [vmem:[#allocation10 + $0xa4] sm:$0xf]
    %v4747 = vld [vmem:[#allocation10 + $0xa8] sm:$0xf]
    %v4748 = vld [vmem:[#allocation10 + $0xac] sm:$0xf]
    %v4749 = vld [vmem:[#allocation10 + $0xb0] sm:$0xf]
    %v4750 = vld [vmem:[#allocation10 + $0xb4] sm:$0xf]
    %v4751 = vld [vmem:[#allocation10 + $0xb8] sm:$0xf]
    %v4752 = vld [vmem:[#allocation10 + $0xbc] sm:$0xf]
    %v4753 = vld [vmem:[#allocation10 + $0xc0] sm:$0xf]
    %v4754 = vld [vmem:[#allocation10 + $0xc4] sm:$0xf]
    %v4755 = vld [vmem:[#allocation10 + $0xc8] sm:$0xf]
    %v4756 = vld [vmem:[#allocation10 + $0xcc] sm:$0xf]
    %v4757 = vld [vmem:[#allocation10 + $0xd0] sm:$0xf]
    %v4758 = vld [vmem:[#allocation10 + $0xd4] sm:$0xf]
    %v4759 = vld [vmem:[#allocation10 + $0xd8] sm:$0xf]
    %v4760 = vld [vmem:[#allocation10 + $0xdc] sm:$0xf]
    %v4761 = vld [vmem:[#allocation10 + $0xe0] sm:$0xf]
    %v4762 = vld [vmem:[#allocation10 + $0xe4] sm:$0xf]
    %v4763 = vld [vmem:[#allocation10 + $0xe8] sm:$0xf]
    %v4764 = vld [vmem:[#allocation10 + $0xec] sm:$0xf]
    %v4765 = vld [vmem:[#allocation10 + $0xf0] sm:$0xf]
    %v4766 = vld [vmem:[#allocation10 + $0xf4] sm:$0xf]
    %v4767 = vld [vmem:[#allocation10 + $0xf8] sm:$0xf]
    %v4768 = vld [vmem:[#allocation10 + $0xfc] sm:$0xf]
    %v4769 = vld [vmem:[#allocation10 + $0x100] sm:$0xf]
    %v4770 = vld [vmem:[#allocation10 + $0x104] sm:$0xf]
    %v4771 = vld [vmem:[#allocation10 + $0x108] sm:$0xf]
    %v4772 = vld [vmem:[#allocation10 + $0x10c] sm:$0xf]
    %v4773 = vld [vmem:[#allocation10 + $0x110] sm:$0xf]
    %v4774 = vld [vmem:[#allocation10 + $0x114] sm:$0xf]
    %v4775 = vld [vmem:[#allocation10 + $0x118] sm:$0xf]
    %v4776 = vld [vmem:[#allocation10 + $0x11c] sm:$0xf]
    %v4777 = vld [vmem:[#allocation10 + $0x120] sm:$0xf]
    %v4778 = vld [vmem:[#allocation10 + $0x124] sm:$0xf]
    %v4779 = vld [vmem:[#allocation10 + $0x128] sm:$0xf]
    %v4780 = vld [vmem:[#allocation10 + $0x12c] sm:$0xf]
    %v4781 = vld [vmem:[#allocation10 + $0x130] sm:$0xf]
    %v4782 = vld [vmem:[#allocation10 + $0x134] sm:$0xf]
    %v4783 = vld [vmem:[#allocation10 + $0x138] sm:$0xf]
    %v4784 = vld [vmem:[#allocation10 + $0x13c] sm:$0xf]
    %v4785 = vld [vmem:[#allocation10 + $0x140] sm:$0xf]
    %v4786 = vld [vmem:[#allocation10 + $0x144] sm:$0xf]
    %v4787 = vld [vmem:[#allocation10 + $0x148] sm:$0xf]
    %v4788 = vld [vmem:[#allocation10 + $0x14c] sm:$0xf]
    %v4789 = vld [vmem:[#allocation10 + $0x150] sm:$0xf]
    %v4790 = vld [vmem:[#allocation10 + $0x154] sm:$0xf]
    %v4791 = vld [vmem:[#allocation10 + $0x158] sm:$0xf]
    %v4792 = vld [vmem:[#allocation10 + $0x15c] sm:$0xf]
    %v4793 = vld [vmem:[#allocation10 + $0x160] sm:$0xf]
    %v4794 = vld [vmem:[#allocation10 + $0x164] sm:$0xf]
    %v4795 = vld [vmem:[#allocation10 + $0x168] sm:$0xf]
    %v4796 = vld [vmem:[#allocation10 + $0x16c] sm:$0xf]
    %v4797 = vld [vmem:[#allocation10 + $0x170] sm:$0xf]
    %v4798 = vld [vmem:[#allocation10 + $0x174] sm:$0xf]
    %v4799 = vld [vmem:[#allocation10 + $0x178] sm:$0xf]
    %v4800 = vld [vmem:[#allocation10 + $0x17c] sm:$0xf]
    %v4801 = vld [vmem:[#allocation10 + $0x180] sm:$0xf]
    %v4802 = vld [vmem:[#allocation10 + $0x184] sm:$0xf]
    %v4803 = vld [vmem:[#allocation10 + $0x188] sm:$0xf]
    %v4804 = vld [vmem:[#allocation10 + $0x18c] sm:$0xf]
    %v4805 = vld [vmem:[#allocation10 + $0x190] sm:$0xf]
    %v4806 = vld [vmem:[#allocation10 + $0x194] sm:$0xf]
    %v4807 = vld [vmem:[#allocation10 + $0x198] sm:$0xf]
    %v4808 = vld [vmem:[#allocation10 + $0x19c] sm:$0xf]
    %v4809 = vld [vmem:[#allocation10 + $0x1a0] sm:$0xf]
    %v4810 = vld [vmem:[#allocation10 + $0x1a4] sm:$0xf]
    %v4811 = vld [vmem:[#allocation10 + $0x1a8] sm:$0xf]
    %v4812 = vld [vmem:[#allocation10 + $0x1ac] sm:$0xf]
    %v4813 = vld [vmem:[#allocation10 + $0x1b0] sm:$0xf]
    %v4814 = vld [vmem:[#allocation10 + $0x1b4] sm:$0xf]
    %v4815 = vld [vmem:[#allocation10 + $0x1b8] sm:$0xf]
    %v4816 = vld [vmem:[#allocation10 + $0x1bc] sm:$0xf]
    %v4817 = vld [vmem:[#allocation10 + $0x1c0] sm:$0xf]
    %v4818 = vld [vmem:[#allocation10 + $0x1c4] sm:$0xf]
    %v4819 = vld [vmem:[#allocation10 + $0x1c8] sm:$0xf]
    %v4820 = vld [vmem:[#allocation10 + $0x1cc] sm:$0xf]
    %v4821 = vld [vmem:[#allocation10 + $0x1d0] sm:$0xf]
    %v4822 = vld [vmem:[#allocation10 + $0x1d4] sm:$0xf]
    %v4823 = vld [vmem:[#allocation10 + $0x1d8] sm:$0xf]
    %v4824 = vld [vmem:[#allocation10 + $0x1dc] sm:$0xf]
    %v4825 = vld [vmem:[#allocation10 + $0x1e0] sm:$0xf]
    %v4826 = vld [vmem:[#allocation10 + $0x1e4] sm:$0xf]
    %v4827 = vld [vmem:[#allocation10 + $0x1e8] sm:$0xf]
    %v4828 = vld [vmem:[#allocation10 + $0x1ec] sm:$0xf]
    %v4829 = vld [vmem:[#allocation10 + $0x1f0] sm:$0xf]
    %v4830 = vld [vmem:[#allocation10 + $0x1f4] sm:$0xf]
    %v4831 = vld [vmem:[#allocation10 + $0x1f8] sm:$0xf]
    %v4832 = vld [vmem:[#allocation10 + $0x1fc] sm:$0xf]
    %v4833 = vld [vmem:[#allocation12] sm:$0x1]
    %v4835 = vperm.slane %v4833, 0
    %v4965 = vunpack.c.l.b16 %v4705
    %v4966 = vunpack.c.l.b16 %v4706
    %v4967 = vunpack.c.l.b16 %v4707
    %v4968 = vunpack.c.l.b16 %v4708
    %v4969 = vunpack.c.l.b16 %v4709
    %v4970 = vunpack.c.l.b16 %v4710
    %v4971 = vunpack.c.l.b16 %v4711
    %v4972 = vunpack.c.l.b16 %v4712
    %v4973 = vunpack.c.l.b16 %v4713
    %v4974 = vunpack.c.l.b16 %v4714
    %v4975 = vunpack.c.l.b16 %v4715
    %v4976 = vunpack.c.l.b16 %v4716
    %v4977 = vunpack.c.l.b16 %v4717
    %v4978 = vunpack.c.l.b16 %v4718
    %v4979 = vunpack.c.l.b16 %v4719
    %v4980 = vunpack.c.l.b16 %v4720
    %v4981 = vunpack.c.l.b16 %v4721
    %v4982 = vunpack.c.l.b16 %v4722
    %v4983 = vunpack.c.l.b16 %v4723
    %v4984 = vunpack.c.l.b16 %v4724
    %v4985 = vunpack.c.l.b16 %v4725
    %v4986 = vunpack.c.l.b16 %v4726
    %v4987 = vunpack.c.l.b16 %v4727
    %v4988 = vunpack.c.l.b16 %v4728
    %v4989 = vunpack.c.l.b16 %v4729
    %v4990 = vunpack.c.l.b16 %v4730
    %v4991 = vunpack.c.l.b16 %v4731
    %v4992 = vunpack.c.l.b16 %v4732
    %v4993 = vunpack.c.l.b16 %v4733
    %v4994 = vunpack.c.l.b16 %v4734
    %v4995 = vunpack.c.l.b16 %v4735
    %v4996 = vunpack.c.l.b16 %v4736
    %v4997 = vunpack.c.l.b16 %v4737
    %v4998 = vunpack.c.l.b16 %v4738
    %v4999 = vunpack.c.l.b16 %v4739
    %v5000 = vunpack.c.l.b16 %v4740
    %v5001 = vunpack.c.l.b16 %v4741
    %v5002 = vunpack.c.l.b16 %v4742
    %v5003 = vunpack.c.l.b16 %v4743
    %v5004 = vunpack.c.l.b16 %v4744
    %v5005 = vunpack.c.l.b16 %v4745
    %v5006 = vunpack.c.l.b16 %v4746
    %v5007 = vunpack.c.l.b16 %v4747
    %v5008 = vunpack.c.l.b16 %v4748
    %v5009 = vunpack.c.l.b16 %v4749
    %v5010 = vunpack.c.l.b16 %v4750
    %v5011 = vunpack.c.l.b16 %v4751
    %v5012 = vunpack.c.l.b16 %v4752
    %v5013 = vunpack.c.l.b16 %v4753
    %v5014 = vunpack.c.l.b16 %v4754
    %v5015 = vunpack.c.l.b16 %v4755
    %v5016 = vunpack.c.l.b16 %v4756
    %v5017 = vunpack.c.l.b16 %v4757
    %v5018 = vunpack.c.l.b16 %v4758
    %v5019 = vunpack.c.l.b16 %v4759
    %v5020 = vunpack.c.l.b16 %v4760
    %v5021 = vunpack.c.l.b16 %v4761
    %v5022 = vunpack.c.l.b16 %v4762
    %v5023 = vunpack.c.l.b16 %v4763
    %v5024 = vunpack.c.l.b16 %v4764
    %v5025 = vunpack.c.l.b16 %v4765
    %v5026 = vunpack.c.l.b16 %v4766
    %v5027 = vunpack.c.l.b16 %v4767
    %v5028 = vunpack.c.l.b16 %v4768
    %v5029 = vunpack.c.l.b16 %v4769
    %v5030 = vunpack.c.l.b16 %v4770
    %v5031 = vunpack.c.l.b16 %v4771
    %v5032 = vunpack.c.l.b16 %v4772
    %v5033 = vunpack.c.l.b16 %v4773
    %v5034 = vunpack.c.l.b16 %v4774
    %v5035 = vunpack.c.l.b16 %v4775
    %v5036 = vunpack.c.l.b16 %v4776
    %v5037 = vunpack.c.l.b16 %v4777
    %v5038 = vunpack.c.l.b16 %v4778
    %v5039 = vunpack.c.l.b16 %v4779
    %v5040 = vunpack.c.l.b16 %v4780
    %v5041 = vunpack.c.l.b16 %v4781
    %v5042 = vunpack.c.l.b16 %v4782
    %v5043 = vunpack.c.l.b16 %v4783
    %v5044 = vunpack.c.l.b16 %v4784
    %v5045 = vunpack.c.l.b16 %v4785
    %v5046 = vunpack.c.l.b16 %v4786
    %v5047 = vunpack.c.l.b16 %v4787
    %v5048 = vunpack.c.l.b16 %v4788
    %v5049 = vunpack.c.l.b16 %v4789
    %v5050 = vunpack.c.l.b16 %v4790
    %v5051 = vunpack.c.l.b16 %v4791
    %v5052 = vunpack.c.l.b16 %v4792
    %v5053 = vunpack.c.l.b16 %v4793
    %v5054 = vunpack.c.l.b16 %v4794
    %v5055 = vunpack.c.l.b16 %v4795
    %v5056 = vunpack.c.l.b16 %v4796
    %v5057 = vunpack.c.l.b16 %v4797
    %v5058 = vunpack.c.l.b16 %v4798
    %v5059 = vunpack.c.l.b16 %v4799
    %v5060 = vunpack.c.l.b16 %v4800
    %v5061 = vunpack.c.l.b16 %v4801
    %v5062 = vunpack.c.l.b16 %v4802
    %v5063 = vunpack.c.l.b16 %v4803
    %v5064 = vunpack.c.l.b16 %v4804
    %v5065 = vunpack.c.l.b16 %v4805
    %v5066 = vunpack.c.l.b16 %v4806
    %v5067 = vunpack.c.l.b16 %v4807
    %v5068 = vunpack.c.l.b16 %v4808
    %v5069 = vunpack.c.l.b16 %v4809
    %v5070 = vunpack.c.l.b16 %v4810
    %v5071 = vunpack.c.l.b16 %v4811
    %v5072 = vunpack.c.l.b16 %v4812
    %v5073 = vunpack.c.l.b16 %v4813
    %v5074 = vunpack.c.l.b16 %v4814
    %v5075 = vunpack.c.l.b16 %v4815
    %v5076 = vunpack.c.l.b16 %v4816
    %v5077 = vunpack.c.l.b16 %v4817
    %v5078 = vunpack.c.l.b16 %v4818
    %v5079 = vunpack.c.l.b16 %v4819
    %v5080 = vunpack.c.l.b16 %v4820
    %v5081 = vunpack.c.l.b16 %v4821
    %v5082 = vunpack.c.l.b16 %v4822
    %v5083 = vunpack.c.l.b16 %v4823
    %v5084 = vunpack.c.l.b16 %v4824
    %v5085 = vunpack.c.l.b16 %v4825
    %v5086 = vunpack.c.l.b16 %v4826
    %v5087 = vunpack.c.l.b16 %v4827
    %v5088 = vunpack.c.l.b16 %v4828
    %v5089 = vunpack.c.l.b16 %v4829
    %v5090 = vunpack.c.l.b16 %v4830
    %v5091 = vunpack.c.l.b16 %v4831
    %v5092 = vunpack.c.l.b16 %v4832
    %v5093 = vpack.c.b16 %v4966, %v4965
    %v5094 = vpack.c.b16 %v4968, %v4967
    %v5095 = vpack.c.b16 %v4970, %v4969
    %v5096 = vpack.c.b16 %v4972, %v4971
    %v5097 = vpack.c.b16 %v4974, %v4973
    %v5098 = vpack.c.b16 %v4976, %v4975
    %v5099 = vpack.c.b16 %v4978, %v4977
    %v5100 = vpack.c.b16 %v4980, %v4979
    %v5101 = vpack.c.b16 %v4982, %v4981
    %v5102 = vpack.c.b16 %v4984, %v4983
    %v5103 = vpack.c.b16 %v4986, %v4985
    %v5104 = vpack.c.b16 %v4988, %v4987
    %v5105 = vpack.c.b16 %v4990, %v4989
    %v5106 = vpack.c.b16 %v4992, %v4991
    %v5107 = vpack.c.b16 %v4994, %v4993
    %v5108 = vpack.c.b16 %v4996, %v4995
    %v5109 = vpack.c.b16 %v4998, %v4997
    %v5110 = vpack.c.b16 %v5000, %v4999
    %v5111 = vpack.c.b16 %v5002, %v5001
    %v5112 = vpack.c.b16 %v5004, %v5003
    %v5113 = vpack.c.b16 %v5006, %v5005
    %v5114 = vpack.c.b16 %v5008, %v5007
    %v5115 = vpack.c.b16 %v5010, %v5009
    %v5116 = vpack.c.b16 %v5012, %v5011
    %v5117 = vpack.c.b16 %v5014, %v5013
    %v5118 = vpack.c.b16 %v5016, %v5015
    %v5119 = vpack.c.b16 %v5018, %v5017
    %v5120 = vpack.c.b16 %v5020, %v5019
    %v5121 = vpack.c.b16 %v5022, %v5021
    %v5122 = vpack.c.b16 %v5024, %v5023
    %v5123 = vpack.c.b16 %v5026, %v5025
    %v5124 = vpack.c.b16 %v5028, %v5027
    %v5125 = vpack.c.b16 %v5030, %v5029
    %v5126 = vpack.c.b16 %v5032, %v5031
    %v5127 = vpack.c.b16 %v5034, %v5033
    %v5128 = vpack.c.b16 %v5036, %v5035
    %v5129 = vpack.c.b16 %v5038, %v5037
    %v5130 = vpack.c.b16 %v5040, %v5039
    %v5131 = vpack.c.b16 %v5042, %v5041
    %v5132 = vpack.c.b16 %v5044, %v5043
    %v5133 = vpack.c.b16 %v5046, %v5045
    %v5134 = vpack.c.b16 %v5048, %v5047
    %v5135 = vpack.c.b16 %v5050, %v5049
    %v5136 = vpack.c.b16 %v5052, %v5051
    %v5137 = vpack.c.b16 %v5054, %v5053
    %v5138 = vpack.c.b16 %v5056, %v5055
    %v5139 = vpack.c.b16 %v5058, %v5057
    %v5140 = vpack.c.b16 %v5060, %v5059
    %v5141 = vpack.c.b16 %v5062, %v5061
    %v5142 = vpack.c.b16 %v5064, %v5063
    %v5143 = vpack.c.b16 %v5066, %v5065
    %v5144 = vpack.c.b16 %v5068, %v5067
    %v5145 = vpack.c.b16 %v5070, %v5069
    %v5146 = vpack.c.b16 %v5072, %v5071
    %v5147 = vpack.c.b16 %v5074, %v5073
    %v5148 = vpack.c.b16 %v5076, %v5075
    %v5149 = vpack.c.b16 %v5078, %v5077
    %v5150 = vpack.c.b16 %v5080, %v5079
    %v5151 = vpack.c.b16 %v5082, %v5081
    %v5152 = vpack.c.b16 %v5084, %v5083
    %v5153 = vpack.c.b16 %v5086, %v5085
    %v5154 = vpack.c.b16 %v5088, %v5087
    %v5155 = vpack.c.b16 %v5090, %v5089
    %v5156 = vpack.c.b16 %v5092, %v5091
    %5221 = vmatpush.bf16.msra.mxu0 %v5100
    %5222 = vmatpush.bf16.msra.mxu0 %v5099
    %5223 = vmatpush.bf16.msra.mxu0 %v5098
    %5224 = vmatpush.bf16.msra.mxu0 %v5097
    %5225 = vmatpush.bf16.msra.mxu0 %v5096
    %5226 = vmatpush.bf16.msra.mxu0 %v5095
    %5227 = vmatpush.bf16.msra.mxu0 %v5094
    %5228 = vmatpush.bf16.msra.mxu0 %v5093
    %5229 = vmatmul.bf16.gmra.mxu0 %v4697
    %v5230 = vpop.f32.mrf.mxu0
    %v5231 = vadd.f32 %v4835, %v5230
    %v5232 = vpop.f32.mrf.mxu0
    %5233 = vdwg.mxu0
    %5234 = vmatpush.bf16.msra.mxu0 %v5108
    %5235 = vmatpush.bf16.msra.mxu0 %v5107
    %5236 = vmatpush.bf16.msra.mxu0 %v5106
    %5237 = vmatpush.bf16.msra.mxu0 %v5105
    %5238 = vmatpush.bf16.msra.mxu0 %v5104
    %5239 = vmatpush.bf16.msra.mxu0 %v5103
    %5240 = vmatpush.bf16.msra.mxu0 %v5102
    %5241 = vmatpush.bf16.msra.mxu0 %v5101
    %5242 = vmatmul.bf16.gmra.mxu0 %v4698
    %v5243 = vpop.f32.mrf.mxu0
    %v5244 = vadd.f32 %v5231, %v5243
    %v5245 = vpop.f32.mrf.mxu0
    %5246 = vdwg.mxu0
    %5247 = vmatpush.bf16.msra.mxu0 %v5116
    %5248 = vmatpush.bf16.msra.mxu0 %v5115
    %5249 = vmatpush.bf16.msra.mxu0 %v5114
    %5250 = vmatpush.bf16.msra.mxu0 %v5113
    %5251 = vmatpush.bf16.msra.mxu0 %v5112
    %5252 = vmatpush.bf16.msra.mxu0 %v5111
    %5253 = vmatpush.bf16.msra.mxu0 %v5110
    %5254 = vmatpush.bf16.msra.mxu0 %v5109
    %5255 = vmatmul.bf16.gmra.mxu0 %v4699
    %v5256 = vpop.f32.mrf.mxu0
    %v5257 = vadd.f32 %v5244, %v5256
    %v5258 = vpop.f32.mrf.mxu0
    %5259 = vdwg.mxu0
    %5260 = vmatpush.bf16.msra.mxu0 %v5124
    %5261 = vmatpush.bf16.msra.mxu0 %v5123
    %5262 = vmatpush.bf16.msra.mxu0 %v5122
    %5263 = vmatpush.bf16.msra.mxu0 %v5121
    %5264 = vmatpush.bf16.msra.mxu0 %v5120
    %5265 = vmatpush.bf16.msra.mxu0 %v5119
    %5266 = vmatpush.bf16.msra.mxu0 %v5118
    %5267 = vmatpush.bf16.msra.mxu0 %v5117
    %5268 = vmatmul.bf16.gmra.mxu0 %v4700
    %v5269 = vpop.f32.mrf.mxu0
    %v5270 = vadd.f32 %v5257, %v5269
    %v5271 = vpop.f32.mrf.mxu0
    %5272 = vdwg.mxu0
    %5273 = vmatpush.bf16.msra.mxu0 %v5132
    %5274 = vmatpush.bf16.msra.mxu0 %v5131
    %5275 = vmatpush.bf16.msra.mxu0 %v5130
    %5276 = vmatpush.bf16.msra.mxu0 %v5129
    %5277 = vmatpush.bf16.msra.mxu0 %v5128
    %5278 = vmatpush.bf16.msra.mxu0 %v5127
    %5279 = vmatpush.bf16.msra.mxu0 %v5126
    %5280 = vmatpush.bf16.msra.mxu0 %v5125
    %5281 = vmatmul.bf16.gmra.mxu0 %v4701
    %v5282 = vpop.f32.mrf.mxu0
    %v5283 = vadd.f32 %v5270, %v5282
    %v5284 = vpop.f32.mrf.mxu0
    %5285 = vdwg.mxu0
    %5286 = vmatpush.bf16.msra.mxu0 %v5140
    %5287 = vmatpush.bf16.msra.mxu0 %v5139
    %5288 = vmatpush.bf16.msra.mxu0 %v5138
    %5289 = vmatpush.bf16.msra.mxu0 %v5137
    %5290 = vmatpush.bf16.msra.mxu0 %v5136
    %5291 = vmatpush.bf16.msra.mxu0 %v5135
    %5292 = vmatpush.bf16.msra.mxu0 %v5134
    %5293 = vmatpush.bf16.msra.mxu0 %v5133
    %5294 = vmatmul.bf16.gmra.mxu0 %v4702
    %v5295 = vpop.f32.mrf.mxu0
    %v5296 = vadd.f32 %v5283, %v5295
    %v5297 = vpop.f32.mrf.mxu0
    %5298 = vdwg.mxu0
    %5299 = vmatpush.bf16.msra.mxu0 %v5148
    %5300 = vmatpush.bf16.msra.mxu0 %v5147
    %5301 = vmatpush.bf16.msra.mxu0 %v5146
    %5302 = vmatpush.bf16.msra.mxu0 %v5145
    %5303 = vmatpush.bf16.msra.mxu0 %v5144
    %5304 = vmatpush.bf16.msra.mxu0 %v5143
    %5305 = vmatpush.bf16.msra.mxu0 %v5142
    %5306 = vmatpush.bf16.msra.mxu0 %v5141
    %5307 = vmatmul.bf16.gmra.mxu0 %v4703
    %v5308 = vpop.f32.mrf.mxu0
    %v5309 = vadd.f32 %v5296, %v5308
    %v5310 = vpop.f32.mrf.mxu0
    %5311 = vdwg.mxu0
    %5312 = vmatpush.bf16.msra.mxu0 %v5156
    %5313 = vmatpush.bf16.msra.mxu0 %v5155
    %5314 = vmatpush.bf16.msra.mxu0 %v5154
    %5315 = vmatpush.bf16.msra.mxu0 %v5153
    %5316 = vmatpush.bf16.msra.mxu0 %v5152
    %5317 = vmatpush.bf16.msra.mxu0 %v5151
    %5318 = vmatpush.bf16.msra.mxu0 %v5150
    %5319 = vmatpush.bf16.msra.mxu0 %v5149
    %5320 = vmatmul.bf16.gmra.mxu0 %v4704
    %v5321 = vpop.f32.mrf.mxu0
    %v5322 = vadd.f32 %v5309, %v5321
    %v5323 = vpop.f32.mrf.mxu0
    %5324 = vdwg.mxu0
    %5325 = vst [vmem:[%s7] sm:$0xff] %v5322
    // Predicated region
    $region58: #{markers_encoder_forward.1} parent=1 // pred_check
      _
    $region59: #{markers_encoder_forward.1} parent=1 // pred_check_branch
      %5327 = sbr.rel (0) target = $region61
    $region60: #{markers_encoder_forward.1} parent=1 // pred_region
      _
    $region61: #{markers_encoder_forward.1} parent=1 // pred_fallthru
      _
    // Predicated region
    $region62: #{markers_encoder_forward.1} parent=1 // pred_check
      _
    $region63: #{markers_encoder_forward.1} parent=1 // pred_check_branch
      %5329 = sbr.rel (0) target = $region65
    $region64: #{markers_encoder_forward.1} parent=1 // pred_region
      _
    $region65: #{markers_encoder_forward.1} parent=1 // pred_fallthru
      _
    %5330 = vsyncpa [#allocation3], 1
    %5331 = vsyncpa [#allocation5], 1
    %5332 = vsyncpa [#allocation8], 1
    %5333 = vsyncpa [#allocation11], 1

</llo_original>
